<compile_context>
chip_gen: v7x
topology: tpu7x:2x2x1
jax: 0.10.0
libtpu: 0.0.40
codegen_flags: <defaults>
</compile_context>

<pallas_src>
import jax
import jax.numpy as jnp
from jax import lax
from jax.experimental import pallas as pl
from jax.experimental.pallas import tpu as pltpu

_BN_EPS = 1e-5
_NORM_EPS = 1e-12
_LANE = 128


def _round_up(v, m):
    return -(-v // m) * m


def _pad2d(a, rows, cols, value=0.0):
    pr, pc = rows - a.shape[0], cols - a.shape[1]
    if pr == 0 and pc == 0:
        return a
    return jnp.pad(a, ((0, pr), (0, pc)), constant_values=value)


def _nbytes(*arrs):
    return sum(int(a.size) * a.dtype.itemsize for a in arrs)


def _vmem_capacity_bytes():
    try:
        return int(pltpu.get_tpu_info().vmem_capacity_bytes)
    except Exception:
        return 64 << 20            # conservative default (v7x per-TensorCore VMEM)


def _vmem_limit(working_set_bytes):
    cap = int(0.78 * _vmem_capacity_bytes())       # generation-aware ceiling
    return int(min(max(working_set_bytes + (4 << 20), 16 << 20), cap))


# --------------------------------------------------------------------------- kernels
def _sure_layer(x, w_bf16, b, gamma, beta):
    """SUREfcCaltech: Linear -> BatchNorm1d(train, biased var) -> ReLU -> F.normalize(dim=1).

    MXU matmul on bf16 operands with f32 accumulation; statistics and the row-wise
    L2 normalization stay in f32.
    """
    h = jnp.dot(x.astype(jnp.bfloat16), w_bf16,
                preferred_element_type=jnp.float32) + b
    mu = jnp.mean(h, axis=0, keepdims=True)
    var = jnp.mean(jnp.square(h - mu), axis=0, keepdims=True)        # biased variance
    h = (h - mu) * lax.rsqrt(var + _BN_EPS) * gamma + beta
    h = jnp.maximum(h, 0.0)                                          # ReLU
    nsq = jnp.sum(h * h, axis=1, keepdims=True)
    # x / max(||x||, eps)  ==  x * rsqrt(max(||x||^2, eps^2))  (EUP rsqrt, no divide)
    return h * lax.rsqrt(jnp.maximum(nsq, _NORM_EPS * _NORM_EPS))


def _encoder_kernel(x_ref, w1_ref, b1_ref, g1_ref, be1_ref,
                    w2_ref, b2_ref, g2_ref, be2_ref, hf_ref, hbf_ref):
    h1 = _sure_layer(x_ref[...], w1_ref[...], b1_ref[...], g1_ref[...], be1_ref[...])
    h2 = _sure_layer(h1, w2_ref[...], b2_ref[...], g2_ref[...], be2_ref[...])
    hf_ref[...] = h2
    hbf_ref[...] = h2.astype(jnp.bfloat16)         # single cast; reused by every B tile


def _selfexpr_kernel(coef_ref, hbf_ref, hf_ref, hc_ref, part_ref):
    tm, n = coef_ref.shape
    row0 = pl.program_id(0) * tm
    # Fused diagonal zeroing of the raw f32 coef tile (coef - diag(diag(coef))).
    rows = lax.broadcasted_iota(jnp.int32, (tm, n), 0) + row0
    cols = lax.broadcasted_iota(jnp.int32, (tm, n), 1)
    c = jnp.where(rows == cols, 0.0, coef_ref[...])                  # f32 (tm, n)
    creg_part = jnp.sum(jnp.abs(c))                                  # exact f32 partial
    # MXU matmul in bf16 with f32 accumulation; H is pre-cast bf16 (grid-invariant).
    hc = jnp.dot(c.astype(jnp.bfloat16), hbf_ref[...],
                 preferred_element_type=jnp.float32)
    hc_ref[...] = hc
    # SE-loss partial on resident tiles: sum((H - HC)^2) over this row block (f32 H).
    se_part = jnp.sum(jnp.square(hf_ref[...] - hc))
    # Lane-dense (1,128) partial row: [creg, se, 0, ...]; summed in the wrapper.
    lane = lax.broadcasted_iota(jnp.int32, (1, _LANE), 1)
    part_ref[...] = jnp.where(lane == 0, creg_part,
                              jnp.where(lane == 1, se_part, 0.0))


def _make_decoder_kernel(ft_count):
    def kernel(x_ref, hc_ref,
               w3_ref, b3_ref, g3_ref, be3_ref,
               w4_ref, b4_ref, g4_ref, be4_ref, loss_ref):
        hd = _sure_layer(hc_ref[...], w3_ref[...], b3_ref[...], g3_ref[...], be3_ref[...])
        x_rec = _sure_layer(hd, w4_ref[...], b4_ref[...], g4_ref[...], be4_ref[...])
        # Padded columns are identically zero on both operands -> contribute nothing;
        # divide by the true (unpadded) element count.
        loss_ref[0] = jnp.sum(jnp.square(x_ref[...] - x_rec)) / ft_count
    return kernel


def _selfexpr_vmem(tm, n, d):
    """VMEM estimate for one kernel-B grid step (buffers + in-kernel temporaries)."""
    return (2 * tm * n * 4        # coef f32 tile, double-buffered
            + 3 * tm * n * 4      # iota / compare / masked-tile temporaries
            + tm * n * 2          # bf16 cast of the masked tile
            + 2 * n * d * 2       # grid-invariant H (bf16), double-buffered
            + 2 * tm * d * 4      # f32 H row tile, double-buffered
            + 3 * tm * d * 4)     # HC out tile (double-buffered) + f32 temp


# --------------------------------------------------------------------------- wrapper
def individual_mlp_encoder(X, params, coef_weight):
    """Returns (H, loss, ft_loss, SE_loss, C_Regular) like the PyTorch module."""
    n_nodes, n_fts = X.shape
    (w1, b1, g1, be1), (w2, b2, g2, be2), (w3, b3, g3, be3), (w4, b4, g4, be4) = params
    hidden1, hidden2 = w1.shape[1], w2.shape[1]

    # Lane-dense padding of every feature dim to a multiple of 128.
    fp = _round_up(n_fts, _LANE)
    h1p = _round_up(hidden1, _LANE)
    d2p = _round_up(hidden2, _LANE)

    x_f32 = _pad2d(X, n_nodes, fp)
    x_bf16 = x_f32.astype(jnp.bfloat16)

    def pad_layer(w, b, g, be, din_p, dout_p):
        return (_pad2d(w, din_p, dout_p).astype(jnp.bfloat16),
                _pad2d(b, 1, dout_p),
                _pad2d(g, 1, dout_p, value=1.0),
                _pad2d(be, 1, dout_p))

    w1p, b1p, g1p, be1p = pad_layer(w1, b1, g1, be1, fp, h1p)
    w2p, b2p, g2p, be2p = pad_layer(w2, b2, g2, be2, h1p, d2p)
    w3p, b3p, g3p, be3p = pad_layer(w3, b3, g3, be3, d2p, h1p)
    w4p, b4p, g4p, be4p = pad_layer(w4, b4, g4, be4, h1p, fp)

    vmem = pl.BlockSpec(memory_space=pltpu.MemorySpace.VMEM)
    smem = pl.BlockSpec(memory_space=pltpu.MemorySpace.SMEM)

    # ------------------------------------------------------------------ A) encoder
    enc_args = (x_bf16, w1p, b1p, g1p, be1p, w2p, b2p, g2p, be2p)
    h_f32, h_bf16 = pl.pallas_call(
        _encoder_kernel,
        out_shape=(jax.ShapeDtypeStruct((n_nodes, d2p), jnp.float32),
                   jax.ShapeDtypeStruct((n_nodes, d2p), jnp.bfloat16)),
        in_specs=[vmem] * len(enc_args),
        out_specs=(vmem, vmem),
        compiler_params=pltpu.CompilerParams(
            vmem_limit_bytes=_vmem_limit(
                2 * (_nbytes(*enc_args) + n_nodes * (h1p * 4 + d2p * 6)))),
    )(*enc_args)

    # ----------------------------------------------- B) self-expression HC = coef @ H
    # Row tile: start at 512 (best measured HBM-roofline fraction), shrink by 128 if
    # the per-step working set would exceed the generation-aware VMEM budget.
    tm = 512 if n_nodes >= 512 else _round_up(n_nodes, 8)
    budget = int(0.78 * _vmem_capacity_bytes()) - (4 << 20)
    while tm > _LANE and _selfexpr_vmem(tm, n_nodes, d2p) > budget:
        tm = max(tm - _LANE, _LANE)
    n_rows_pad = _round_up(n_nodes, tm)
    n_tiles = n_rows_pad // tm

    coef_in = coef_weight                       # raw f32 param: mask/cast happen in-kernel
    h_f32_rows = h_f32
    if n_rows_pad != n_nodes:
        coef_in = jnp.pad(coef_weight, ((0, n_rows_pad - n_nodes), (0, 0)))
        h_f32_rows = jnp.pad(h_f32, ((0, n_rows_pad - n_nodes), (0, 0)))

    hc_pad, partials = pl.pallas_call(
        _selfexpr_kernel,
        grid=(n_tiles,),
        out_shape=(jax.ShapeDtypeStruct((n_rows_pad, d2p), jnp.float32),
                   jax.ShapeDtypeStruct((n_tiles, _LANE), jnp.float32)),
        in_specs=[pl.BlockSpec((tm, n_nodes), lambda i: (i, 0)),   # coef row tile (f32)
                  # TODO(synk): pipeline_mode=pl.Buffered(1) would drop the second
                  # buffer of this grid-invariant operand (bf16 already halves it).
                  pl.BlockSpec((n_nodes, d2p), lambda i: (0, 0)),  # H bf16 (invariant)
                  pl.BlockSpec((tm, d2p), lambda i: (i, 0))],      # H f32 row tile
        out_specs=(pl.BlockSpec((tm, d2p), lambda i: (i, 0)),
                   pl.BlockSpec((1, _LANE), lambda i: (i, 0))),
        compiler_params=pltpu.CompilerParams(
            dimension_semantics=("parallel",),
            vmem_limit_bytes=_vmem_limit(_selfexpr_vmem(tm, n_nodes, d2p))),
    )(coef_in, h_bf16, h_f32_rows)

    c_regular = jnp.sum(partials[:, 0])                               # exact f32 sum|coef|
    se_loss = 0.5 * jnp.sum(partials[:, 1]) / float(n_nodes * hidden2)
    hc = hc_pad[:n_nodes] if n_rows_pad != n_nodes else hc_pad

    # ----------------------------------------------------------- C) decoder + ft loss
    dec_kernel = _make_decoder_kernel(float(n_nodes * n_fts))
    dec_args = (x_f32, hc, w3p, b3p, g3p, be3p, w4p, b4p, g4p, be4p)
    losses = pl.pallas_call(
        dec_kernel,
        out_shape=jax.ShapeDtypeStruct((1,), jnp.float32),
        in_specs=[vmem] * len(dec_args),
        out_specs=smem,
        compiler_params=pltpu.CompilerParams(
            vmem_limit_bytes=_vmem_limit(
                2 * (_nbytes(*dec_args) + n_nodes * (h1p * 4 + fp * 4)))),
    )(*dec_args)

    ft_loss = losses[0]
    loss = ft_loss + se_loss + c_regular
    return h_f32[:, :hidden2], loss, ft_loss, se_loss, c_regular


def init_params(key, n_fts, hidden1, hidden2, n_nodes):
    """Deterministic synthetic init (shapes match the PyTorch module)."""
    def sure_fc(k, din, dout):
        kw, kb = jax.random.split(k)
        bound = 1.0 / jnp.sqrt(jnp.float32(din))
        w = jax.random.uniform(kw, (din, dout), jnp.float32, -bound, bound)
        b = jax.random.uniform(kb, (1, dout), jnp.float32, -bound, bound)
        gamma = jnp.ones((1, dout), jnp.float32)     # BatchNorm1d default affine init
        beta = jnp.zeros((1, dout), jnp.float32)
        return (w, b, gamma, beta)

    k1, k2, k3, k4 = jax.random.split(key, 4)
    params = [
        sure_fc(k1, n_fts, hidden1),    # encoder1
        sure_fc(k2, hidden1, hidden2),  # encoder2
        sure_fc(k3, hidden2, hidden1),  # decoder1
        sure_fc(k4, hidden1, n_fts),    # decoder2
    ]
    coef_weight = 0.0001 * jnp.ones((n_nodes, n_nodes), jnp.float32)  # nn.Parameter init
    return params, coef_weight


if __name__ == "__main__":
    # Small, lane-aligned demo shapes (multiples of 128).
    n_nodes, n_fts, hidden1, hidden2 = 256, 256, 256, 128

    key = jax.random.PRNGKey(0)
    kx, kp = jax.random.split(key)
    X = jax.random.normal(kx, (n_nodes, n_fts), jnp.float32)
    params, coef_weight = init_params(kp, n_fts, hidden1, hidden2, n_nodes)

    fwd = jax.jit(individual_mlp_encoder)
    H, loss, ft_loss, se_loss, c_reg = fwd(X, params, coef_weight)
    jax.block_until_ready((H, loss, ft_loss, se_loss, c_reg))

    # TODO(synk): self.C dict and BatchNorm running-stat updates are stateful training
    # bookkeeping with no effect on the forward outputs; not reproduced here.
    print("KERNEL_OK")
</pallas_src>

<mosaic_0001>
module attributes {stable_mosaic.version = 11 : i64} {
  func.func @_encoder_kernel(%arg0: memref<256x256xbf16, #tpu.memory_space<vmem>>, %arg1: memref<256x256xbf16, #tpu.memory_space<vmem>>, %arg2: memref<1x256xf32, #tpu.memory_space<vmem>>, %arg3: memref<1x256xf32, #tpu.memory_space<vmem>>, %arg4: memref<1x256xf32, #tpu.memory_space<vmem>>, %arg5: memref<256x128xbf16, #tpu.memory_space<vmem>>, %arg6: memref<1x128xf32, #tpu.memory_space<vmem>>, %arg7: memref<1x128xf32, #tpu.memory_space<vmem>>, %arg8: memref<1x128xf32, #tpu.memory_space<vmem>>, %arg9: memref<256x128xf32, #tpu.memory_space<vmem>>, %arg10: memref<256x128xbf16, #tpu.memory_space<vmem>>) attributes {dimension_semantics = [], scalar_prefetch = 0 : i64, scratch_operands = 0 : i64, tpu.core_type = #tpu.core_type<tc>} {
    %c0 = arith.constant 0 : index
    %c0_0 = arith.constant 0 : index
    %0 = vector.load %arg0[%c0, %c0_0] : memref<256x256xbf16, #tpu.memory_space<vmem>>, vector<256x256xbf16>
    %c0_1 = arith.constant 0 : index
    %c0_2 = arith.constant 0 : index
    %1 = vector.load %arg1[%c0_1, %c0_2] : memref<256x256xbf16, #tpu.memory_space<vmem>>, vector<256x256xbf16>
    %c0_3 = arith.constant 0 : index
    %c0_4 = arith.constant 0 : index
    %2 = vector.load %arg2[%c0_3, %c0_4] : memref<1x256xf32, #tpu.memory_space<vmem>>, vector<1x256xf32>
    %c0_5 = arith.constant 0 : index
    %c0_6 = arith.constant 0 : index
    %3 = vector.load %arg3[%c0_5, %c0_6] : memref<1x256xf32, #tpu.memory_space<vmem>>, vector<1x256xf32>
    %c0_7 = arith.constant 0 : index
    %c0_8 = arith.constant 0 : index
    %4 = vector.load %arg4[%c0_7, %c0_8] : memref<1x256xf32, #tpu.memory_space<vmem>>, vector<1x256xf32>
    %cst = arith.constant dense<0.000000e+00> : vector<256x256xf32>
    %5 = tpu.matmul %0, %1, %cst {dimension_numbers = #tpu.dot_dimension_numbers<[1], [0], [0], [1], [0, 0, 1, 1], [], []>} : vector<256x256xbf16>, vector<256x256xbf16>, vector<256x256xf32> -> vector<256x256xf32>
    %6 = vector.broadcast %2 : vector<1x256xf32> to vector<256x256xf32>
    %7 = arith.addf %5, %6 : vector<256x256xf32>
    %cst_9 = arith.constant dense<0.000000e+00> : vector<256xf32>
    %8 = vector.multi_reduction <add>, %7, %cst_9 [0] : vector<256x256xf32> to vector<256xf32>
    %9 = vector.shape_cast %8 : vector<256xf32> to vector<1x256xf32>
    %cst_10 = arith.constant 2.560000e+02 : f32
    %10 = vector.broadcast %cst_10 : f32 to vector<1x256xf32>
    %11 = arith.divf %9, %10 : vector<1x256xf32>
    %12 = vector.broadcast %11 : vector<1x256xf32> to vector<256x256xf32>
    %13 = arith.subf %7, %12 : vector<256x256xf32>
    %14 = arith.mulf %13, %13 : vector<256x256xf32>
    %cst_11 = arith.constant dense<0.000000e+00> : vector<256xf32>
    %15 = vector.multi_reduction <add>, %14, %cst_11 [0] : vector<256x256xf32> to vector<256xf32>
    %16 = vector.shape_cast %15 : vector<256xf32> to vector<1x256xf32>
    %cst_12 = arith.constant 2.560000e+02 : f32
    %17 = vector.broadcast %cst_12 : f32 to vector<1x256xf32>
    %18 = arith.divf %16, %17 : vector<1x256xf32>
    %19 = vector.broadcast %11 : vector<1x256xf32> to vector<256x256xf32>
    %20 = arith.subf %7, %19 : vector<256x256xf32>
    %cst_13 = arith.constant 9.99999974E-6 : f32
    %21 = vector.broadcast %cst_13 : f32 to vector<1x256xf32>
    %22 = arith.addf %18, %21 : vector<1x256xf32>
    %23 = math.rsqrt %22 : vector<1x256xf32>
    %24 = vector.broadcast %23 : vector<1x256xf32> to vector<256x256xf32>
    %25 = arith.mulf %20, %24 : vector<256x256xf32>
    %26 = vector.broadcast %3 : vector<1x256xf32> to vector<256x256xf32>
    %27 = arith.mulf %25, %26 : vector<256x256xf32>
    %28 = vector.broadcast %4 : vector<1x256xf32> to vector<256x256xf32>
    %29 = arith.addf %27, %28 : vector<256x256xf32>
    %cst_14 = arith.constant 0.000000e+00 : f32
    %30 = vector.broadcast %cst_14 : f32 to vector<256x256xf32>
    %31 = arith.maximumf %29, %30 : vector<256x256xf32>
    %32 = arith.mulf %31, %31 : vector<256x256xf32>
    %cst_15 = arith.constant dense<0.000000e+00> : vector<256xf32>
    %33 = vector.multi_reduction <add>, %32, %cst_15 [1] : vector<256x256xf32> to vector<256xf32>
    %34 = vector.shape_cast %33 : vector<256xf32> to vector<256x1xf32>
    %cst_16 = arith.constant 1.000000e-24 : f32
    %35 = vector.broadcast %cst_16 : f32 to vector<256x1xf32>
    %36 = arith.maximumf %34, %35 : vector<256x1xf32>
    %37 = math.rsqrt %36 : vector<256x1xf32>
    %38 = vector.broadcast %37 : vector<256x1xf32> to vector<256x256xf32>
    %39 = arith.mulf %31, %38 : vector<256x256xf32>
    %c0_17 = arith.constant 0 : index
    %c0_18 = arith.constant 0 : index
    %40 = vector.load %arg5[%c0_17, %c0_18] : memref<256x128xbf16, #tpu.memory_space<vmem>>, vector<256x128xbf16>
    %c0_19 = arith.constant 0 : index
    %c0_20 = arith.constant 0 : index
    %41 = vector.load %arg6[%c0_19, %c0_20] : memref<1x128xf32, #tpu.memory_space<vmem>>, vector<1x128xf32>
    %c0_21 = arith.constant 0 : index
    %c0_22 = arith.constant 0 : index
    %42 = vector.load %arg7[%c0_21, %c0_22] : memref<1x128xf32, #tpu.memory_space<vmem>>, vector<1x128xf32>
    %c0_23 = arith.constant 0 : index
    %c0_24 = arith.constant 0 : index
    %43 = vector.load %arg8[%c0_23, %c0_24] : memref<1x128xf32, #tpu.memory_space<vmem>>, vector<1x128xf32>
    %44 = arith.truncf %39 : vector<256x256xf32> to vector<256x256xbf16>
    %cst_25 = arith.constant dense<0.000000e+00> : vector<256x128xf32>
    %45 = tpu.matmul %44, %40, %cst_25 {dimension_numbers = #tpu.dot_dimension_numbers<[1], [0], [0], [1], [0, 0, 1, 1], [], []>} : vector<256x256xbf16>, vector<256x128xbf16>, vector<256x128xf32> -> vector<256x128xf32>
    %46 = vector.broadcast %41 : vector<1x128xf32> to vector<256x128xf32>
    %47 = arith.addf %45, %46 : vector<256x128xf32>
    %cst_26 = arith.constant dense<0.000000e+00> : vector<128xf32>
    %48 = vector.multi_reduction <add>, %47, %cst_26 [0] : vector<256x128xf32> to vector<128xf32>
    %49 = vector.shape_cast %48 : vector<128xf32> to vector<1x128xf32>
    %cst_27 = arith.constant 2.560000e+02 : f32
    %50 = vector.broadcast %cst_27 : f32 to vector<1x128xf32>
    %51 = arith.divf %49, %50 : vector<1x128xf32>
    %52 = vector.broadcast %51 : vector<1x128xf32> to vector<256x128xf32>
    %53 = arith.subf %47, %52 : vector<256x128xf32>
    %54 = arith.mulf %53, %53 : vector<256x128xf32>
    %cst_28 = arith.constant dense<0.000000e+00> : vector<128xf32>
    %55 = vector.multi_reduction <add>, %54, %cst_28 [0] : vector<256x128xf32> to vector<128xf32>
    %56 = vector.shape_cast %55 : vector<128xf32> to vector<1x128xf32>
    %cst_29 = arith.constant 2.560000e+02 : f32
    %57 = vector.broadcast %cst_29 : f32 to vector<1x128xf32>
    %58 = arith.divf %56, %57 : vector<1x128xf32>
    %59 = vector.broadcast %51 : vector<1x128xf32> to vector<256x128xf32>
    %60 = arith.subf %47, %59 : vector<256x128xf32>
    %cst_30 = arith.constant 9.99999974E-6 : f32
    %61 = vector.broadcast %cst_30 : f32 to vector<1x128xf32>
    %62 = arith.addf %58, %61 : vector<1x128xf32>
    %63 = math.rsqrt %62 : vector<1x128xf32>
    %64 = vector.broadcast %63 : vector<1x128xf32> to vector<256x128xf32>
    %65 = arith.mulf %60, %64 : vector<256x128xf32>
    %66 = vector.broadcast %42 : vector<1x128xf32> to vector<256x128xf32>
    %67 = arith.mulf %65, %66 : vector<256x128xf32>
    %68 = vector.broadcast %43 : vector<1x128xf32> to vector<256x128xf32>
    %69 = arith.addf %67, %68 : vector<256x128xf32>
    %cst_31 = arith.constant 0.000000e+00 : f32
    %70 = vector.broadcast %cst_31 : f32 to vector<256x128xf32>
    %71 = arith.maximumf %69, %70 : vector<256x128xf32>
    %72 = arith.mulf %71, %71 : vector<256x128xf32>
    %cst_32 = arith.constant dense<0.000000e+00> : vector<256xf32>
    %73 = vector.multi_reduction <add>, %72, %cst_32 [1] : vector<256x128xf32> to vector<256xf32>
    %74 = vector.shape_cast %73 : vector<256xf32> to vector<256x1xf32>
    %cst_33 = arith.constant 1.000000e-24 : f32
    %75 = vector.broadcast %cst_33 : f32 to vector<256x1xf32>
    %76 = arith.maximumf %74, %75 : vector<256x1xf32>
    %77 = math.rsqrt %76 : vector<256x1xf32>
    %78 = vector.broadcast %77 : vector<256x1xf32> to vector<256x128xf32>
    %79 = arith.mulf %71, %78 : vector<256x128xf32>
    %c0_34 = arith.constant 0 : index
    %c0_35 = arith.constant 0 : index
    %80 = vector.load %arg9[%c0_34, %c0_35] : memref<256x128xf32, #tpu.memory_space<vmem>>, vector<256x128xf32>
    tpu.vector_store %arg9[%c0_34, %c0_35], %79 {strides = array<i32>} : memref<256x128xf32, #tpu.memory_space<vmem>>, vector<256x128xf32>,
    %81 = arith.truncf %79 : vector<256x128xf32> to vector<256x128xbf16>
    %c0_36 = arith.constant 0 : index
    %c0_37 = arith.constant 0 : index
    %82 = vector.load %arg10[%c0_36, %c0_37] : memref<256x128xbf16, #tpu.memory_space<vmem>>, vector<256x128xbf16>
    tpu.vector_store %arg10[%c0_36, %c0_37], %81 {strides = array<i32>} : memref<256x128xbf16, #tpu.memory_space<vmem>>, vector<256x128xbf16>,
    return
  }
}

module attributes {stable_mosaic.version = 11 : i64} {
  func.func @_selfexpr_kernel(%arg0: i32, %arg1: memref<256x256xf32, #tpu.memory_space<vmem>>, %arg2: memref<256x128xbf16, #tpu.memory_space<vmem>>, %arg3: memref<256x128xf32, #tpu.memory_space<vmem>>, %arg4: memref<256x128xf32, #tpu.memory_space<vmem>>, %arg5: memref<1x128xf32, #tpu.memory_space<vmem>>) attributes {dimension_semantics = [#tpu.dimension_semantics<parallel>], iteration_bounds = array<i64: 1>, scalar_prefetch = 0 : i64, scratch_operands = 0 : i64, tpu.core_type = #tpu.core_type<tc>, window_params = [{transform_indices = @transform_0, window_bounds = array<i64: 256, 256>}, {pipeline_mode = #tpu.pipeline_mode<synchronous>, transform_indices = @transform_1, window_bounds = array<i64: 256, 128>}, {transform_indices = @transform_2, window_bounds = array<i64: 256, 128>}, {transform_indices = @transform_3, window_bounds = array<i64: 256, 128>}, {transform_indices = @transform_4, window_bounds = array<i64: 1, 128>}]} {
    %c256_i32 = arith.constant 256 : i32
    %0 = arith.muli %arg0, %c256_i32 : i32
    %1 = tpu.iota {dimensions = array<i32: 0>} : vector<256x256xi32>
    %2 = vector.broadcast %0 : i32 to vector<256x256xi32>
    %3 = arith.addi %1, %2 : vector<256x256xi32>
    %4 = tpu.iota {dimensions = array<i32: 1>} : vector<256x256xi32>
    %5 = arith.cmpi eq, %3, %4 : vector<256x256xi32>
    %c0 = arith.constant 0 : index
    %c0_0 = arith.constant 0 : index
    %6 = vector.load %arg1[%c0, %c0_0] : memref<256x256xf32, #tpu.memory_space<vmem>>, vector<256x256xf32>
    %cst = arith.constant 0.000000e+00 : f32
    %7 = vector.broadcast %cst : f32 to vector<256x256xf32>
    %8 = arith.select %5, %7, %6 : vector<256x256xi1>, vector<256x256xf32>
    %9 = math.absf %8 : vector<256x256xf32>
    %10 = vector.shape_cast %9 : vector<256x256xf32> to vector<1x256x256xf32>
    %cst_1 = arith.constant dense<0.000000e+00> : vector<1xf32>
    %11 = vector.multi_reduction <add>, %10, %cst_1 [1, 2] : vector<1x256x256xf32> to vector<1xf32>
    %12 = vector.shape_cast %11 : vector<1xf32> to vector<1x1x1xf32>
    %13 = vector.extract %12[0, 0, 0] : f32 from vector<1x1x1xf32>
    %14 = arith.truncf %8 : vector<256x256xf32> to vector<256x256xbf16>
    %c0_2 = arith.constant 0 : index
    %c0_3 = arith.constant 0 : index
    %15 = vector.load %arg2[%c0_2, %c0_3] : memref<256x128xbf16, #tpu.memory_space<vmem>>, vector<256x128xbf16>
    %cst_4 = arith.constant dense<0.000000e+00> : vector<256x128xf32>
    %16 = tpu.matmul %14, %15, %cst_4 {dimension_numbers = #tpu.dot_dimension_numbers<[1], [0], [0], [1], [0, 0, 1, 1], [], []>} : vector<256x256xbf16>, vector<256x128xbf16>, vector<256x128xf32> -> vector<256x128xf32>
    %c0_5 = arith.constant 0 : index
    %c0_6 = arith.constant 0 : index
    %17 = vector.load %arg4[%c0_5, %c0_6] : memref<256x128xf32, #tpu.memory_space<vmem>>, vector<256x128xf32>
    tpu.vector_store %arg4[%c0_5, %c0_6], %16 {strides = array<i32>} : memref<256x128xf32, #tpu.memory_space<vmem>>, vector<256x128xf32>,
    %c0_7 = arith.constant 0 : index
    %c0_8 = arith.constant 0 : index
    %18 = vector.load %arg3[%c0_7, %c0_8] : memref<256x128xf32, #tpu.memory_space<vmem>>, vector<256x128xf32>
    %19 = arith.subf %18, %16 : vector<256x128xf32>
    %20 = arith.mulf %19, %19 : vector<256x128xf32>
    %21 = vector.shape_cast %20 : vector<256x128xf32> to vector<1x256x128xf32>
    %cst_9 = arith.constant dense<0.000000e+00> : vector<1xf32>
    %22 = vector.multi_reduction <add>, %21, %cst_9 [1, 2] : vector<1x256x128xf32> to vector<1xf32>
    %23 = vector.shape_cast %22 : vector<1xf32> to vector<1x1x1xf32>
    %24 = vector.extract %23[0, 0, 0] : f32 from vector<1x1x1xf32>
    %25 = tpu.iota {dimensions = array<i32: 1>} : vector<1x128xi32>
    %c0_i32 = arith.constant 0 : i32
    %26 = vector.broadcast %c0_i32 : i32 to vector<1x128xi32>
    %27 = arith.cmpi eq, %25, %26 : vector<1x128xi32>
    %c1_i32 = arith.constant 1 : i32
    %28 = vector.broadcast %c1_i32 : i32 to vector<1x128xi32>
    %29 = arith.cmpi eq, %25, %28 : vector<1x128xi32>
    %cst_10 = arith.constant 0.000000e+00 : f32
    %30 = vector.broadcast %24 : f32 to vector<1x128xf32>
    %31 = vector.broadcast %cst_10 : f32 to vector<1x128xf32>
    %32 = arith.select %29, %30, %31 : vector<1x128xi1>, vector<1x128xf32>
    %33 = vector.broadcast %13 : f32 to vector<1x128xf32>
    %34 = arith.select %27, %33, %32 : vector<1x128xi1>, vector<1x128xf32>
    %c0_11 = arith.constant 0 : index
    %c0_12 = arith.constant 0 : index
    %35 = vector.load %arg5[%c0_11, %c0_12] : memref<1x128xf32, #tpu.memory_space<vmem>>, vector<1x128xf32>
    tpu.vector_store %arg5[%c0_11, %c0_12], %34 {strides = array<i32>} : memref<1x128xf32, #tpu.memory_space<vmem>>, vector<1x128xf32>,
    return
  }
  func.func @transform_0(%arg0: i32) -> (i32, i32) {
    %c0_i32 = arith.constant 0 : i32
    %c0_i32_0 = arith.constant 0 : i32
    return %arg0, %c0_i32 : i32, i32
  }
  func.func @transform_1(%arg0: i32) -> (i32, i32) {
    %c0_i32 = arith.constant 0 : i32
    %c0_i32_0 = arith.constant 0 : i32
    %c0_i32_1 = arith.constant 0 : i32
    return %c0_i32, %c0_i32_0 : i32, i32
  }
  func.func @transform_2(%arg0: i32) -> (i32, i32) {
    %c0_i32 = arith.constant 0 : i32
    %c0_i32_0 = arith.constant 0 : i32
    return %arg0, %c0_i32 : i32, i32
  }
  func.func @transform_3(%arg0: i32) -> (i32, i32) {
    %c0_i32 = arith.constant 0 : i32
    %c0_i32_0 = arith.constant 0 : i32
    return %arg0, %c0_i32 : i32, i32
  }
  func.func @transform_4(%arg0: i32) -> (i32, i32) {
    %c0_i32 = arith.constant 0 : i32
    %c0_i32_0 = arith.constant 0 : i32
    return %arg0, %c0_i32 : i32, i32
  }
}

module attributes {stable_mosaic.version = 11 : i64} {
  func.func @kernel(%arg0: memref<256x256xf32, #tpu.memory_space<vmem>>, %arg1: memref<256x128xf32, #tpu.memory_space<vmem>>, %arg2: memref<128x256xbf16, #tpu.memory_space<vmem>>, %arg3: memref<1x256xf32, #tpu.memory_space<vmem>>, %arg4: memref<1x256xf32, #tpu.memory_space<vmem>>, %arg5: memref<1x256xf32, #tpu.memory_space<vmem>>, %arg6: memref<256x256xbf16, #tpu.memory_space<vmem>>, %arg7: memref<1x256xf32, #tpu.memory_space<vmem>>, %arg8: memref<1x256xf32, #tpu.memory_space<vmem>>, %arg9: memref<1x256xf32, #tpu.memory_space<vmem>>, %arg10: memref<1xf32, #tpu.memory_space<smem>>) attributes {dimension_semantics = [], scalar_prefetch = 0 : i64, scratch_operands = 0 : i64, tpu.core_type = #tpu.core_type<tc>} {
    %c0 = arith.constant 0 : index
    %c0_0 = arith.constant 0 : index
    %0 = vector.load %arg1[%c0, %c0_0] : memref<256x128xf32, #tpu.memory_space<vmem>>, vector<256x128xf32>
    %c0_1 = arith.constant 0 : index
    %c0_2 = arith.constant 0 : index
    %1 = vector.load %arg2[%c0_1, %c0_2] : memref<128x256xbf16, #tpu.memory_space<vmem>>, vector<128x256xbf16>
    %c0_3 = arith.constant 0 : index
    %c0_4 = arith.constant 0 : index
    %2 = vector.load %arg3[%c0_3, %c0_4] : memref<1x256xf32, #tpu.memory_space<vmem>>, vector<1x256xf32>
    %c0_5 = arith.constant 0 : index
    %c0_6 = arith.constant 0 : index
    %3 = vector.load %arg4[%c0_5, %c0_6] : memref<1x256xf32, #tpu.memory_space<vmem>>, vector<1x256xf32>
    %c0_7 = arith.constant 0 : index
    %c0_8 = arith.constant 0 : index
    %4 = vector.load %arg5[%c0_7, %c0_8] : memref<1x256xf32, #tpu.memory_space<vmem>>, vector<1x256xf32>
    %5 = arith.truncf %0 : vector<256x128xf32> to vector<256x128xbf16>
    %cst = arith.constant dense<0.000000e+00> : vector<256x256xf32>
    %6 = tpu.matmul %5, %1, %cst {dimension_numbers = #tpu.dot_dimension_numbers<[1], [0], [0], [1], [0, 0, 1, 1], [], []>} : vector<256x128xbf16>, vector<128x256xbf16>, vector<256x256xf32> -> vector<256x256xf32>
    %7 = vector.broadcast %2 : vector<1x256xf32> to vector<256x256xf32>
    %8 = arith.addf %6, %7 : vector<256x256xf32>
    %cst_9 = arith.constant dense<0.000000e+00> : vector<256xf32>
    %9 = vector.multi_reduction <add>, %8, %cst_9 [0] : vector<256x256xf32> to vector<256xf32>
    %10 = vector.shape_cast %9 : vector<256xf32> to vector<1x256xf32>
    %cst_10 = arith.constant 2.560000e+02 : f32
    %11 = vector.broadcast %cst_10 : f32 to vector<1x256xf32>
    %12 = arith.divf %10, %11 : vector<1x256xf32>
    %13 = vector.broadcast %12 : vector<1x256xf32> to vector<256x256xf32>
    %14 = arith.subf %8, %13 : vector<256x256xf32>
    %15 = arith.mulf %14, %14 : vector<256x256xf32>
    %cst_11 = arith.constant dense<0.000000e+00> : vector<256xf32>
    %16 = vector.multi_reduction <add>, %15, %cst_11 [0] : vector<256x256xf32> to vector<256xf32>
    %17 = vector.shape_cast %16 : vector<256xf32> to vector<1x256xf32>
    %cst_12 = arith.constant 2.560000e+02 : f32
    %18 = vector.broadcast %cst_12 : f32 to vector<1x256xf32>
    %19 = arith.divf %17, %18 : vector<1x256xf32>
    %20 = vector.broadcast %12 : vector<1x256xf32> to vector<256x256xf32>
    %21 = arith.subf %8, %20 : vector<256x256xf32>
    %cst_13 = arith.constant 9.99999974E-6 : f32
    %22 = vector.broadcast %cst_13 : f32 to vector<1x256xf32>
    %23 = arith.addf %19, %22 : vector<1x256xf32>
    %24 = math.rsqrt %23 : vector<1x256xf32>
    %25 = vector.broadcast %24 : vector<1x256xf32> to vector<256x256xf32>
    %26 = arith.mulf %21, %25 : vector<256x256xf32>
    %27 = vector.broadcast %3 : vector<1x256xf32> to vector<256x256xf32>
    %28 = arith.mulf %26, %27 : vector<256x256xf32>
    %29 = vector.broadcast %4 : vector<1x256xf32> to vector<256x256xf32>
    %30 = arith.addf %28, %29 : vector<256x256xf32>
    %cst_14 = arith.constant 0.000000e+00 : f32
    %31 = vector.broadcast %cst_14 : f32 to vector<256x256xf32>
    %32 = arith.maximumf %30, %31 : vector<256x256xf32>
    %33 = arith.mulf %32, %32 : vector<256x256xf32>
    %cst_15 = arith.constant dense<0.000000e+00> : vector<256xf32>
    %34 = vector.multi_reduction <add>, %33, %cst_15 [1] : vector<256x256xf32> to vector<256xf32>
    %35 = vector.shape_cast %34 : vector<256xf32> to vector<256x1xf32>
    %cst_16 = arith.constant 1.000000e-24 : f32
    %36 = vector.broadcast %cst_16 : f32 to vector<256x1xf32>
    %37 = arith.maximumf %35, %36 : vector<256x1xf32>
    %38 = math.rsqrt %37 : vector<256x1xf32>
    %39 = vector.broadcast %38 : vector<256x1xf32> to vector<256x256xf32>
    %40 = arith.mulf %32, %39 : vector<256x256xf32>
    %c0_17 = arith.constant 0 : index
    %c0_18 = arith.constant 0 : index
    %41 = vector.load %arg6[%c0_17, %c0_18] : memref<256x256xbf16, #tpu.memory_space<vmem>>, vector<256x256xbf16>
    %c0_19 = arith.constant 0 : index
    %c0_20 = arith.constant 0 : index
    %42 = vector.load %arg7[%c0_19, %c0_20] : memref<1x256xf32, #tpu.memory_space<vmem>>, vector<1x256xf32>
    %c0_21 = arith.constant 0 : index
    %c0_22 = arith.constant 0 : index
    %43 = vector.load %arg8[%c0_21, %c0_22] : memref<1x256xf32, #tpu.memory_space<vmem>>, vector<1x256xf32>
    %c0_23 = arith.constant 0 : index
    %c0_24 = arith.constant 0 : index
    %44 = vector.load %arg9[%c0_23, %c0_24] : memref<1x256xf32, #tpu.memory_space<vmem>>, vector<1x256xf32>
    %45 = arith.truncf %40 : vector<256x256xf32> to vector<256x256xbf16>
    %cst_25 = arith.constant dense<0.000000e+00> : vector<256x256xf32>
    %46 = tpu.matmul %45, %41, %cst_25 {dimension_numbers = #tpu.dot_dimension_numbers<[1], [0], [0], [1], [0, 0, 1, 1], [], []>} : vector<256x256xbf16>, vector<256x256xbf16>, vector<256x256xf32> -> vector<256x256xf32>
    %47 = vector.broadcast %42 : vector<1x256xf32> to vector<256x256xf32>
    %48 = arith.addf %46, %47 : vector<256x256xf32>
    %cst_26 = arith.constant dense<0.000000e+00> : vector<256xf32>
    %49 = vector.multi_reduction <add>, %48, %cst_26 [0] : vector<256x256xf32> to vector<256xf32>
    %50 = vector.shape_cast %49 : vector<256xf32> to vector<1x256xf32>
    %cst_27 = arith.constant 2.560000e+02 : f32
    %51 = vector.broadcast %cst_27 : f32 to vector<1x256xf32>
    %52 = arith.divf %50, %51 : vector<1x256xf32>
    %53 = vector.broadcast %52 : vector<1x256xf32> to vector<256x256xf32>
    %54 = arith.subf %48, %53 : vector<256x256xf32>
    %55 = arith.mulf %54, %54 : vector<256x256xf32>
    %cst_28 = arith.constant dense<0.000000e+00> : vector<256xf32>
    %56 = vector.multi_reduction <add>, %55, %cst_28 [0] : vector<256x256xf32> to vector<256xf32>
    %57 = vector.shape_cast %56 : vector<256xf32> to vector<1x256xf32>
    %cst_29 = arith.constant 2.560000e+02 : f32
    %58 = vector.broadcast %cst_29 : f32 to vector<1x256xf32>
    %59 = arith.divf %57, %58 : vector<1x256xf32>
    %60 = vector.broadcast %52 : vector<1x256xf32> to vector<256x256xf32>
    %61 = arith.subf %48, %60 : vector<256x256xf32>
    %cst_30 = arith.constant 9.99999974E-6 : f32
    %62 = vector.broadcast %cst_30 : f32 to vector<1x256xf32>
    %63 = arith.addf %59, %62 : vector<1x256xf32>
    %64 = math.rsqrt %63 : vector<1x256xf32>
    %65 = vector.broadcast %64 : vector<1x256xf32> to vector<256x256xf32>
    %66 = arith.mulf %61, %65 : vector<256x256xf32>
    %67 = vector.broadcast %43 : vector<1x256xf32> to vector<256x256xf32>
    %68 = arith.mulf %66, %67 : vector<256x256xf32>
    %69 = vector.broadcast %44 : vector<1x256xf32> to vector<256x256xf32>
    %70 = arith.addf %68, %69 : vector<256x256xf32>
    %cst_31 = arith.constant 0.000000e+00 : f32
    %71 = vector.broadcast %cst_31 : f32 to vector<256x256xf32>
    %72 = arith.maximumf %70, %71 : vector<256x256xf32>
    %73 = arith.mulf %72, %72 : vector<256x256xf32>
    %cst_32 = arith.constant dense<0.000000e+00> : vector<256xf32>
    %74 = vector.multi_reduction <add>, %73, %cst_32 [1] : vector<256x256xf32> to vector<256xf32>
    %75 = vector.shape_cast %74 : vector<256xf32> to vector<256x1xf32>
    %cst_33 = arith.constant 1.000000e-24 : f32
    %76 = vector.broadcast %cst_33 : f32 to vector<256x1xf32>
    %77 = arith.maximumf %75, %76 : vector<256x1xf32>
    %78 = math.rsqrt %77 : vector<256x1xf32>
    %79 = vector.broadcast %78 : vector<256x1xf32> to vector<256x256xf32>
    %80 = arith.mulf %72, %79 : vector<256x256xf32>
    %c0_34 = arith.constant 0 : index
    %c0_35 = arith.constant 0 : index
    %81 = vector.load %arg0[%c0_34, %c0_35] : memref<256x256xf32, #tpu.memory_space<vmem>>, vector<256x256xf32>
    %82 = arith.subf %81, %80 : vector<256x256xf32>
    %83 = arith.mulf %82, %82 : vector<256x256xf32>
    %84 = vector.shape_cast %83 : vector<256x256xf32> to vector<1x256x256xf32>
    %cst_36 = arith.constant dense<0.000000e+00> : vector<1xf32>
    %85 = vector.multi_reduction <add>, %84, %cst_36 [1, 2] : vector<1x256x256xf32> to vector<1xf32>
    %86 = vector.shape_cast %85 : vector<1xf32> to vector<1x1x1xf32>
    %87 = vector.extract %86[0, 0, 0] : f32 from vector<1x1x1xf32>
    %cst_37 = arith.constant 6.553600e+04 : f32
    %88 = arith.divf %87, %cst_37 : f32
    %c0_38 = arith.constant 0 : index
    %89 = memref.load %arg10[%c0_38] : memref<1xf32, #tpu.memory_space<smem>>
    memref.store %88, %arg10[%c0_38] : memref<1xf32, #tpu.memory_space<smem>>
    return
  }
}

</mosaic_0001>

<llo_original>
// kernel: individual_mlp_encoder.4
$region0: #{individual_mlp_encoder.4}
  #allocation0 [shape = 'u32[]', space=smem, size = 0x4, offset = 0x4, fixed_abs, tag = 'smem constant byte address 0x4 - core index']
  #allocation1 [shape = 'u32[144,128]{1,0:T(1,128)}', space=vmem, size = 0x12000, scoped, tag = 'internal scratch']
  %s0 = inlined_call_operand.vmem [shape: f32[256,256], index: 0, kind: input, shape index: {}]
  %s1 = inlined_call_operand.vmem [shape: bf16[256,128], index: 1, kind: input, shape index: {}]
  %s2 = inlined_call_operand.vmem [shape: f32[256,128], index: 2, kind: input, shape index: {}]
  %s3 = inlined_call_operand.vmem [shape: f32[256,128], index: 3, kind: output, shape index: {0}]
  %s4 = inlined_call_operand.vmem [shape: f32[1,128], index: 4, kind: output, shape index: {1}]
  %5 = xla_tuple %s3, %s4
  %s6 = sld [smem:[#allocation0]]
  $region30: #{individual_mlp_encoder.4} parent=0
    _
  %s8 = ssub.s32 1, %s6
  %s9 = scalar_select 0, %s8, %s6
  // Predicated region
  $region2: #{individual_mlp_encoder.4} parent=0 // pred_check
    _
  $region3: #{individual_mlp_encoder.4} parent=0 // pred_check_branch
    %11 = sbr.rel (0) target = $region5
  $region4: #{individual_mlp_encoder.4} parent=0 // pred_region
    _
  $region5: #{individual_mlp_encoder.4} parent=0 // pred_fallthru
    _
  // Predicated region
  $region6: #{individual_mlp_encoder.4} parent=0 // pred_check
    _
  $region7: #{individual_mlp_encoder.4} parent=0 // pred_check_branch
    %13 = sbr.rel (0) target = $region9
  $region8: #{individual_mlp_encoder.4} parent=0 // pred_region
    _
  $region9: #{individual_mlp_encoder.4} parent=0 // pred_fallthru
    _
  // Predicated region
  $region10: #{individual_mlp_encoder.4} parent=0 // pred_check
    _
  $region11: #{individual_mlp_encoder.4} parent=0 // pred_check_branch
    %15 = sbr.rel (0) target = $region13
  $region12: #{individual_mlp_encoder.4} parent=0 // pred_region
    _
  $region13: #{individual_mlp_encoder.4} parent=0 // pred_fallthru
    _
  %s17 = smul.u32 0, 256
  %v18 = vlaneseq
  %v19 = vshrl.u32 %v18, 7
  %v20 = vadd.s32 %v19, 8
  %v21 = vadd.s32 %v19, 16
  %v22 = vadd.s32 %v19, 24
  %v23 = vadd.s32 %v19, 32
  %v24 = vadd.s32 %v19, 40
  %v25 = vadd.s32 %v19, 48
  %v26 = vadd.s32 %v19, 56
  %v27 = vadd.s32 %v19, 64
  %v28 = vadd.s32 %v19, 72
  %v29 = vadd.s32 %v19, 80
  %v30 = vadd.s32 %v19, 88
  %v31 = vadd.s32 %v19, 96
  %v32 = vadd.s32 %v19, 104
  %v33 = vadd.s32 %v19, 112
  %v34 = vadd.s32 %v19, 120
  %v35 = vadd.s32 %v19, 128
  %v36 = vadd.s32 %v19, 136
  %v37 = vadd.s32 %v19, 144
  %v38 = vadd.s32 %v19, 152
  %v39 = vadd.s32 %v19, 160
  %v40 = vadd.s32 %v19, 168
  %v41 = vadd.s32 %v19, 176
  %v42 = vadd.s32 %v19, 184
  %v43 = vadd.s32 %v19, 192
  %v44 = vadd.s32 %v19, 200
  %v45 = vadd.s32 %v19, 208
  %v46 = vadd.s32 %v19, 216
  %v47 = vadd.s32 %v19, 224
  %v48 = vadd.s32 %v19, 232
  %v49 = vadd.s32 %v19, 240
  %v50 = vadd.s32 %v19, 248
  %v51 = vstv %s17
  %v52 = vadd.s32 %v19, %v51
  %v53 = vadd.s32 %v20, %v51
  %v54 = vadd.s32 %v21, %v51
  %v55 = vadd.s32 %v22, %v51
  %v56 = vadd.s32 %v23, %v51
  %v57 = vadd.s32 %v24, %v51
  %v58 = vadd.s32 %v25, %v51
  %v59 = vadd.s32 %v26, %v51
  %v60 = vadd.s32 %v27, %v51
  %v61 = vadd.s32 %v28, %v51
  %v62 = vadd.s32 %v29, %v51
  %v63 = vadd.s32 %v30, %v51
  %v64 = vadd.s32 %v31, %v51
  %v65 = vadd.s32 %v32, %v51
  %v66 = vadd.s32 %v33, %v51
  %v67 = vadd.s32 %v34, %v51
  %v68 = vadd.s32 %v35, %v51
  %v69 = vadd.s32 %v36, %v51
  %v70 = vadd.s32 %v37, %v51
  %v71 = vadd.s32 %v38, %v51
  %v72 = vadd.s32 %v39, %v51
  %v73 = vadd.s32 %v40, %v51
  %v74 = vadd.s32 %v41, %v51
  %v75 = vadd.s32 %v42, %v51
  %v76 = vadd.s32 %v43, %v51
  %v77 = vadd.s32 %v44, %v51
  %v78 = vadd.s32 %v45, %v51
  %v79 = vadd.s32 %v46, %v51
  %v80 = vadd.s32 %v47, %v51
  %v81 = vadd.s32 %v48, %v51
  %v82 = vadd.s32 %v49, %v51
  %v83 = vadd.s32 %v50, %v51
  %v84 = vlaneseq
  %v85 = vand.u32 %v84, 127
  %v86 = vadd.s32 %v85, 128
  %vm87 = vcmp.eq.s32.totalorder %v52, %v85
  %vm88 = vcmp.eq.s32.totalorder %v52, %v86
  %vm89 = vcmp.eq.s32.totalorder %v53, %v85
  %vm90 = vcmp.eq.s32.totalorder %v53, %v86
  %vm91 = vcmp.eq.s32.totalorder %v54, %v85
  %vm92 = vcmp.eq.s32.totalorder %v54, %v86
  %vm93 = vcmp.eq.s32.totalorder %v55, %v85
  %vm94 = vcmp.eq.s32.totalorder %v55, %v86
  %vm95 = vcmp.eq.s32.totalorder %v56, %v85
  %vm96 = vcmp.eq.s32.totalorder %v56, %v86
  %vm97 = vcmp.eq.s32.totalorder %v57, %v85
  %vm98 = vcmp.eq.s32.totalorder %v57, %v86
  %vm99 = vcmp.eq.s32.totalorder %v58, %v85
  %vm100 = vcmp.eq.s32.totalorder %v58, %v86
  %vm101 = vcmp.eq.s32.totalorder %v59, %v85
  %vm102 = vcmp.eq.s32.totalorder %v59, %v86
  %vm103 = vcmp.eq.s32.totalorder %v60, %v85
  %vm104 = vcmp.eq.s32.totalorder %v60, %v86
  %vm105 = vcmp.eq.s32.totalorder %v61, %v85
  %vm106 = vcmp.eq.s32.totalorder %v61, %v86
  %vm107 = vcmp.eq.s32.totalorder %v62, %v85
  %vm108 = vcmp.eq.s32.totalorder %v62, %v86
  %vm109 = vcmp.eq.s32.totalorder %v63, %v85
  %vm110 = vcmp.eq.s32.totalorder %v63, %v86
  %vm111 = vcmp.eq.s32.totalorder %v64, %v85
  %vm112 = vcmp.eq.s32.totalorder %v64, %v86
  %vm113 = vcmp.eq.s32.totalorder %v65, %v85
  %vm114 = vcmp.eq.s32.totalorder %v65, %v86
  %vm115 = vcmp.eq.s32.totalorder %v66, %v85
  %vm116 = vcmp.eq.s32.totalorder %v66, %v86
  %vm117 = vcmp.eq.s32.totalorder %v67, %v85
  %vm118 = vcmp.eq.s32.totalorder %v67, %v86
  %vm119 = vcmp.eq.s32.totalorder %v68, %v85
  %vm120 = vcmp.eq.s32.totalorder %v68, %v86
  %vm121 = vcmp.eq.s32.totalorder %v69, %v85
  %vm122 = vcmp.eq.s32.totalorder %v69, %v86
  %vm123 = vcmp.eq.s32.totalorder %v70, %v85
  %vm124 = vcmp.eq.s32.totalorder %v70, %v86
  %vm125 = vcmp.eq.s32.totalorder %v71, %v85
  %vm126 = vcmp.eq.s32.totalorder %v71, %v86
  %vm127 = vcmp.eq.s32.totalorder %v72, %v85
  %vm128 = vcmp.eq.s32.totalorder %v72, %v86
  %vm129 = vcmp.eq.s32.totalorder %v73, %v85
  %vm130 = vcmp.eq.s32.totalorder %v73, %v86
  %vm131 = vcmp.eq.s32.totalorder %v74, %v85
  %vm132 = vcmp.eq.s32.totalorder %v74, %v86
  %vm133 = vcmp.eq.s32.totalorder %v75, %v85
  %vm134 = vcmp.eq.s32.totalorder %v75, %v86
  %vm135 = vcmp.eq.s32.totalorder %v76, %v85
  %vm136 = vcmp.eq.s32.totalorder %v76, %v86
  %vm137 = vcmp.eq.s32.totalorder %v77, %v85
  %vm138 = vcmp.eq.s32.totalorder %v77, %v86
  %vm139 = vcmp.eq.s32.totalorder %v78, %v85
  %vm140 = vcmp.eq.s32.totalorder %v78, %v86
  %vm141 = vcmp.eq.s32.totalorder %v79, %v85
  %vm142 = vcmp.eq.s32.totalorder %v79, %v86
  %vm143 = vcmp.eq.s32.totalorder %v80, %v85
  %vm144 = vcmp.eq.s32.totalorder %v80, %v86
  %vm145 = vcmp.eq.s32.totalorder %v81, %v85
  %vm146 = vcmp.eq.s32.totalorder %v81, %v86
  %vm147 = vcmp.eq.s32.totalorder %v82, %v85
  %vm148 = vcmp.eq.s32.totalorder %v82, %v86
  %vm149 = vcmp.eq.s32.totalorder %v83, %v85
  %vm150 = vcmp.eq.s32.totalorder %v83, %v86
  %v151 = vld [vmem:[%s0] sm:$0xff]
  %v152 = vld [vmem:[%s0 + $0x8] sm:$0xff]
  %v153 = vld [vmem:[%s0 + $0x10] sm:$0xff]
  %v154 = vld [vmem:[%s0 + $0x18] sm:$0xff]
  %v155 = vld [vmem:[%s0 + $0x20] sm:$0xff]
  %v156 = vld [vmem:[%s0 + $0x28] sm:$0xff]
  %v157 = vld [vmem:[%s0 + $0x30] sm:$0xff]
  %v158 = vld [vmem:[%s0 + $0x38] sm:$0xff]
  %v159 = vld [vmem:[%s0 + $0x40] sm:$0xff]
  %v160 = vld [vmem:[%s0 + $0x48] sm:$0xff]
  %v161 = vld [vmem:[%s0 + $0x50] sm:$0xff]
  %v162 = vld [vmem:[%s0 + $0x58] sm:$0xff]
  %v163 = vld [vmem:[%s0 + $0x60] sm:$0xff]
  %v164 = vld [vmem:[%s0 + $0x68] sm:$0xff]
  %v165 = vld [vmem:[%s0 + $0x70] sm:$0xff]
  %v166 = vld [vmem:[%s0 + $0x78] sm:$0xff]
  %v167 = vld [vmem:[%s0 + $0x80] sm:$0xff]
  %v168 = vld [vmem:[%s0 + $0x88] sm:$0xff]
  %v169 = vld [vmem:[%s0 + $0x90] sm:$0xff]
  %v170 = vld [vmem:[%s0 + $0x98] sm:$0xff]
  %v171 = vld [vmem:[%s0 + $0xa0] sm:$0xff]
  %v172 = vld [vmem:[%s0 + $0xa8] sm:$0xff]
  %v173 = vld [vmem:[%s0 + $0xb0] sm:$0xff]
  %v174 = vld [vmem:[%s0 + $0xb8] sm:$0xff]
  %v175 = vld [vmem:[%s0 + $0xc0] sm:$0xff]
  %v176 = vld [vmem:[%s0 + $0xc8] sm:$0xff]
  %v177 = vld [vmem:[%s0 + $0xd0] sm:$0xff]
  %v178 = vld [vmem:[%s0 + $0xd8] sm:$0xff]
  %v179 = vld [vmem:[%s0 + $0xe0] sm:$0xff]
  %v180 = vld [vmem:[%s0 + $0xe8] sm:$0xff]
  %v181 = vld [vmem:[%s0 + $0xf0] sm:$0xff]
  %v182 = vld [vmem:[%s0 + $0xf8] sm:$0xff]
  %v183 = vld [vmem:[%s0 + $0x100] sm:$0xff]
  %v184 = vld [vmem:[%s0 + $0x108] sm:$0xff]
  %v185 = vld [vmem:[%s0 + $0x110] sm:$0xff]
  %v186 = vld [vmem:[%s0 + $0x118] sm:$0xff]
  %v187 = vld [vmem:[%s0 + $0x120] sm:$0xff]
  %v188 = vld [vmem:[%s0 + $0x128] sm:$0xff]
  %v189 = vld [vmem:[%s0 + $0x130] sm:$0xff]
  %v190 = vld [vmem:[%s0 + $0x138] sm:$0xff]
  %v191 = vld [vmem:[%s0 + $0x140] sm:$0xff]
  %v192 = vld [vmem:[%s0 + $0x148] sm:$0xff]
  %v193 = vld [vmem:[%s0 + $0x150] sm:$0xff]
  %v194 = vld [vmem:[%s0 + $0x158] sm:$0xff]
  %v195 = vld [vmem:[%s0 + $0x160] sm:$0xff]
  %v196 = vld [vmem:[%s0 + $0x168] sm:$0xff]
  %v197 = vld [vmem:[%s0 + $0x170] sm:$0xff]
  %v198 = vld [vmem:[%s0 + $0x178] sm:$0xff]
  %v199 = vld [vmem:[%s0 + $0x180] sm:$0xff]
  %v200 = vld [vmem:[%s0 + $0x188] sm:$0xff]
  %v201 = vld [vmem:[%s0 + $0x190] sm:$0xff]
  %v202 = vld [vmem:[%s0 + $0x198] sm:$0xff]
  %v203 = vld [vmem:[%s0 + $0x1a0] sm:$0xff]
  %v204 = vld [vmem:[%s0 + $0x1a8] sm:$0xff]
  %v205 = vld [vmem:[%s0 + $0x1b0] sm:$0xff]
  %v206 = vld [vmem:[%s0 + $0x1b8] sm:$0xff]
  %v207 = vld [vmem:[%s0 + $0x1c0] sm:$0xff]
  %v208 = vld [vmem:[%s0 + $0x1c8] sm:$0xff]
  %v209 = vld [vmem:[%s0 + $0x1d0] sm:$0xff]
  %v210 = vld [vmem:[%s0 + $0x1d8] sm:$0xff]
  %v211 = vld [vmem:[%s0 + $0x1e0] sm:$0xff]
  %v212 = vld [vmem:[%s0 + $0x1e8] sm:$0xff]
  %v213 = vld [vmem:[%s0 + $0x1f0] sm:$0xff]
  %v214 = vld [vmem:[%s0 + $0x1f8] sm:$0xff]
  %v215 = vsel %vm87, 0.0, %v151
  %v216 = vsel %vm88, 0.0, %v152
  %v217 = vsel %vm89, 0.0, %v153
  %v218 = vsel %vm90, 0.0, %v154
  %v219 = vsel %vm91, 0.0, %v155
  %v220 = vsel %vm92, 0.0, %v156
  %v221 = vsel %vm93, 0.0, %v157
  %v222 = vsel %vm94, 0.0, %v158
  %v223 = vsel %vm95, 0.0, %v159
  %v224 = vsel %vm96, 0.0, %v160
  %v225 = vsel %vm97, 0.0, %v161
  %v226 = vsel %vm98, 0.0, %v162
  %v227 = vsel %vm99, 0.0, %v163
  %v228 = vsel %vm100, 0.0, %v164
  %v229 = vsel %vm101, 0.0, %v165
  %v230 = vsel %vm102, 0.0, %v166
  %v231 = vsel %vm103, 0.0, %v167
  %v232 = vsel %vm104, 0.0, %v168
  %v233 = vsel %vm105, 0.0, %v169
  %v234 = vsel %vm106, 0.0, %v170
  %v235 = vsel %vm107, 0.0, %v171
  %v236 = vsel %vm108, 0.0, %v172
  %v237 = vsel %vm109, 0.0, %v173
  %v238 = vsel %vm110, 0.0, %v174
  %v239 = vsel %vm111, 0.0, %v175
  %v240 = vsel %vm112, 0.0, %v176
  %v241 = vsel %vm113, 0.0, %v177
  %v242 = vsel %vm114, 0.0, %v178
  %v243 = vsel %vm115, 0.0, %v179
  %v244 = vsel %vm116, 0.0, %v180
  %v245 = vsel %vm117, 0.0, %v181
  %v246 = vsel %vm118, 0.0, %v182
  %v247 = vsel %vm119, 0.0, %v183
  %v248 = vsel %vm120, 0.0, %v184
  %v249 = vsel %vm121, 0.0, %v185
  %v250 = vsel %vm122, 0.0, %v186
  %v251 = vsel %vm123, 0.0, %v187
  %v252 = vsel %vm124, 0.0, %v188
  %v253 = vsel %vm125, 0.0, %v189
  %v254 = vsel %vm126, 0.0, %v190
  %v255 = vsel %vm127, 0.0, %v191
  %v256 = vsel %vm128, 0.0, %v192
  %v257 = vsel %vm129, 0.0, %v193
  %v258 = vsel %vm130, 0.0, %v194
  %v259 = vsel %vm131, 0.0, %v195
  %v260 = vsel %vm132, 0.0, %v196
  %v261 = vsel %vm133, 0.0, %v197
  %v262 = vsel %vm134, 0.0, %v198
  %v263 = vsel %vm135, 0.0, %v199
  %v264 = vsel %vm136, 0.0, %v200
  %v265 = vsel %vm137, 0.0, %v201
  %v266 = vsel %vm138, 0.0, %v202
  %v267 = vsel %vm139, 0.0, %v203
  %v268 = vsel %vm140, 0.0, %v204
  %v269 = vsel %vm141, 0.0, %v205
  %v270 = vsel %vm142, 0.0, %v206
  %v271 = vsel %vm143, 0.0, %v207
  %v272 = vsel %vm144, 0.0, %v208
  %v273 = vsel %vm145, 0.0, %v209
  %v274 = vsel %vm146, 0.0, %v210
  %v275 = vsel %vm147, 0.0, %v211
  %v276 = vsel %vm148, 0.0, %v212
  %v277 = vsel %vm149, 0.0, %v213
  %v278 = vsel %vm150, 0.0, %v214
  %v279 = vand.u32 2147483647, %v215
  %v280 = vand.u32 2147483647, %v216
  %v281 = vand.u32 2147483647, %v217
  %v282 = vand.u32 2147483647, %v218
  %v283 = vand.u32 2147483647, %v219
  %v284 = vand.u32 2147483647, %v220
  %v285 = vand.u32 2147483647, %v221
  %v286 = vand.u32 2147483647, %v222
  %v287 = vand.u32 2147483647, %v223
  %v288 = vand.u32 2147483647, %v224
  %v289 = vand.u32 2147483647, %v225
  %v290 = vand.u32 2147483647, %v226
  %v291 = vand.u32 2147483647, %v227
  %v292 = vand.u32 2147483647, %v228
  %v293 = vand.u32 2147483647, %v229
  %v294 = vand.u32 2147483647, %v230
  %v295 = vand.u32 2147483647, %v231
  %v296 = vand.u32 2147483647, %v232
  %v297 = vand.u32 2147483647, %v233
  %v298 = vand.u32 2147483647, %v234
  %v299 = vand.u32 2147483647, %v235
  %v300 = vand.u32 2147483647, %v236
  %v301 = vand.u32 2147483647, %v237
  %v302 = vand.u32 2147483647, %v238
  %v303 = vand.u32 2147483647, %v239
  %v304 = vand.u32 2147483647, %v240
  %v305 = vand.u32 2147483647, %v241
  %v306 = vand.u32 2147483647, %v242
  %v307 = vand.u32 2147483647, %v243
  %v308 = vand.u32 2147483647, %v244
  %v309 = vand.u32 2147483647, %v245
  %v310 = vand.u32 2147483647, %v246
  %v311 = vand.u32 2147483647, %v247
  %v312 = vand.u32 2147483647, %v248
  %v313 = vand.u32 2147483647, %v249
  %v314 = vand.u32 2147483647, %v250
  %v315 = vand.u32 2147483647, %v251
  %v316 = vand.u32 2147483647, %v252
  %v317 = vand.u32 2147483647, %v253
  %v318 = vand.u32 2147483647, %v254
  %v319 = vand.u32 2147483647, %v255
  %v320 = vand.u32 2147483647, %v256
  %v321 = vand.u32 2147483647, %v257
  %v322 = vand.u32 2147483647, %v258
  %v323 = vand.u32 2147483647, %v259
  %v324 = vand.u32 2147483647, %v260
  %v325 = vand.u32 2147483647, %v261
  %v326 = vand.u32 2147483647, %v262
  %v327 = vand.u32 2147483647, %v263
  %v328 = vand.u32 2147483647, %v264
  %v329 = vand.u32 2147483647, %v265
  %v330 = vand.u32 2147483647, %v266
  %v331 = vand.u32 2147483647, %v267
  %v332 = vand.u32 2147483647, %v268
  %v333 = vand.u32 2147483647, %v269
  %v334 = vand.u32 2147483647, %v270
  %v335 = vand.u32 2147483647, %v271
  %v336 = vand.u32 2147483647, %v272
  %v337 = vand.u32 2147483647, %v273
  %v338 = vand.u32 2147483647, %v274
  %v339 = vand.u32 2147483647, %v275
  %v340 = vand.u32 2147483647, %v276
  %v341 = vand.u32 2147483647, %v277
  %v342 = vand.u32 2147483647, %v278
  %v343 = vadd.f32 %v279, %v280
  %v344 = vadd.f32 %v343, %v281
  %v345 = vadd.f32 %v344, %v282
  %v346 = vadd.f32 %v345, %v283
  %v347 = vadd.f32 %v346, %v284
  %v348 = vadd.f32 %v347, %v285
  %v349 = vadd.f32 %v348, %v286
  %v350 = vadd.f32 %v349, %v287
  %v351 = vadd.f32 %v350, %v288
  %v352 = vadd.f32 %v351, %v289
  %v353 = vadd.f32 %v352, %v290
  %v354 = vadd.f32 %v353, %v291
  %v355 = vadd.f32 %v354, %v292
  %v356 = vadd.f32 %v355, %v293
  %v357 = vadd.f32 %v356, %v294
  %v358 = vadd.f32 %v357, %v295
  %v359 = vadd.f32 %v358, %v296
  %v360 = vadd.f32 %v359, %v297
  %v361 = vadd.f32 %v360, %v298
  %v362 = vadd.f32 %v361, %v299
  %v363 = vadd.f32 %v362, %v300
  %v364 = vadd.f32 %v363, %v301
  %v365 = vadd.f32 %v364, %v302
  %v366 = vadd.f32 %v365, %v303
  %v367 = vadd.f32 %v366, %v304
  %v368 = vadd.f32 %v367, %v305
  %v369 = vadd.f32 %v368, %v306
  %v370 = vadd.f32 %v369, %v307
  %v371 = vadd.f32 %v370, %v308
  %v372 = vadd.f32 %v371, %v309
  %v373 = vadd.f32 %v372, %v310
  %v374 = vadd.f32 %v373, %v311
  %v375 = vadd.f32 %v374, %v312
  %v376 = vadd.f32 %v375, %v313
  %v377 = vadd.f32 %v376, %v314
  %v378 = vadd.f32 %v377, %v315
  %v379 = vadd.f32 %v378, %v316
  %v380 = vadd.f32 %v379, %v317
  %v381 = vadd.f32 %v380, %v318
  %v382 = vadd.f32 %v381, %v319
  %v383 = vadd.f32 %v382, %v320
  %v384 = vadd.f32 %v383, %v321
  %v385 = vadd.f32 %v384, %v322
  %v386 = vadd.f32 %v385, %v323
  %v387 = vadd.f32 %v386, %v324
  %v388 = vadd.f32 %v387, %v325
  %v389 = vadd.f32 %v388, %v326
  %v390 = vadd.f32 %v389, %v327
  %v391 = vadd.f32 %v390, %v328
  %v392 = vadd.f32 %v391, %v329
  %v393 = vadd.f32 %v392, %v330
  %v394 = vadd.f32 %v393, %v331
  %v395 = vadd.f32 %v394, %v332
  %v396 = vadd.f32 %v395, %v333
  %v397 = vadd.f32 %v396, %v334
  %v398 = vadd.f32 %v397, %v335
  %v399 = vadd.f32 %v398, %v336
  %v400 = vadd.f32 %v399, %v337
  %v401 = vadd.f32 %v400, %v338
  %v402 = vadd.f32 %v401, %v339
  %v403 = vadd.f32 %v402, %v340
  %v404 = vadd.f32 %v403, %v341
  %v405 = vadd.f32 %v404, %v342
  %406 = vadd.xlane.f32.xlu0 %v405
  %v407 = vpop.xlane.xlu0 %406
  %v408 = vrot.slane %v407, 4
  %v409 = vadd.f32 %v407, %v408
  %v410 = vrot.slane %v409, 2
  %v411 = vadd.f32 %v409, %v410
  %v412 = vrot.slane %v411, 1
  %v413 = vadd.f32 %v411, %v412
  %s414 = vtos %v413
  %v415 = vpack.c.bf16 %v217, %v215
  %v416 = vpack.c.bf16 %v218, %v216
  %v417 = vpack.c.bf16 %v221, %v219
  %v418 = vpack.c.bf16 %v222, %v220
  %v419 = vpack.c.bf16 %v225, %v223
  %v420 = vpack.c.bf16 %v226, %v224
  %v421 = vpack.c.bf16 %v229, %v227
  %v422 = vpack.c.bf16 %v230, %v228
  %v423 = vpack.c.bf16 %v233, %v231
  %v424 = vpack.c.bf16 %v234, %v232
  %v425 = vpack.c.bf16 %v237, %v235
  %v426 = vpack.c.bf16 %v238, %v236
  %v427 = vpack.c.bf16 %v241, %v239
  %v428 = vpack.c.bf16 %v242, %v240
  %v429 = vpack.c.bf16 %v245, %v243
  %v430 = vpack.c.bf16 %v246, %v244
  %v431 = vpack.c.bf16 %v249, %v247
  %v432 = vpack.c.bf16 %v250, %v248
  %v433 = vpack.c.bf16 %v253, %v251
  %v434 = vpack.c.bf16 %v254, %v252
  %v435 = vpack.c.bf16 %v257, %v255
  %v436 = vpack.c.bf16 %v258, %v256
  %v437 = vpack.c.bf16 %v261, %v259
  %v438 = vpack.c.bf16 %v262, %v260
  %v439 = vpack.c.bf16 %v265, %v263
  %v440 = vpack.c.bf16 %v266, %v264
  %v441 = vpack.c.bf16 %v269, %v267
  %v442 = vpack.c.bf16 %v270, %v268
  %v443 = vpack.c.bf16 %v273, %v271
  %v444 = vpack.c.bf16 %v274, %v272
  %v445 = vpack.c.bf16 %v277, %v275
  %v446 = vpack.c.bf16 %v278, %v276
  %v447 = vld [vmem:[%s1] sm:$0xf]
  %v448 = vld [vmem:[%s1 + $0x4] sm:$0xf]
  %v449 = vld [vmem:[%s1 + $0x8] sm:$0xf]
  %v450 = vld [vmem:[%s1 + $0xc] sm:$0xf]
  %v451 = vld [vmem:[%s1 + $0x10] sm:$0xf]
  %v452 = vld [vmem:[%s1 + $0x14] sm:$0xf]
  %v453 = vld [vmem:[%s1 + $0x18] sm:$0xf]
  %v454 = vld [vmem:[%s1 + $0x1c] sm:$0xf]
  %v455 = vld [vmem:[%s1 + $0x20] sm:$0xf]
  %v456 = vld [vmem:[%s1 + $0x24] sm:$0xf]
  %v457 = vld [vmem:[%s1 + $0x28] sm:$0xf]
  %v458 = vld [vmem:[%s1 + $0x2c] sm:$0xf]
  %v459 = vld [vmem:[%s1 + $0x30] sm:$0xf]
  %v460 = vld [vmem:[%s1 + $0x34] sm:$0xf]
  %v461 = vld [vmem:[%s1 + $0x38] sm:$0xf]
  %v462 = vld [vmem:[%s1 + $0x3c] sm:$0xf]
  %v463 = vld [vmem:[%s1 + $0x40] sm:$0xf]
  %v464 = vld [vmem:[%s1 + $0x44] sm:$0xf]
  %v465 = vld [vmem:[%s1 + $0x48] sm:$0xf]
  %v466 = vld [vmem:[%s1 + $0x4c] sm:$0xf]
  %v467 = vld [vmem:[%s1 + $0x50] sm:$0xf]
  %v468 = vld [vmem:[%s1 + $0x54] sm:$0xf]
  %v469 = vld [vmem:[%s1 + $0x58] sm:$0xf]
  %v470 = vld [vmem:[%s1 + $0x5c] sm:$0xf]
  %v471 = vld [vmem:[%s1 + $0x60] sm:$0xf]
  %v472 = vld [vmem:[%s1 + $0x64] sm:$0xf]
  %v473 = vld [vmem:[%s1 + $0x68] sm:$0xf]
  %v474 = vld [vmem:[%s1 + $0x6c] sm:$0xf]
  %v475 = vld [vmem:[%s1 + $0x70] sm:$0xf]
  %v476 = vld [vmem:[%s1 + $0x74] sm:$0xf]
  %v477 = vld [vmem:[%s1 + $0x78] sm:$0xf]
  %v478 = vld [vmem:[%s1 + $0x7c] sm:$0xf]
  %v511 = vunpack.c.l.b16 %v447
  %v512 = vunpack.c.l.b16 %v448
  %v513 = vunpack.c.l.b16 %v449
  %v514 = vunpack.c.l.b16 %v450
  %v515 = vunpack.c.l.b16 %v451
  %v516 = vunpack.c.l.b16 %v452
  %v517 = vunpack.c.l.b16 %v453
  %v518 = vunpack.c.l.b16 %v454
  %v519 = vunpack.c.l.b16 %v455
  %v520 = vunpack.c.l.b16 %v456
  %v521 = vunpack.c.l.b16 %v457
  %v522 = vunpack.c.l.b16 %v458
  %v523 = vunpack.c.l.b16 %v459
  %v524 = vunpack.c.l.b16 %v460
  %v525 = vunpack.c.l.b16 %v461
  %v526 = vunpack.c.l.b16 %v462
  %v527 = vunpack.c.l.b16 %v463
  %v528 = vunpack.c.l.b16 %v464
  %v529 = vunpack.c.l.b16 %v465
  %v530 = vunpack.c.l.b16 %v466
  %v531 = vunpack.c.l.b16 %v467
  %v532 = vunpack.c.l.b16 %v468
  %v533 = vunpack.c.l.b16 %v469
  %v534 = vunpack.c.l.b16 %v470
  %v535 = vunpack.c.l.b16 %v471
  %v536 = vunpack.c.l.b16 %v472
  %v537 = vunpack.c.l.b16 %v473
  %v538 = vunpack.c.l.b16 %v474
  %v539 = vunpack.c.l.b16 %v475
  %v540 = vunpack.c.l.b16 %v476
  %v541 = vunpack.c.l.b16 %v477
  %v542 = vunpack.c.l.b16 %v478
  %v543 = vpack.c.b16 %v512, %v511
  %v544 = vpack.c.b16 %v514, %v513
  %v545 = vpack.c.b16 %v516, %v515
  %v546 = vpack.c.b16 %v518, %v517
  %v547 = vpack.c.b16 %v520, %v519
  %v548 = vpack.c.b16 %v522, %v521
  %v549 = vpack.c.b16 %v524, %v523
  %v550 = vpack.c.b16 %v526, %v525
  %v551 = vpack.c.b16 %v528, %v527
  %v552 = vpack.c.b16 %v530, %v529
  %v553 = vpack.c.b16 %v532, %v531
  %v554 = vpack.c.b16 %v534, %v533
  %v555 = vpack.c.b16 %v536, %v535
  %v556 = vpack.c.b16 %v538, %v537
  %v557 = vpack.c.b16 %v540, %v539
  %v558 = vpack.c.b16 %v542, %v541
  %575 = vmatprep.subr.bf16.mxu0 0
  %576 = vmatpush1.bf16.msra.mxu0 %v543
  %577 = vmatprep.subr.bf16.mxu0 0
  %578 = vmatpush1.bf16.msra.mxu0 %v544
  %579 = vmatprep.subr.bf16.mxu0 0
  %580 = vmatpush1.bf16.msra.mxu0 %v545
  %581 = vmatprep.subr.bf16.mxu0 0
  %582 = vmatpush1.bf16.msra.mxu0 %v546
  %583 = vmatprep.subr.bf16.mxu0 0
  %584 = vmatpush1.bf16.msra.mxu0 %v547
  %585 = vmatprep.subr.bf16.mxu0 0
  %586 = vmatpush1.bf16.msra.mxu0 %v548
  %587 = vmatprep.subr.bf16.mxu0 0
  %588 = vmatpush1.bf16.msra.mxu0 %v549
  %589 = vmatprep.subr.bf16.mxu0 0
  %590 = vmatpush1.bf16.msra.mxu0 %v550
  %591 = vmatprep.subr.bf16.mxu0 0
  %592 = vmatpush1.bf16.msra.mxu0 %v551
  %593 = vmatprep.subr.bf16.mxu0 0
  %594 = vmatpush1.bf16.msra.mxu0 %v552
  %595 = vmatprep.subr.bf16.mxu0 0
  %596 = vmatpush1.bf16.msra.mxu0 %v553
  %597 = vmatprep.subr.bf16.mxu0 0
  %598 = vmatpush1.bf16.msra.mxu0 %v554
  %599 = vmatprep.subr.bf16.mxu0 0
  %600 = vmatpush1.bf16.msra.mxu0 %v555
  %601 = vmatprep.subr.bf16.mxu0 0
  %602 = vmatpush1.bf16.msra.mxu0 %v556
  %603 = vmatprep.subr.bf16.mxu0 0
  %604 = vmatpush1.bf16.msra.mxu0 %v557
  %605 = vmatprep.subr.bf16.mxu0 0
  %606 = vmatpush1.bf16.msra.mxu0 %v558
  %607 = vmatprep.mubr.bf16.mxu0 %v416
  %608 = vmatmul.mubr.bf16.gmra.mrb[0].mxu0 %v415
  %v609 = vpop.f32.mrb[0].mxu0
  %v610 = vadd.f32 0.0, %v609
  %v611 = vpop.f32.mrb[0].mxu0
  %v612 = vpop.f32.mrb[0].mxu0
  %v613 = vadd.f32 0.0, %v612
  %v614 = vpop.f32.mrb[0].mxu0
  %615 = vmatprep.mubr.bf16.mxu0 %v418
  %616 = vmatmul.mubr.bf16.gmra.mrb[0].mxu0 %v417
  %v617 = vpop.f32.mrb[0].mxu0
  %v618 = vadd.f32 0.0, %v617
  %v619 = vpop.f32.mrb[0].mxu0
  %v620 = vpop.f32.mrb[0].mxu0
  %v621 = vadd.f32 0.0, %v620
  %v622 = vpop.f32.mrb[0].mxu0
  %623 = vmatprep.mubr.bf16.mxu0 %v420
  %624 = vmatmul.mubr.bf16.gmra.mrb[0].mxu0 %v419
  %v625 = vpop.f32.mrb[0].mxu0
  %v626 = vadd.f32 0.0, %v625
  %v627 = vpop.f32.mrb[0].mxu0
  %v628 = vpop.f32.mrb[0].mxu0
  %v629 = vadd.f32 0.0, %v628
  %v630 = vpop.f32.mrb[0].mxu0
  %631 = vmatprep.mubr.bf16.mxu0 %v422
  %632 = vmatmul.mubr.bf16.gmra.mrb[0].mxu0 %v421
  %v633 = vpop.f32.mrb[0].mxu0
  %v634 = vadd.f32 0.0, %v633
  %v635 = vpop.f32.mrb[0].mxu0
  %v636 = vpop.f32.mrb[0].mxu0
  %v637 = vadd.f32 0.0, %v636
  %v638 = vpop.f32.mrb[0].mxu0
  %639 = vmatprep.mubr.bf16.mxu0 %v424
  %640 = vmatmul.mubr.bf16.gmra.mrb[0].mxu0 %v423
  %v641 = vpop.f32.mrb[0].mxu0
  %v642 = vadd.f32 0.0, %v641
  %v643 = vpop.f32.mrb[0].mxu0
  %v644 = vpop.f32.mrb[0].mxu0
  %v645 = vadd.f32 0.0, %v644
  %v646 = vpop.f32.mrb[0].mxu0
  %647 = vmatprep.mubr.bf16.mxu0 %v426
  %648 = vmatmul.mubr.bf16.gmra.mrb[0].mxu0 %v425
  %v649 = vpop.f32.mrb[0].mxu0
  %v650 = vadd.f32 0.0, %v649
  %v651 = vpop.f32.mrb[0].mxu0
  %v652 = vpop.f32.mrb[0].mxu0
  %v653 = vadd.f32 0.0, %v652
  %v654 = vpop.f32.mrb[0].mxu0
  %655 = vmatprep.mubr.bf16.mxu0 %v428
  %656 = vmatmul.mubr.bf16.gmra.mrb[0].mxu0 %v427
  %v657 = vpop.f32.mrb[0].mxu0
  %v658 = vadd.f32 0.0, %v657
  %v659 = vpop.f32.mrb[0].mxu0
  %v660 = vpop.f32.mrb[0].mxu0
  %v661 = vadd.f32 0.0, %v660
  %v662 = vpop.f32.mrb[0].mxu0
  %663 = vmatprep.mubr.bf16.mxu0 %v430
  %664 = vmatmul.mubr.bf16.gmra.mrb[0].mxu0 %v429
  %v665 = vpop.f32.mrb[0].mxu0
  %v666 = vadd.f32 0.0, %v665
  %v667 = vpop.f32.mrb[0].mxu0
  %v668 = vpop.f32.mrb[0].mxu0
  %v669 = vadd.f32 0.0, %v668
  %v670 = vpop.f32.mrb[0].mxu0
  %671 = vmatprep.mubr.bf16.mxu0 %v432
  %672 = vmatmul.mubr.bf16.gmra.mrb[0].mxu0 %v431
  %v673 = vpop.f32.mrb[0].mxu0
  %v674 = vadd.f32 0.0, %v673
  %v675 = vpop.f32.mrb[0].mxu0
  %v676 = vpop.f32.mrb[0].mxu0
  %v677 = vadd.f32 0.0, %v676
  %v678 = vpop.f32.mrb[0].mxu0
  %679 = vmatprep.mubr.bf16.mxu0 %v434
  %680 = vmatmul.mubr.bf16.gmra.mrb[0].mxu0 %v433
  %v681 = vpop.f32.mrb[0].mxu0
  %v682 = vadd.f32 0.0, %v681
  %v683 = vpop.f32.mrb[0].mxu0
  %v684 = vpop.f32.mrb[0].mxu0
  %v685 = vadd.f32 0.0, %v684
  %v686 = vpop.f32.mrb[0].mxu0
  %687 = vmatprep.mubr.bf16.mxu0 %v436
  %688 = vmatmul.mubr.bf16.gmra.mrb[0].mxu0 %v435
  %v689 = vpop.f32.mrb[0].mxu0
  %v690 = vadd.f32 0.0, %v689
  %v691 = vpop.f32.mrb[0].mxu0
  %v692 = vpop.f32.mrb[0].mxu0
  %v693 = vadd.f32 0.0, %v692
  %v694 = vpop.f32.mrb[0].mxu0
  %695 = vmatprep.mubr.bf16.mxu0 %v438
  %696 = vmatmul.mubr.bf16.gmra.mrb[0].mxu0 %v437
  %v697 = vpop.f32.mrb[0].mxu0
  %v698 = vadd.f32 0.0, %v697
  %v699 = vpop.f32.mrb[0].mxu0
  %v700 = vpop.f32.mrb[0].mxu0
  %v701 = vadd.f32 0.0, %v700
  %v702 = vpop.f32.mrb[0].mxu0
  %703 = vmatprep.mubr.bf16.mxu0 %v440
  %704 = vmatmul.mubr.bf16.gmra.mrb[0].mxu0 %v439
  %v705 = vpop.f32.mrb[0].mxu0
  %v706 = vadd.f32 0.0, %v705
  %v707 = vpop.f32.mrb[0].mxu0
  %v708 = vpop.f32.mrb[0].mxu0
  %v709 = vadd.f32 0.0, %v708
  %v710 = vpop.f32.mrb[0].mxu0
  %711 = vmatprep.mubr.bf16.mxu0 %v442
  %712 = vmatmul.mubr.bf16.gmra.mrb[0].mxu0 %v441
  %v713 = vpop.f32.mrb[0].mxu0
  %v714 = vadd.f32 0.0, %v713
  %v715 = vpop.f32.mrb[0].mxu0
  %v716 = vpop.f32.mrb[0].mxu0
  %v717 = vadd.f32 0.0, %v716
  %v718 = vpop.f32.mrb[0].mxu0
  %719 = vmatprep.mubr.bf16.mxu0 %v444
  %720 = vmatmul.mubr.bf16.gmra.mrb[0].mxu0 %v443
  %v721 = vpop.f32.mrb[0].mxu0
  %v722 = vadd.f32 0.0, %v721
  %v723 = vpop.f32.mrb[0].mxu0
  %v724 = vpop.f32.mrb[0].mxu0
  %v725 = vadd.f32 0.0, %v724
  %v726 = vpop.f32.mrb[0].mxu0
  %727 = vmatprep.mubr.bf16.mxu0 %v446
  %728 = vmatmul.mubr.bf16.gmra.mrb[0].mxu0 %v445
  %v729 = vpop.f32.mrb[0].mxu0
  %v730 = vadd.f32 0.0, %v729
  %v731 = vpop.f32.mrb[0].mxu0
  %v732 = vpop.f32.mrb[0].mxu0
  %v733 = vadd.f32 0.0, %v732
  %v734 = vpop.f32.mrb[0].mxu0
  %735 = vdwg.mxu0
  %736 = vst [vmem:[%s3] sm:$0xff] %v610
  %737 = vst [vmem:[%s3 + $0x8] sm:$0xff] %v613
  %738 = vst [vmem:[%s3 + $0x10] sm:$0xff] %v618
  %739 = vst [vmem:[%s3 + $0x18] sm:$0xff] %v621
  %740 = vst [vmem:[%s3 + $0x20] sm:$0xff] %v626
  %741 = vst [vmem:[%s3 + $0x28] sm:$0xff] %v629
  %742 = vst [vmem:[%s3 + $0x30] sm:$0xff] %v634
  %743 = vst [vmem:[%s3 + $0x38] sm:$0xff] %v637
  %744 = vst [vmem:[%s3 + $0x40] sm:$0xff] %v642
  %745 = vst [vmem:[%s3 + $0x48] sm:$0xff] %v645
  %746 = vst [vmem:[%s3 + $0x50] sm:$0xff] %v650
  %747 = vst [vmem:[%s3 + $0x58] sm:$0xff] %v653
  %748 = vst [vmem:[%s3 + $0x60] sm:$0xff] %v658
  %749 = vst [vmem:[%s3 + $0x68] sm:$0xff] %v661
  %750 = vst [vmem:[%s3 + $0x70] sm:$0xff] %v666
  %751 = vst [vmem:[%s3 + $0x78] sm:$0xff] %v669
  %752 = vst [vmem:[%s3 + $0x80] sm:$0xff] %v674
  %753 = vst [vmem:[%s3 + $0x88] sm:$0xff] %v677
  %754 = vst [vmem:[%s3 + $0x90] sm:$0xff] %v682
  %755 = vst [vmem:[%s3 + $0x98] sm:$0xff] %v685
  %756 = vst [vmem:[%s3 + $0xa0] sm:$0xff] %v690
  %757 = vst [vmem:[%s3 + $0xa8] sm:$0xff] %v693
  %758 = vst [vmem:[%s3 + $0xb0] sm:$0xff] %v698
  %759 = vst [vmem:[%s3 + $0xb8] sm:$0xff] %v701
  %760 = vst [vmem:[%s3 + $0xc0] sm:$0xff] %v706
  %761 = vst [vmem:[%s3 + $0xc8] sm:$0xff] %v709
  %762 = vst [vmem:[%s3 + $0xd0] sm:$0xff] %v714
  %763 = vst [vmem:[%s3 + $0xd8] sm:$0xff] %v717
  %764 = vst [vmem:[%s3 + $0xe0] sm:$0xff] %v722
  %765 = vst [vmem:[%s3 + $0xe8] sm:$0xff] %v725
  %766 = vst [vmem:[%s3 + $0xf0] sm:$0xff] %v730
  %767 = vst [vmem:[%s3 + $0xf8] sm:$0xff] %v733
  %v768 = vld [vmem:[%s2] sm:$0xff]
  %v769 = vld [vmem:[%s2 + $0x8] sm:$0xff]
  %v770 = vld [vmem:[%s2 + $0x10] sm:$0xff]
  %v771 = vld [vmem:[%s2 + $0x18] sm:$0xff]
  %v772 = vld [vmem:[%s2 + $0x20] sm:$0xff]
  %v773 = vld [vmem:[%s2 + $0x28] sm:$0xff]
  %v774 = vld [vmem:[%s2 + $0x30] sm:$0xff]
  %v775 = vld [vmem:[%s2 + $0x38] sm:$0xff]
  %v776 = vld [vmem:[%s2 + $0x40] sm:$0xff]
  %v777 = vld [vmem:[%s2 + $0x48] sm:$0xff]
  %v778 = vld [vmem:[%s2 + $0x50] sm:$0xff]
  %v779 = vld [vmem:[%s2 + $0x58] sm:$0xff]
  %v780 = vld [vmem:[%s2 + $0x60] sm:$0xff]
  %v781 = vld [vmem:[%s2 + $0x68] sm:$0xff]
  %v782 = vld [vmem:[%s2 + $0x70] sm:$0xff]
  %v783 = vld [vmem:[%s2 + $0x78] sm:$0xff]
  %v784 = vld [vmem:[%s2 + $0x80] sm:$0xff]
  %v785 = vld [vmem:[%s2 + $0x88] sm:$0xff]
  %v786 = vld [vmem:[%s2 + $0x90] sm:$0xff]
  %v787 = vld [vmem:[%s2 + $0x98] sm:$0xff]
  %v788 = vld [vmem:[%s2 + $0xa0] sm:$0xff]
  %v789 = vld [vmem:[%s2 + $0xa8] sm:$0xff]
  %v790 = vld [vmem:[%s2 + $0xb0] sm:$0xff]
  %v791 = vld [vmem:[%s2 + $0xb8] sm:$0xff]
  %v792 = vld [vmem:[%s2 + $0xc0] sm:$0xff]
  %v793 = vld [vmem:[%s2 + $0xc8] sm:$0xff]
  %v794 = vld [vmem:[%s2 + $0xd0] sm:$0xff]
  %v795 = vld [vmem:[%s2 + $0xd8] sm:$0xff]
  %v796 = vld [vmem:[%s2 + $0xe0] sm:$0xff]
  %v797 = vld [vmem:[%s2 + $0xe8] sm:$0xff]
  %v798 = vld [vmem:[%s2 + $0xf0] sm:$0xff]
  %v799 = vld [vmem:[%s2 + $0xf8] sm:$0xff]
  %v800 = vsub.f32 %v768, %v610
  %v801 = vsub.f32 %v769, %v613
  %v802 = vsub.f32 %v770, %v618
  %v803 = vsub.f32 %v771, %v621
  %v804 = vsub.f32 %v772, %v626
  %v805 = vsub.f32 %v773, %v629
  %v806 = vsub.f32 %v774, %v634
  %v807 = vsub.f32 %v775, %v637
  %v808 = vsub.f32 %v776, %v642
  %v809 = vsub.f32 %v777, %v645
  %v810 = vsub.f32 %v778, %v650
  %v811 = vsub.f32 %v779, %v653
  %v812 = vsub.f32 %v780, %v658
  %v813 = vsub.f32 %v781, %v661
  %v814 = vsub.f32 %v782, %v666
  %v815 = vsub.f32 %v783, %v669
  %v816 = vsub.f32 %v784, %v674
  %v817 = vsub.f32 %v785, %v677
  %v818 = vsub.f32 %v786, %v682
  %v819 = vsub.f32 %v787, %v685
  %v820 = vsub.f32 %v788, %v690
  %v821 = vsub.f32 %v789, %v693
  %v822 = vsub.f32 %v790, %v698
  %v823 = vsub.f32 %v791, %v701
  %v824 = vsub.f32 %v792, %v706
  %v825 = vsub.f32 %v793, %v709
  %v826 = vsub.f32 %v794, %v714
  %v827 = vsub.f32 %v795, %v717
  %v828 = vsub.f32 %v796, %v722
  %v829 = vsub.f32 %v797, %v725
  %v830 = vsub.f32 %v798, %v730
  %v831 = vsub.f32 %v799, %v733
  %v832 = vmul.f32 %v800, %v800
  %v833 = vmul.f32 %v801, %v801
  %v834 = vmul.f32 %v802, %v802
  %v835 = vmul.f32 %v803, %v803
  %v836 = vmul.f32 %v804, %v804
  %v837 = vmul.f32 %v805, %v805
  %v838 = vmul.f32 %v806, %v806
  %v839 = vmul.f32 %v807, %v807
  %v840 = vmul.f32 %v808, %v808
  %v841 = vmul.f32 %v809, %v809
  %v842 = vmul.f32 %v810, %v810
  %v843 = vmul.f32 %v811, %v811
  %v844 = vmul.f32 %v812, %v812
  %v845 = vmul.f32 %v813, %v813
  %v846 = vmul.f32 %v814, %v814
  %v847 = vmul.f32 %v815, %v815
  %v848 = vmul.f32 %v816, %v816
  %v849 = vmul.f32 %v817, %v817
  %v850 = vmul.f32 %v818, %v818
  %v851 = vmul.f32 %v819, %v819
  %v852 = vmul.f32 %v820, %v820
  %v853 = vmul.f32 %v821, %v821
  %v854 = vmul.f32 %v822, %v822
  %v855 = vmul.f32 %v823, %v823
  %v856 = vmul.f32 %v824, %v824
  %v857 = vmul.f32 %v825, %v825
  %v858 = vmul.f32 %v826, %v826
  %v859 = vmul.f32 %v827, %v827
  %v860 = vmul.f32 %v828, %v828
  %v861 = vmul.f32 %v829, %v829
  %v862 = vmul.f32 %v830, %v830
  %v863 = vmul.f32 %v831, %v831
  %v864 = vadd.f32 %v832, %v833
  %v865 = vadd.f32 %v864, %v834
  %v866 = vadd.f32 %v865, %v835
  %v867 = vadd.f32 %v866, %v836
  %v868 = vadd.f32 %v867, %v837
  %v869 = vadd.f32 %v868, %v838
  %v870 = vadd.f32 %v869, %v839
  %v871 = vadd.f32 %v870, %v840
  %v872 = vadd.f32 %v871, %v841
  %v873 = vadd.f32 %v872, %v842
  %v874 = vadd.f32 %v873, %v843
  %v875 = vadd.f32 %v874, %v844
  %v876 = vadd.f32 %v875, %v845
  %v877 = vadd.f32 %v876, %v846
  %v878 = vadd.f32 %v877, %v847
  %v879 = vadd.f32 %v878, %v848
  %v880 = vadd.f32 %v879, %v849
  %v881 = vadd.f32 %v880, %v850
  %v882 = vadd.f32 %v881, %v851
  %v883 = vadd.f32 %v882, %v852
  %v884 = vadd.f32 %v883, %v853
  %v885 = vadd.f32 %v884, %v854
  %v886 = vadd.f32 %v885, %v855
  %v887 = vadd.f32 %v886, %v856
  %v888 = vadd.f32 %v887, %v857
  %v889 = vadd.f32 %v888, %v858
  %v890 = vadd.f32 %v889, %v859
  %v891 = vadd.f32 %v890, %v860
  %v892 = vadd.f32 %v891, %v861
  %v893 = vadd.f32 %v892, %v862
  %v894 = vadd.f32 %v893, %v863
  %895 = vadd.xlane.f32.xlu0 %v894
  %v896 = vpop.xlane.xlu0 %895
  %v897 = vrot.slane %v896, 4
  %v898 = vadd.f32 %v896, %v897
  %v899 = vrot.slane %v898, 2
  %v900 = vadd.f32 %v898, %v899
  %v901 = vrot.slane %v900, 1
  %v902 = vadd.f32 %v900, %v901
  %s903 = vtos %v902
  %vm904 = vcmp.eq.s32.totalorder %v85, 0
  %vm905 = vcmp.eq.s32.totalorder %v85, 1
  %v906 = vstv %s903
  %v907 = vsel %vm905, %v906, 0.0
  %v908 = vstv %s414
  %v909 = vsel %vm904, %v908, %v907
  %910 = vst [vmem:[%s4] sm:$0x1] %v909
  // Predicated region
  $region14: #{individual_mlp_encoder.4} parent=0 // pred_check
    _
  $region15: #{individual_mlp_encoder.4} parent=0 // pred_check_branch
    %912 = sbr.rel (0) target = $region17
  $region16: #{individual_mlp_encoder.4} parent=0 // pred_region
    _
  $region17: #{individual_mlp_encoder.4} parent=0 // pred_fallthru
    _
  // Predicated region
  $region18: #{individual_mlp_encoder.4} parent=0 // pred_check
    _
  $region19: #{individual_mlp_encoder.4} parent=0 // pred_check_branch
    %914 = sbr.rel (0) target = $region21
  $region20: #{individual_mlp_encoder.4} parent=0 // pred_region
    _
  $region21: #{individual_mlp_encoder.4} parent=0 // pred_fallthru
    _
  // Predicated region
  $region22: #{individual_mlp_encoder.4} parent=0 // pred_check
    _
  $region23: #{individual_mlp_encoder.4} parent=0 // pred_check_branch
    %916 = sbr.rel (0) target = $region25
  $region24: #{individual_mlp_encoder.4} parent=0 // pred_region
    _
  $region25: #{individual_mlp_encoder.4} parent=0 // pred_fallthru
    _
  // Predicated region
  $region26: #{individual_mlp_encoder.4} parent=0 // pred_check
    _
  $region27: #{individual_mlp_encoder.4} parent=0 // pred_check_branch
    %918 = sbr.rel (0) target = $region29
  $region28: #{individual_mlp_encoder.4} parent=0 // pred_region
    _
  $region29: #{individual_mlp_encoder.4} parent=0 // pred_fallthru
    _

// kernel: individual_mlp_encoder.3
$region0: #{individual_mlp_encoder.3}
  #allocation0 [shape = 'u32[]', space=smem, size = 0x4, offset = 0x4, fixed_abs, tag = 'smem constant byte address 0x4 - core index']
  #allocation1 [shape = 'u32[144,128]{1,0:T(1,128)}', space=vmem, size = 0x12000, scoped, tag = 'internal scratch']
  %s0 = inlined_call_operand.vmem [shape: bf16[256,256], index: 0, kind: input, shape index: {}]
  %s1 = inlined_call_operand.vmem [shape: bf16[256,256], index: 1, kind: input, shape index: {}]
  %s2 = inlined_call_operand.vmem [shape: f32[1,256], index: 2, kind: input, shape index: {}]
  %s3 = inlined_call_operand.vmem [shape: f32[1,256], index: 3, kind: input, shape index: {}]
  %s4 = inlined_call_operand.vmem [shape: f32[1,256], index: 4, kind: input, shape index: {}]
  %s5 = inlined_call_operand.vmem [shape: bf16[256,128], index: 5, kind: input, shape index: {}]
  %s6 = inlined_call_operand.vmem [shape: f32[1,128], index: 6, kind: input, shape index: {}]
  %s7 = inlined_call_operand.vmem [shape: f32[1,128], index: 7, kind: input, shape index: {}]
  %s8 = inlined_call_operand.vmem [shape: f32[1,128], index: 8, kind: input, shape index: {}]
  %s9 = inlined_call_operand.vmem [shape: f32[256,128], index: 9, kind: output, shape index: {0}]
  %s10 = inlined_call_operand.vmem [shape: bf16[256,128], index: 10, kind: output, shape index: {1}]
  %11 = xla_tuple %s9, %s10
  %s12 = sld [smem:[#allocation0]]
  $region54: #{individual_mlp_encoder.3} parent=0
    _
  %s14 = ssub.s32 1, %s12
  %s15 = scalar_select 0, %s14, %s12
  // Predicated region
  $region2: #{individual_mlp_encoder.3} parent=0 // pred_check
    _
  $region3: #{individual_mlp_encoder.3} parent=0 // pred_check_branch
    %17 = sbr.rel (0) target = $region5
  $region4: #{individual_mlp_encoder.3} parent=0 // pred_region
    _
  $region5: #{individual_mlp_encoder.3} parent=0 // pred_fallthru
    _
  // Predicated region
  $region6: #{individual_mlp_encoder.3} parent=0 // pred_check
    _
  $region7: #{individual_mlp_encoder.3} parent=0 // pred_check_branch
    %19 = sbr.rel (0) target = $region9
  $region8: #{individual_mlp_encoder.3} parent=0 // pred_region
    _
  $region9: #{individual_mlp_encoder.3} parent=0 // pred_fallthru
    _
  // Predicated region
  $region10: #{individual_mlp_encoder.3} parent=0 // pred_check
    _
  $region11: #{individual_mlp_encoder.3} parent=0 // pred_check_branch
    %21 = sbr.rel (0) target = $region13
  $region12: #{individual_mlp_encoder.3} parent=0 // pred_region
    _
  $region13: #{individual_mlp_encoder.3} parent=0 // pred_fallthru
    _
  // Predicated region
  $region14: #{individual_mlp_encoder.3} parent=0 // pred_check
    _
  $region15: #{individual_mlp_encoder.3} parent=0 // pred_check_branch
    %23 = sbr.rel (0) target = $region17
  $region16: #{individual_mlp_encoder.3} parent=0 // pred_region
    _
  $region17: #{individual_mlp_encoder.3} parent=0 // pred_fallthru
    _
  // Predicated region
  $region18: #{individual_mlp_encoder.3} parent=0 // pred_check
    _
  $region19: #{individual_mlp_encoder.3} parent=0 // pred_check_branch
    %25 = sbr.rel (0) target = $region21
  $region20: #{individual_mlp_encoder.3} parent=0 // pred_region
    _
  $region21: #{individual_mlp_encoder.3} parent=0 // pred_fallthru
    _
  // Predicated region
  $region22: #{individual_mlp_encoder.3} parent=0 // pred_check
    _
  $region23: #{individual_mlp_encoder.3} parent=0 // pred_check_branch
    %27 = sbr.rel (0) target = $region25
  $region24: #{individual_mlp_encoder.3} parent=0 // pred_region
    _
  $region25: #{individual_mlp_encoder.3} parent=0 // pred_fallthru
    _
  // Predicated region
  $region26: #{individual_mlp_encoder.3} parent=0 // pred_check
    _
  $region27: #{individual_mlp_encoder.3} parent=0 // pred_check_branch
    %29 = sbr.rel (0) target = $region29
  $region28: #{individual_mlp_encoder.3} parent=0 // pred_region
    _
  $region29: #{individual_mlp_encoder.3} parent=0 // pred_fallthru
    _
  // Predicated region
  $region30: #{individual_mlp_encoder.3} parent=0 // pred_check
    _
  $region31: #{individual_mlp_encoder.3} parent=0 // pred_check_branch
    %31 = sbr.rel (0) target = $region33
  $region32: #{individual_mlp_encoder.3} parent=0 // pred_region
    _
  $region33: #{individual_mlp_encoder.3} parent=0 // pred_fallthru
    _
  // Predicated region
  $region34: #{individual_mlp_encoder.3} parent=0 // pred_check
    _
  $region35: #{individual_mlp_encoder.3} parent=0 // pred_check_branch
    %33 = sbr.rel (0) target = $region37
  $region36: #{individual_mlp_encoder.3} parent=0 // pred_region
    _
  $region37: #{individual_mlp_encoder.3} parent=0 // pred_fallthru
    _
  %v35 = vld [vmem:[%s0] sm:$0xff]
  %v36 = vld [vmem:[%s0 + $0x8] sm:$0xff]
  %v37 = vld [vmem:[%s0 + $0x10] sm:$0xff]
  %v38 = vld [vmem:[%s0 + $0x18] sm:$0xff]
  %v39 = vld [vmem:[%s0 + $0x20] sm:$0xff]
  %v40 = vld [vmem:[%s0 + $0x28] sm:$0xff]
  %v41 = vld [vmem:[%s0 + $0x30] sm:$0xff]
  %v42 = vld [vmem:[%s0 + $0x38] sm:$0xff]
  %v43 = vld [vmem:[%s0 + $0x40] sm:$0xff]
  %v44 = vld [vmem:[%s0 + $0x48] sm:$0xff]
  %v45 = vld [vmem:[%s0 + $0x50] sm:$0xff]
  %v46 = vld [vmem:[%s0 + $0x58] sm:$0xff]
  %v47 = vld [vmem:[%s0 + $0x60] sm:$0xff]
  %v48 = vld [vmem:[%s0 + $0x68] sm:$0xff]
  %v49 = vld [vmem:[%s0 + $0x70] sm:$0xff]
  %v50 = vld [vmem:[%s0 + $0x78] sm:$0xff]
  %v51 = vld [vmem:[%s0 + $0x80] sm:$0xff]
  %v52 = vld [vmem:[%s0 + $0x88] sm:$0xff]
  %v53 = vld [vmem:[%s0 + $0x90] sm:$0xff]
  %v54 = vld [vmem:[%s0 + $0x98] sm:$0xff]
  %v55 = vld [vmem:[%s0 + $0xa0] sm:$0xff]
  %v56 = vld [vmem:[%s0 + $0xa8] sm:$0xff]
  %v57 = vld [vmem:[%s0 + $0xb0] sm:$0xff]
  %v58 = vld [vmem:[%s0 + $0xb8] sm:$0xff]
  %v59 = vld [vmem:[%s0 + $0xc0] sm:$0xff]
  %v60 = vld [vmem:[%s0 + $0xc8] sm:$0xff]
  %v61 = vld [vmem:[%s0 + $0xd0] sm:$0xff]
  %v62 = vld [vmem:[%s0 + $0xd8] sm:$0xff]
  %v63 = vld [vmem:[%s0 + $0xe0] sm:$0xff]
  %v64 = vld [vmem:[%s0 + $0xe8] sm:$0xff]
  %v65 = vld [vmem:[%s0 + $0xf0] sm:$0xff]
  %v66 = vld [vmem:[%s0 + $0xf8] sm:$0xff]
  %v67 = vld [vmem:[%s1] sm:$0xff]
  %v68 = vld [vmem:[%s1 + $0x8] sm:$0xff]
  %v69 = vld [vmem:[%s1 + $0x10] sm:$0xff]
  %v70 = vld [vmem:[%s1 + $0x18] sm:$0xff]
  %v71 = vld [vmem:[%s1 + $0x20] sm:$0xff]
  %v72 = vld [vmem:[%s1 + $0x28] sm:$0xff]
  %v73 = vld [vmem:[%s1 + $0x30] sm:$0xff]
  %v74 = vld [vmem:[%s1 + $0x38] sm:$0xff]
  %v75 = vld [vmem:[%s1 + $0x40] sm:$0xff]
  %v76 = vld [vmem:[%s1 + $0x48] sm:$0xff]
  %v77 = vld [vmem:[%s1 + $0x50] sm:$0xff]
  %v78 = vld [vmem:[%s1 + $0x58] sm:$0xff]
  %v79 = vld [vmem:[%s1 + $0x60] sm:$0xff]
  %v80 = vld [vmem:[%s1 + $0x68] sm:$0xff]
  %v81 = vld [vmem:[%s1 + $0x70] sm:$0xff]
  %v82 = vld [vmem:[%s1 + $0x78] sm:$0xff]
  %v83 = vld [vmem:[%s1 + $0x80] sm:$0xff]
  %v84 = vld [vmem:[%s1 + $0x88] sm:$0xff]
  %v85 = vld [vmem:[%s1 + $0x90] sm:$0xff]
  %v86 = vld [vmem:[%s1 + $0x98] sm:$0xff]
  %v87 = vld [vmem:[%s1 + $0xa0] sm:$0xff]
  %v88 = vld [vmem:[%s1 + $0xa8] sm:$0xff]
  %v89 = vld [vmem:[%s1 + $0xb0] sm:$0xff]
  %v90 = vld [vmem:[%s1 + $0xb8] sm:$0xff]
  %v91 = vld [vmem:[%s1 + $0xc0] sm:$0xff]
  %v92 = vld [vmem:[%s1 + $0xc8] sm:$0xff]
  %v93 = vld [vmem:[%s1 + $0xd0] sm:$0xff]
  %v94 = vld [vmem:[%s1 + $0xd8] sm:$0xff]
  %v95 = vld [vmem:[%s1 + $0xe0] sm:$0xff]
  %v96 = vld [vmem:[%s1 + $0xe8] sm:$0xff]
  %v97 = vld [vmem:[%s1 + $0xf0] sm:$0xff]
  %v98 = vld [vmem:[%s1 + $0xf8] sm:$0xff]
  %v99 = vld [vmem:[%s2] sm:$0x3]
  %v100 = vld [vmem:[%s3] sm:$0x3]
  %v101 = vld [vmem:[%s4] sm:$0x3]
  %v103 = vlaneseq
  %v104 = vshrl.u32 %v103, 7
  %v105 = vsub.s32 0, %v104
  %v106 = vrot.slane %v99, %v105
  %v107 = vlaneseq
  %v108 = vshrl.u32 %v107, 7
  %v109 = vsub.s32 1, %v108
  %v110 = vrot.slane %v99, %v109
  %v145 = vunpack.c.l.b16 %v35
  %v146 = vunpack.c.h.b16 %v35
  %v147 = vunpack.c.l.b16 %v36
  %v148 = vunpack.c.h.b16 %v36
  %v149 = vunpack.c.l.b16 %v37
  %v150 = vunpack.c.h.b16 %v37
  %v151 = vunpack.c.l.b16 %v38
  %v152 = vunpack.c.h.b16 %v38
  %v153 = vunpack.c.l.b16 %v39
  %v154 = vunpack.c.h.b16 %v39
  %v155 = vunpack.c.l.b16 %v40
  %v156 = vunpack.c.h.b16 %v40
  %v157 = vunpack.c.l.b16 %v41
  %v158 = vunpack.c.h.b16 %v41
  %v159 = vunpack.c.l.b16 %v42
  %v160 = vunpack.c.h.b16 %v42
  %v161 = vunpack.c.l.b16 %v43
  %v162 = vunpack.c.h.b16 %v43
  %v163 = vunpack.c.l.b16 %v44
  %v164 = vunpack.c.h.b16 %v44
  %v165 = vunpack.c.l.b16 %v45
  %v166 = vunpack.c.h.b16 %v45
  %v167 = vunpack.c.l.b16 %v46
  %v168 = vunpack.c.h.b16 %v46
  %v169 = vunpack.c.l.b16 %v47
  %v170 = vunpack.c.h.b16 %v47
  %v171 = vunpack.c.l.b16 %v48
  %v172 = vunpack.c.h.b16 %v48
  %v173 = vunpack.c.l.b16 %v49
  %v174 = vunpack.c.h.b16 %v49
  %v175 = vunpack.c.l.b16 %v50
  %v176 = vunpack.c.h.b16 %v50
  %v177 = vunpack.c.l.b16 %v51
  %v178 = vunpack.c.h.b16 %v51
  %v179 = vunpack.c.l.b16 %v52
  %v180 = vunpack.c.h.b16 %v52
  %v181 = vunpack.c.l.b16 %v53
  %v182 = vunpack.c.h.b16 %v53
  %v183 = vunpack.c.l.b16 %v54
  %v184 = vunpack.c.h.b16 %v54
  %v185 = vunpack.c.l.b16 %v55
  %v186 = vunpack.c.h.b16 %v55
  %v187 = vunpack.c.l.b16 %v56
  %v188 = vunpack.c.h.b16 %v56
  %v189 = vunpack.c.l.b16 %v57
  %v190 = vunpack.c.h.b16 %v57
  %v191 = vunpack.c.l.b16 %v58
  %v192 = vunpack.c.h.b16 %v58
  %v193 = vunpack.c.l.b16 %v59
  %v194 = vunpack.c.h.b16 %v59
  %v195 = vunpack.c.l.b16 %v60
  %v196 = vunpack.c.h.b16 %v60
  %v197 = vunpack.c.l.b16 %v61
  %v198 = vunpack.c.h.b16 %v61
  %v199 = vunpack.c.l.b16 %v62
  %v200 = vunpack.c.h.b16 %v62
  %v201 = vunpack.c.l.b16 %v63
  %v202 = vunpack.c.h.b16 %v63
  %v203 = vunpack.c.l.b16 %v64
  %v204 = vunpack.c.h.b16 %v64
  %v205 = vunpack.c.l.b16 %v65
  %v206 = vunpack.c.h.b16 %v65
  %v207 = vunpack.c.l.b16 %v66
  %v208 = vunpack.c.h.b16 %v66
  %v209 = vpack.c.b16 %v147, %v145
  %v210 = vpack.c.b16 %v148, %v146
  %v211 = vpack.c.b16 %v151, %v149
  %v212 = vpack.c.b16 %v152, %v150
  %v213 = vpack.c.b16 %v155, %v153
  %v214 = vpack.c.b16 %v156, %v154
  %v215 = vpack.c.b16 %v159, %v157
  %v216 = vpack.c.b16 %v160, %v158
  %v217 = vpack.c.b16 %v163, %v161
  %v218 = vpack.c.b16 %v164, %v162
  %v219 = vpack.c.b16 %v167, %v165
  %v220 = vpack.c.b16 %v168, %v166
  %v221 = vpack.c.b16 %v171, %v169
  %v222 = vpack.c.b16 %v172, %v170
  %v223 = vpack.c.b16 %v175, %v173
  %v224 = vpack.c.b16 %v176, %v174
  %v225 = vpack.c.b16 %v179, %v177
  %v226 = vpack.c.b16 %v180, %v178
  %v227 = vpack.c.b16 %v183, %v181
  %v228 = vpack.c.b16 %v184, %v182
  %v229 = vpack.c.b16 %v187, %v185
  %v230 = vpack.c.b16 %v188, %v186
  %v231 = vpack.c.b16 %v191, %v189
  %v232 = vpack.c.b16 %v192, %v190
  %v233 = vpack.c.b16 %v195, %v193
  %v234 = vpack.c.b16 %v196, %v194
  %v235 = vpack.c.b16 %v199, %v197
  %v236 = vpack.c.b16 %v200, %v198
  %v237 = vpack.c.b16 %v203, %v201
  %v238 = vpack.c.b16 %v204, %v202
  %v239 = vpack.c.b16 %v207, %v205
  %v240 = vpack.c.b16 %v208, %v206
  %v305 = vunpack.c.l.b16 %v67
  %v306 = vunpack.c.h.b16 %v67
  %v307 = vunpack.c.l.b16 %v68
  %v308 = vunpack.c.h.b16 %v68
  %v309 = vunpack.c.l.b16 %v69
  %v310 = vunpack.c.h.b16 %v69
  %v311 = vunpack.c.l.b16 %v70
  %v312 = vunpack.c.h.b16 %v70
  %v313 = vunpack.c.l.b16 %v71
  %v314 = vunpack.c.h.b16 %v71
  %v315 = vunpack.c.l.b16 %v72
  %v316 = vunpack.c.h.b16 %v72
  %v317 = vunpack.c.l.b16 %v73
  %v318 = vunpack.c.h.b16 %v73
  %v319 = vunpack.c.l.b16 %v74
  %v320 = vunpack.c.h.b16 %v74
  %v321 = vunpack.c.l.b16 %v75
  %v322 = vunpack.c.h.b16 %v75
  %v323 = vunpack.c.l.b16 %v76
  %v324 = vunpack.c.h.b16 %v76
  %v325 = vunpack.c.l.b16 %v77
  %v326 = vunpack.c.h.b16 %v77
  %v327 = vunpack.c.l.b16 %v78
  %v328 = vunpack.c.h.b16 %v78
  %v329 = vunpack.c.l.b16 %v79
  %v330 = vunpack.c.h.b16 %v79
  %v331 = vunpack.c.l.b16 %v80
  %v332 = vunpack.c.h.b16 %v80
  %v333 = vunpack.c.l.b16 %v81
  %v334 = vunpack.c.h.b16 %v81
  %v335 = vunpack.c.l.b16 %v82
  %v336 = vunpack.c.h.b16 %v82
  %v337 = vunpack.c.l.b16 %v83
  %v338 = vunpack.c.h.b16 %v83
  %v339 = vunpack.c.l.b16 %v84
  %v340 = vunpack.c.h.b16 %v84
  %v341 = vunpack.c.l.b16 %v85
  %v342 = vunpack.c.h.b16 %v85
  %v343 = vunpack.c.l.b16 %v86
  %v344 = vunpack.c.h.b16 %v86
  %v345 = vunpack.c.l.b16 %v87
  %v346 = vunpack.c.h.b16 %v87
  %v347 = vunpack.c.l.b16 %v88
  %v348 = vunpack.c.h.b16 %v88
  %v349 = vunpack.c.l.b16 %v89
  %v350 = vunpack.c.h.b16 %v89
  %v351 = vunpack.c.l.b16 %v90
  %v352 = vunpack.c.h.b16 %v90
  %v353 = vunpack.c.l.b16 %v91
  %v354 = vunpack.c.h.b16 %v91
  %v355 = vunpack.c.l.b16 %v92
  %v356 = vunpack.c.h.b16 %v92
  %v357 = vunpack.c.l.b16 %v93
  %v358 = vunpack.c.h.b16 %v93
  %v359 = vunpack.c.l.b16 %v94
  %v360 = vunpack.c.h.b16 %v94
  %v361 = vunpack.c.l.b16 %v95
  %v362 = vunpack.c.h.b16 %v95
  %v363 = vunpack.c.l.b16 %v96
  %v364 = vunpack.c.h.b16 %v96
  %v365 = vunpack.c.l.b16 %v97
  %v366 = vunpack.c.h.b16 %v97
  %v367 = vunpack.c.l.b16 %v98
  %v368 = vunpack.c.h.b16 %v98
  %v369 = vpack.c.b16 %v307, %v305
  %v370 = vpack.c.b16 %v308, %v306
  %v371 = vpack.c.b16 %v311, %v309
  %v372 = vpack.c.b16 %v312, %v310
  %v373 = vpack.c.b16 %v315, %v313
  %v374 = vpack.c.b16 %v316, %v314
  %v375 = vpack.c.b16 %v319, %v317
  %v376 = vpack.c.b16 %v320, %v318
  %v377 = vpack.c.b16 %v323, %v321
  %v378 = vpack.c.b16 %v324, %v322
  %v379 = vpack.c.b16 %v327, %v325
  %v380 = vpack.c.b16 %v328, %v326
  %v381 = vpack.c.b16 %v331, %v329
  %v382 = vpack.c.b16 %v332, %v330
  %v383 = vpack.c.b16 %v335, %v333
  %v384 = vpack.c.b16 %v336, %v334
  %v385 = vpack.c.b16 %v339, %v337
  %v386 = vpack.c.b16 %v340, %v338
  %v387 = vpack.c.b16 %v343, %v341
  %v388 = vpack.c.b16 %v344, %v342
  %v389 = vpack.c.b16 %v347, %v345
  %v390 = vpack.c.b16 %v348, %v346
  %v391 = vpack.c.b16 %v351, %v349
  %v392 = vpack.c.b16 %v352, %v350
  %v393 = vpack.c.b16 %v355, %v353
  %v394 = vpack.c.b16 %v356, %v354
  %v395 = vpack.c.b16 %v359, %v357
  %v396 = vpack.c.b16 %v360, %v358
  %v397 = vpack.c.b16 %v363, %v361
  %v398 = vpack.c.b16 %v364, %v362
  %v399 = vpack.c.b16 %v367, %v365
  %v400 = vpack.c.b16 %v368, %v366
  %433 = vmatprep.subr.bf16.mxu0 %v370
  %434 = vmatpush1.bf16.msra.mxu0 %v369
  %435 = vmatprep.subr.bf16.mxu0 %v372
  %436 = vmatpush1.bf16.msra.mxu0 %v371
  %437 = vmatprep.subr.bf16.mxu0 %v374
  %438 = vmatpush1.bf16.msra.mxu0 %v373
  %439 = vmatprep.subr.bf16.mxu0 %v376
  %440 = vmatpush1.bf16.msra.mxu0 %v375
  %441 = vmatprep.subr.bf16.mxu0 %v378
  %442 = vmatpush1.bf16.msra.mxu0 %v377
  %443 = vmatprep.subr.bf16.mxu0 %v380
  %444 = vmatpush1.bf16.msra.mxu0 %v379
  %445 = vmatprep.subr.bf16.mxu0 %v382
  %446 = vmatpush1.bf16.msra.mxu0 %v381
  %447 = vmatprep.subr.bf16.mxu0 %v384
  %448 = vmatpush1.bf16.msra.mxu0 %v383
  %449 = vmatprep.subr.bf16.mxu0 %v386
  %450 = vmatpush1.bf16.msra.mxu0 %v385
  %451 = vmatprep.subr.bf16.mxu0 %v388
  %452 = vmatpush1.bf16.msra.mxu0 %v387
  %453 = vmatprep.subr.bf16.mxu0 %v390
  %454 = vmatpush1.bf16.msra.mxu0 %v389
  %455 = vmatprep.subr.bf16.mxu0 %v392
  %456 = vmatpush1.bf16.msra.mxu0 %v391
  %457 = vmatprep.subr.bf16.mxu0 %v394
  %458 = vmatpush1.bf16.msra.mxu0 %v393
  %459 = vmatprep.subr.bf16.mxu0 %v396
  %460 = vmatpush1.bf16.msra.mxu0 %v395
  %461 = vmatprep.subr.bf16.mxu0 %v398
  %462 = vmatpush1.bf16.msra.mxu0 %v397
  %463 = vmatprep.subr.bf16.mxu0 %v400
  %464 = vmatpush1.bf16.msra.mxu0 %v399
  %465 = vmatprep.mubr.bf16.mxu0 %v210
  %466 = vmatmul.mubr.bf16.gmra.mrb[0].mxu0 %v209
  %v467 = vpop.f32.mrb[0].mxu0
  %v468 = vadd.f32 %v106, %v467
  %v469 = vpop.f32.mrb[0].mxu0
  %v470 = vadd.f32 %v110, %v469
  %v471 = vpop.f32.mrb[0].mxu0
  %v472 = vadd.f32 %v106, %v471
  %v473 = vpop.f32.mrb[0].mxu0
  %v474 = vadd.f32 %v110, %v473
  %475 = vmatprep.mubr.bf16.mxu0 %v212
  %476 = vmatmul.mubr.bf16.gmra.mrb[0].mxu0 %v211
  %v477 = vpop.f32.mrb[0].mxu0
  %v478 = vadd.f32 %v106, %v477
  %v479 = vpop.f32.mrb[0].mxu0
  %v480 = vadd.f32 %v110, %v479
  %v481 = vpop.f32.mrb[0].mxu0
  %v482 = vadd.f32 %v106, %v481
  %v483 = vpop.f32.mrb[0].mxu0
  %v484 = vadd.f32 %v110, %v483
  %485 = vmatprep.mubr.bf16.mxu0 %v214
  %486 = vmatmul.mubr.bf16.gmra.mrb[0].mxu0 %v213
  %v487 = vpop.f32.mrb[0].mxu0
  %v488 = vadd.f32 %v106, %v487
  %v489 = vpop.f32.mrb[0].mxu0
  %v490 = vadd.f32 %v110, %v489
  %v491 = vpop.f32.mrb[0].mxu0
  %v492 = vadd.f32 %v106, %v491
  %v493 = vpop.f32.mrb[0].mxu0
  %v494 = vadd.f32 %v110, %v493
  %495 = vmatprep.mubr.bf16.mxu0 %v216
  %496 = vmatmul.mubr.bf16.gmra.mrb[0].mxu0 %v215
  %v497 = vpop.f32.mrb[0].mxu0
  %v498 = vadd.f32 %v106, %v497
  %v499 = vpop.f32.mrb[0].mxu0
  %v500 = vadd.f32 %v110, %v499
  %v501 = vpop.f32.mrb[0].mxu0
  %v502 = vadd.f32 %v106, %v501
  %v503 = vpop.f32.mrb[0].mxu0
  %v504 = vadd.f32 %v110, %v503
  %505 = vmatprep.mubr.bf16.mxu0 %v218
  %506 = vmatmul.mubr.bf16.gmra.mrb[0].mxu0 %v217
  %v507 = vpop.f32.mrb[0].mxu0
  %v508 = vadd.f32 %v106, %v507
  %v509 = vpop.f32.mrb[0].mxu0
  %v510 = vadd.f32 %v110, %v509
  %v511 = vpop.f32.mrb[0].mxu0
  %v512 = vadd.f32 %v106, %v511
  %v513 = vpop.f32.mrb[0].mxu0
  %v514 = vadd.f32 %v110, %v513
  %515 = vmatprep.mubr.bf16.mxu0 %v220
  %516 = vmatmul.mubr.bf16.gmra.mrb[0].mxu0 %v219
  %v517 = vpop.f32.mrb[0].mxu0
  %v518 = vadd.f32 %v106, %v517
  %v519 = vpop.f32.mrb[0].mxu0
  %v520 = vadd.f32 %v110, %v519
  %v521 = vpop.f32.mrb[0].mxu0
  %v522 = vadd.f32 %v106, %v521
  %v523 = vpop.f32.mrb[0].mxu0
  %v524 = vadd.f32 %v110, %v523
  %525 = vmatprep.mubr.bf16.mxu0 %v222
  %526 = vmatmul.mubr.bf16.gmra.mrb[0].mxu0 %v221
  %v527 = vpop.f32.mrb[0].mxu0
  %v528 = vadd.f32 %v106, %v527
  %v529 = vpop.f32.mrb[0].mxu0
  %v530 = vadd.f32 %v110, %v529
  %v531 = vpop.f32.mrb[0].mxu0
  %v532 = vadd.f32 %v106, %v531
  %v533 = vpop.f32.mrb[0].mxu0
  %v534 = vadd.f32 %v110, %v533
  %535 = vmatprep.mubr.bf16.mxu0 %v224
  %536 = vmatmul.mubr.bf16.gmra.mrb[0].mxu0 %v223
  %v537 = vpop.f32.mrb[0].mxu0
  %v538 = vadd.f32 %v106, %v537
  %v539 = vpop.f32.mrb[0].mxu0
  %v540 = vadd.f32 %v110, %v539
  %v541 = vpop.f32.mrb[0].mxu0
  %v542 = vadd.f32 %v106, %v541
  %v543 = vpop.f32.mrb[0].mxu0
  %v544 = vadd.f32 %v110, %v543
  %545 = vmatprep.mubr.bf16.mxu0 %v226
  %546 = vmatmul.mubr.bf16.gmra.mrb[0].mxu0 %v225
  %v547 = vpop.f32.mrb[0].mxu0
  %v548 = vadd.f32 %v106, %v547
  %v549 = vpop.f32.mrb[0].mxu0
  %v550 = vadd.f32 %v110, %v549
  %v551 = vpop.f32.mrb[0].mxu0
  %v552 = vadd.f32 %v106, %v551
  %v553 = vpop.f32.mrb[0].mxu0
  %v554 = vadd.f32 %v110, %v553
  %555 = vmatprep.mubr.bf16.mxu0 %v228
  %556 = vmatmul.mubr.bf16.gmra.mrb[0].mxu0 %v227
  %v557 = vpop.f32.mrb[0].mxu0
  %v558 = vadd.f32 %v106, %v557
  %v559 = vpop.f32.mrb[0].mxu0
  %v560 = vadd.f32 %v110, %v559
  %v561 = vpop.f32.mrb[0].mxu0
  %v562 = vadd.f32 %v106, %v561
  %v563 = vpop.f32.mrb[0].mxu0
  %v564 = vadd.f32 %v110, %v563
  %565 = vmatprep.mubr.bf16.mxu0 %v230
  %566 = vmatmul.mubr.bf16.gmra.mrb[0].mxu0 %v229
  %v567 = vpop.f32.mrb[0].mxu0
  %v568 = vadd.f32 %v106, %v567
  %v569 = vpop.f32.mrb[0].mxu0
  %v570 = vadd.f32 %v110, %v569
  %v571 = vpop.f32.mrb[0].mxu0
  %v572 = vadd.f32 %v106, %v571
  %v573 = vpop.f32.mrb[0].mxu0
  %v574 = vadd.f32 %v110, %v573
  %575 = vmatprep.mubr.bf16.mxu0 %v232
  %576 = vmatmul.mubr.bf16.gmra.mrb[0].mxu0 %v231
  %v577 = vpop.f32.mrb[0].mxu0
  %v578 = vadd.f32 %v106, %v577
  %v579 = vpop.f32.mrb[0].mxu0
  %v580 = vadd.f32 %v110, %v579
  %v581 = vpop.f32.mrb[0].mxu0
  %v582 = vadd.f32 %v106, %v581
  %v583 = vpop.f32.mrb[0].mxu0
  %v584 = vadd.f32 %v110, %v583
  %585 = vmatprep.mubr.bf16.mxu0 %v234
  %586 = vmatmul.mubr.bf16.gmra.mrb[0].mxu0 %v233
  %v587 = vpop.f32.mrb[0].mxu0
  %v588 = vadd.f32 %v106, %v587
  %v589 = vpop.f32.mrb[0].mxu0
  %v590 = vadd.f32 %v110, %v589
  %v591 = vpop.f32.mrb[0].mxu0
  %v592 = vadd.f32 %v106, %v591
  %v593 = vpop.f32.mrb[0].mxu0
  %v594 = vadd.f32 %v110, %v593
  %595 = vmatprep.mubr.bf16.mxu0 %v236
  %596 = vmatmul.mubr.bf16.gmra.mrb[0].mxu0 %v235
  %v597 = vpop.f32.mrb[0].mxu0
  %v598 = vadd.f32 %v106, %v597
  %v599 = vpop.f32.mrb[0].mxu0
  %v600 = vadd.f32 %v110, %v599
  %v601 = vpop.f32.mrb[0].mxu0
  %v602 = vadd.f32 %v106, %v601
  %v603 = vpop.f32.mrb[0].mxu0
  %v604 = vadd.f32 %v110, %v603
  %605 = vmatprep.mubr.bf16.mxu0 %v238
  %606 = vmatmul.mubr.bf16.gmra.mrb[0].mxu0 %v237
  %v607 = vpop.f32.mrb[0].mxu0
  %v608 = vadd.f32 %v106, %v607
  %v609 = vpop.f32.mrb[0].mxu0
  %v610 = vadd.f32 %v110, %v609
  %v611 = vpop.f32.mrb[0].mxu0
  %v612 = vadd.f32 %v106, %v611
  %v613 = vpop.f32.mrb[0].mxu0
  %v614 = vadd.f32 %v110, %v613
  %615 = vmatprep.mubr.bf16.mxu0 %v240
  %616 = vmatmul.mubr.bf16.gmra.mrb[0].mxu0 %v239
  %v617 = vpop.f32.mrb[0].mxu0
  %v618 = vadd.f32 %v106, %v617
  %v619 = vpop.f32.mrb[0].mxu0
  %v620 = vadd.f32 %v110, %v619
  %v621 = vpop.f32.mrb[0].mxu0
  %v622 = vadd.f32 %v106, %v621
  %v623 = vpop.f32.mrb[0].mxu0
  %v624 = vadd.f32 %v110, %v623
  %625 = vdwg.mxu0
  %v626 = vadd.f32 %v468, %v472
  %v627 = vadd.f32 %v626, %v478
  %v628 = vadd.f32 %v627, %v482
  %v629 = vadd.f32 %v628, %v488
  %v630 = vadd.f32 %v629, %v492
  %v631 = vadd.f32 %v630, %v498
  %v632 = vadd.f32 %v631, %v502
  %v633 = vadd.f32 %v632, %v508
  %v634 = vadd.f32 %v633, %v512
  %v635 = vadd.f32 %v634, %v518
  %v636 = vadd.f32 %v635, %v522
  %v637 = vadd.f32 %v636, %v528
  %v638 = vadd.f32 %v637, %v532
  %v639 = vadd.f32 %v638, %v538
  %v640 = vadd.f32 %v639, %v542
  %v641 = vadd.f32 %v640, %v548
  %v642 = vadd.f32 %v641, %v552
  %v643 = vadd.f32 %v642, %v558
  %v644 = vadd.f32 %v643, %v562
  %v645 = vadd.f32 %v644, %v568
  %v646 = vadd.f32 %v645, %v572
  %v647 = vadd.f32 %v646, %v578
  %v648 = vadd.f32 %v647, %v582
  %v649 = vadd.f32 %v648, %v588
  %v650 = vadd.f32 %v649, %v592
  %v651 = vadd.f32 %v650, %v598
  %v652 = vadd.f32 %v651, %v602
  %v653 = vadd.f32 %v652, %v608
  %v654 = vadd.f32 %v653, %v612
  %v655 = vadd.f32 %v654, %v618
  %v656 = vadd.f32 %v655, %v622
  %v657 = vrot.slane %v656, 4
  %v658 = vadd.f32 %v656, %v657
  %v659 = vrot.slane %v658, 2
  %v660 = vadd.f32 %v658, %v659
  %v661 = vrot.slane %v660, 1
  %v662 = vadd.f32 %v660, %v661
  %v663 = vadd.f32 %v470, %v474
  %v664 = vadd.f32 %v663, %v480
  %v665 = vadd.f32 %v664, %v484
  %v666 = vadd.f32 %v665, %v490
  %v667 = vadd.f32 %v666, %v494
  %v668 = vadd.f32 %v667, %v500
  %v669 = vadd.f32 %v668, %v504
  %v670 = vadd.f32 %v669, %v510
  %v671 = vadd.f32 %v670, %v514
  %v672 = vadd.f32 %v671, %v520
  %v673 = vadd.f32 %v672, %v524
  %v674 = vadd.f32 %v673, %v530
  %v675 = vadd.f32 %v674, %v534
  %v676 = vadd.f32 %v675, %v540
  %v677 = vadd.f32 %v676, %v544
  %v678 = vadd.f32 %v677, %v550
  %v679 = vadd.f32 %v678, %v554
  %v680 = vadd.f32 %v679, %v560
  %v681 = vadd.f32 %v680, %v564
  %v682 = vadd.f32 %v681, %v570
  %v683 = vadd.f32 %v682, %v574
  %v684 = vadd.f32 %v683, %v580
  %v685 = vadd.f32 %v684, %v584
  %v686 = vadd.f32 %v685, %v590
  %v687 = vadd.f32 %v686, %v594
  %v688 = vadd.f32 %v687, %v600
  %v689 = vadd.f32 %v688, %v604
  %v690 = vadd.f32 %v689, %v610
  %v691 = vadd.f32 %v690, %v614
  %v692 = vadd.f32 %v691, %v620
  %v693 = vadd.f32 %v692, %v624
  %v694 = vrot.slane %v693, 4
  %v695 = vadd.f32 %v693, %v694
  %v696 = vrot.slane %v695, 2
  %v697 = vadd.f32 %v695, %v696
  %v698 = vrot.slane %v697, 1
  %v699 = vadd.f32 %v697, %v698
  %v700 = vrcp.pop 256.0
  %v701 = vmul.f32 %v662, %v700
  %v702 = vmul.f32 %v699, %v700
  %v703 = vsub.f32 %v468, %v701
  %v704 = vsub.f32 %v470, %v702
  %v705 = vsub.f32 %v472, %v701
  %v706 = vsub.f32 %v474, %v702
  %v707 = vsub.f32 %v478, %v701
  %v708 = vsub.f32 %v480, %v702
  %v709 = vsub.f32 %v482, %v701
  %v710 = vsub.f32 %v484, %v702
  %v711 = vsub.f32 %v488, %v701
  %v712 = vsub.f32 %v490, %v702
  %v713 = vsub.f32 %v492, %v701
  %v714 = vsub.f32 %v494, %v702
  %v715 = vsub.f32 %v498, %v701
  %v716 = vsub.f32 %v500, %v702
  %v717 = vsub.f32 %v502, %v701
  %v718 = vsub.f32 %v504, %v702
  %v719 = vsub.f32 %v508, %v701
  %v720 = vsub.f32 %v510, %v702
  %v721 = vsub.f32 %v512, %v701
  %v722 = vsub.f32 %v514, %v702
  %v723 = vsub.f32 %v518, %v701
  %v724 = vsub.f32 %v520, %v702
  %v725 = vsub.f32 %v522, %v701
  %v726 = vsub.f32 %v524, %v702
  %v727 = vsub.f32 %v528, %v701
  %v728 = vsub.f32 %v530, %v702
  %v729 = vsub.f32 %v532, %v701
  %v730 = vsub.f32 %v534, %v702
  %v731 = vsub.f32 %v538, %v701
  %v732 = vsub.f32 %v540, %v702
  %v733 = vsub.f32 %v542, %v701
  %v734 = vsub.f32 %v544, %v702
  %v735 = vsub.f32 %v548, %v701
  %v736 = vsub.f32 %v550, %v702
  %v737 = vsub.f32 %v552, %v701
  %v738 = vsub.f32 %v554, %v702
  %v739 = vsub.f32 %v558, %v701
  %v740 = vsub.f32 %v560, %v702
  %v741 = vsub.f32 %v562, %v701
  %v742 = vsub.f32 %v564, %v702
  %v743 = vsub.f32 %v568, %v701
  %v744 = vsub.f32 %v570, %v702
  %v745 = vsub.f32 %v572, %v701
  %v746 = vsub.f32 %v574, %v702
  %v747 = vsub.f32 %v578, %v701
  %v748 = vsub.f32 %v580, %v702
  %v749 = vsub.f32 %v582, %v701
  %v750 = vsub.f32 %v584, %v702
  %v751 = vsub.f32 %v588, %v701
  %v752 = vsub.f32 %v590, %v702
  %v753 = vsub.f32 %v592, %v701
  %v754 = vsub.f32 %v594, %v702
  %v755 = vsub.f32 %v598, %v701
  %v756 = vsub.f32 %v600, %v702
  %v757 = vsub.f32 %v602, %v701
  %v758 = vsub.f32 %v604, %v702
  %v759 = vsub.f32 %v608, %v701
  %v760 = vsub.f32 %v610, %v702
  %v761 = vsub.f32 %v612, %v701
  %v762 = vsub.f32 %v614, %v702
  %v763 = vsub.f32 %v618, %v701
  %v764 = vsub.f32 %v620, %v702
  %v765 = vsub.f32 %v622, %v701
  %v766 = vsub.f32 %v624, %v702
  %v767 = vmul.f32 %v703, %v703
  %v768 = vmul.f32 %v704, %v704
  %v769 = vmul.f32 %v705, %v705
  %v770 = vmul.f32 %v706, %v706
  %v771 = vmul.f32 %v707, %v707
  %v772 = vmul.f32 %v708, %v708
  %v773 = vmul.f32 %v709, %v709
  %v774 = vmul.f32 %v710, %v710
  %v775 = vmul.f32 %v711, %v711
  %v776 = vmul.f32 %v712, %v712
  %v777 = vmul.f32 %v713, %v713
  %v778 = vmul.f32 %v714, %v714
  %v779 = vmul.f32 %v715, %v715
  %v780 = vmul.f32 %v716, %v716
  %v781 = vmul.f32 %v717, %v717
  %v782 = vmul.f32 %v718, %v718
  %v783 = vmul.f32 %v719, %v719
  %v784 = vmul.f32 %v720, %v720
  %v785 = vmul.f32 %v721, %v721
  %v786 = vmul.f32 %v722, %v722
  %v787 = vmul.f32 %v723, %v723
  %v788 = vmul.f32 %v724, %v724
  %v789 = vmul.f32 %v725, %v725
  %v790 = vmul.f32 %v726, %v726
  %v791 = vmul.f32 %v727, %v727
  %v792 = vmul.f32 %v728, %v728
  %v793 = vmul.f32 %v729, %v729
  %v794 = vmul.f32 %v730, %v730
  %v795 = vmul.f32 %v731, %v731
  %v796 = vmul.f32 %v732, %v732
  %v797 = vmul.f32 %v733, %v733
  %v798 = vmul.f32 %v734, %v734
  %v799 = vmul.f32 %v735, %v735
  %v800 = vmul.f32 %v736, %v736
  %v801 = vmul.f32 %v737, %v737
  %v802 = vmul.f32 %v738, %v738
  %v803 = vmul.f32 %v739, %v739
  %v804 = vmul.f32 %v740, %v740
  %v805 = vmul.f32 %v741, %v741
  %v806 = vmul.f32 %v742, %v742
  %v807 = vmul.f32 %v743, %v743
  %v808 = vmul.f32 %v744, %v744
  %v809 = vmul.f32 %v745, %v745
  %v810 = vmul.f32 %v746, %v746
  %v811 = vmul.f32 %v747, %v747
  %v812 = vmul.f32 %v748, %v748
  %v813 = vmul.f32 %v749, %v749
  %v814 = vmul.f32 %v750, %v750
  %v815 = vmul.f32 %v751, %v751
  %v816 = vmul.f32 %v752, %v752
  %v817 = vmul.f32 %v753, %v753
  %v818 = vmul.f32 %v754, %v754
  %v819 = vmul.f32 %v755, %v755
  %v820 = vmul.f32 %v756, %v756
  %v821 = vmul.f32 %v757, %v757
  %v822 = vmul.f32 %v758, %v758
  %v823 = vmul.f32 %v759, %v759
  %v824 = vmul.f32 %v760, %v760
  %v825 = vmul.f32 %v761, %v761
  %v826 = vmul.f32 %v762, %v762
  %v827 = vmul.f32 %v763, %v763
  %v828 = vmul.f32 %v764, %v764
  %v829 = vmul.f32 %v765, %v765
  %v830 = vmul.f32 %v766, %v766
  %v831 = vadd.f32 %v767, %v769
  %v832 = vadd.f32 %v831, %v771
  %v833 = vadd.f32 %v832, %v773
  %v834 = vadd.f32 %v833, %v775
  %v835 = vadd.f32 %v834, %v777
  %v836 = vadd.f32 %v835, %v779
  %v837 = vadd.f32 %v836, %v781
  %v838 = vadd.f32 %v837, %v783
  %v839 = vadd.f32 %v838, %v785
  %v840 = vadd.f32 %v839, %v787
  %v841 = vadd.f32 %v840, %v789
  %v842 = vadd.f32 %v841, %v791
  %v843 = vadd.f32 %v842, %v793
  %v844 = vadd.f32 %v843, %v795
  %v845 = vadd.f32 %v844, %v797
  %v846 = vadd.f32 %v845, %v799
  %v847 = vadd.f32 %v846, %v801
  %v848 = vadd.f32 %v847, %v803
  %v849 = vadd.f32 %v848, %v805
  %v850 = vadd.f32 %v849, %v807
  %v851 = vadd.f32 %v850, %v809
  %v852 = vadd.f32 %v851, %v811
  %v853 = vadd.f32 %v852, %v813
  %v854 = vadd.f32 %v853, %v815
  %v855 = vadd.f32 %v854, %v817
  %v856 = vadd.f32 %v855, %v819
  %v857 = vadd.f32 %v856, %v821
  %v858 = vadd.f32 %v857, %v823
  %v859 = vadd.f32 %v858, %v825
  %v860 = vadd.f32 %v859, %v827
  %v861 = vadd.f32 %v860, %v829
  %v862 = vrot.slane %v861, 4
  %v863 = vadd.f32 %v861, %v862
  %v864 = vrot.slane %v863, 2
  %v865 = vadd.f32 %v863, %v864
  %v866 = vrot.slane %v865, 1
  %v867 = vadd.f32 %v865, %v866
  %v868 = vadd.f32 %v768, %v770
  %v869 = vadd.f32 %v868, %v772
  %v870 = vadd.f32 %v869, %v774
  %v871 = vadd.f32 %v870, %v776
  %v872 = vadd.f32 %v871, %v778
  %v873 = vadd.f32 %v872, %v780
  %v874 = vadd.f32 %v873, %v782
  %v875 = vadd.f32 %v874, %v784
  %v876 = vadd.f32 %v875, %v786
  %v877 = vadd.f32 %v876, %v788
  %v878 = vadd.f32 %v877, %v790
  %v879 = vadd.f32 %v878, %v792
  %v880 = vadd.f32 %v879, %v794
  %v881 = vadd.f32 %v880, %v796
  %v882 = vadd.f32 %v881, %v798
  %v883 = vadd.f32 %v882, %v800
  %v884 = vadd.f32 %v883, %v802
  %v885 = vadd.f32 %v884, %v804
  %v886 = vadd.f32 %v885, %v806
  %v887 = vadd.f32 %v886, %v808
  %v888 = vadd.f32 %v887, %v810
  %v889 = vadd.f32 %v888, %v812
  %v890 = vadd.f32 %v889, %v814
  %v891 = vadd.f32 %v890, %v816
  %v892 = vadd.f32 %v891, %v818
  %v893 = vadd.f32 %v892, %v820
  %v894 = vadd.f32 %v893, %v822
  %v895 = vadd.f32 %v894, %v824
  %v896 = vadd.f32 %v895, %v826
  %v897 = vadd.f32 %v896, %v828
  %v898 = vadd.f32 %v897, %v830
  %v899 = vrot.slane %v898, 4
  %v900 = vadd.f32 %v898, %v899
  %v901 = vrot.slane %v900, 2
  %v902 = vadd.f32 %v900, %v901
  %v903 = vrot.slane %v902, 1
  %v904 = vadd.f32 %v902, %v903
  %v905 = vmul.f32 %v867, %v700
  %v906 = vmul.f32 %v904, %v700
  %v907 = vadd.f32 %v905, 1e-05
  %v908 = vadd.f32 %v906, 1e-05
  %v909 = vrsqrt.pop %v907
  %v910 = vrsqrt.pop %v908
  %v911 = vmul.f32 %v703, %v909
  %v912 = vmul.f32 %v704, %v910
  %v913 = vmul.f32 %v705, %v909
  %v914 = vmul.f32 %v706, %v910
  %v915 = vmul.f32 %v707, %v909
  %v916 = vmul.f32 %v708, %v910
  %v917 = vmul.f32 %v709, %v909
  %v918 = vmul.f32 %v710, %v910
  %v919 = vmul.f32 %v711, %v909
  %v920 = vmul.f32 %v712, %v910
  %v921 = vmul.f32 %v713, %v909
  %v922 = vmul.f32 %v714, %v910
  %v923 = vmul.f32 %v715, %v909
  %v924 = vmul.f32 %v716, %v910
  %v925 = vmul.f32 %v717, %v909
  %v926 = vmul.f32 %v718, %v910
  %v927 = vmul.f32 %v719, %v909
  %v928 = vmul.f32 %v720, %v910
  %v929 = vmul.f32 %v721, %v909
  %v930 = vmul.f32 %v722, %v910
  %v931 = vmul.f32 %v723, %v909
  %v932 = vmul.f32 %v724, %v910
  %v933 = vmul.f32 %v725, %v909
  %v934 = vmul.f32 %v726, %v910
  %v935 = vmul.f32 %v727, %v909
  %v936 = vmul.f32 %v728, %v910
  %v937 = vmul.f32 %v729, %v909
  %v938 = vmul.f32 %v730, %v910
  %v939 = vmul.f32 %v731, %v909
  %v940 = vmul.f32 %v732, %v910
  %v941 = vmul.f32 %v733, %v909
  %v942 = vmul.f32 %v734, %v910
  %v943 = vmul.f32 %v735, %v909
  %v944 = vmul.f32 %v736, %v910
  %v945 = vmul.f32 %v737, %v909
  %v946 = vmul.f32 %v738, %v910
  %v947 = vmul.f32 %v739, %v909
  %v948 = vmul.f32 %v740, %v910
  %v949 = vmul.f32 %v741, %v909
  %v950 = vmul.f32 %v742, %v910
  %v951 = vmul.f32 %v743, %v909
  %v952 = vmul.f32 %v744, %v910
  %v953 = vmul.f32 %v745, %v909
  %v954 = vmul.f32 %v746, %v910
  %v955 = vmul.f32 %v747, %v909
  %v956 = vmul.f32 %v748, %v910
  %v957 = vmul.f32 %v749, %v909
  %v958 = vmul.f32 %v750, %v910
  %v959 = vmul.f32 %v751, %v909
  %v960 = vmul.f32 %v752, %v910
  %v961 = vmul.f32 %v753, %v909
  %v962 = vmul.f32 %v754, %v910
  %v963 = vmul.f32 %v755, %v909
  %v964 = vmul.f32 %v756, %v910
  %v965 = vmul.f32 %v757, %v909
  %v966 = vmul.f32 %v758, %v910
  %v967 = vmul.f32 %v759, %v909
  %v968 = vmul.f32 %v760, %v910
  %v969 = vmul.f32 %v761, %v909
  %v970 = vmul.f32 %v762, %v910
  %v971 = vmul.f32 %v763, %v909
  %v972 = vmul.f32 %v764, %v910
  %v973 = vmul.f32 %v765, %v909
  %v974 = vmul.f32 %v766, %v910
  %v976 = vlaneseq
  %v977 = vshrl.u32 %v976, 7
  %v978 = vsub.s32 0, %v977
  %v979 = vrot.slane %v100, %v978
  %v980 = vlaneseq
  %v981 = vshrl.u32 %v980, 7
  %v982 = vsub.s32 1, %v981
  %v983 = vrot.slane %v100, %v982
  %v986 = vmul.f32 %v911, %v979
  %v987 = vmul.f32 %v912, %v983
  %v988 = vmul.f32 %v913, %v979
  %v989 = vmul.f32 %v914, %v983
  %v990 = vmul.f32 %v915, %v979
  %v991 = vmul.f32 %v916, %v983
  %v992 = vmul.f32 %v917, %v979
  %v993 = vmul.f32 %v918, %v983
  %v994 = vmul.f32 %v919, %v979
  %v995 = vmul.f32 %v920, %v983
  %v996 = vmul.f32 %v921, %v979
  %v997 = vmul.f32 %v922, %v983
  %v998 = vmul.f32 %v923, %v979
  %v999 = vmul.f32 %v924, %v983
  %v1000 = vmul.f32 %v925, %v979
  %v1001 = vmul.f32 %v926, %v983
  %v1002 = vmul.f32 %v927, %v979
  %v1003 = vmul.f32 %v928, %v983
  %v1004 = vmul.f32 %v929, %v979
  %v1005 = vmul.f32 %v930, %v983
  %v1006 = vmul.f32 %v931, %v979
  %v1007 = vmul.f32 %v932, %v983
  %v1008 = vmul.f32 %v933, %v979
  %v1009 = vmul.f32 %v934, %v983
  %v1010 = vmul.f32 %v935, %v979
  %v1011 = vmul.f32 %v936, %v983
  %v1012 = vmul.f32 %v937, %v979
  %v1013 = vmul.f32 %v938, %v983
  %v1014 = vmul.f32 %v939, %v979
  %v1015 = vmul.f32 %v940, %v983
  %v1016 = vmul.f32 %v941, %v979
  %v1017 = vmul.f32 %v942, %v983
  %v1018 = vmul.f32 %v943, %v979
  %v1019 = vmul.f32 %v944, %v983
  %v1020 = vmul.f32 %v945, %v979
  %v1021 = vmul.f32 %v946, %v983
  %v1022 = vmul.f32 %v947, %v979
  %v1023 = vmul.f32 %v948, %v983
  %v1024 = vmul.f32 %v949, %v979
  %v1025 = vmul.f32 %v950, %v983
  %v1026 = vmul.f32 %v951, %v979
  %v1027 = vmul.f32 %v952, %v983
  %v1028 = vmul.f32 %v953, %v979
  %v1029 = vmul.f32 %v954, %v983
  %v1030 = vmul.f32 %v955, %v979
  %v1031 = vmul.f32 %v956, %v983
  %v1032 = vmul.f32 %v957, %v979
  %v1033 = vmul.f32 %v958, %v983
  %v1034 = vmul.f32 %v959, %v979
  %v1035 = vmul.f32 %v960, %v983
  %v1036 = vmul.f32 %v961, %v979
  %v1037 = vmul.f32 %v962, %v983
  %v1038 = vmul.f32 %v963, %v979
  %v1039 = vmul.f32 %v964, %v983
  %v1040 = vmul.f32 %v965, %v979
  %v1041 = vmul.f32 %v966, %v983
  %v1042 = vmul.f32 %v967, %v979
  %v1043 = vmul.f32 %v968, %v983
  %v1044 = vmul.f32 %v969, %v979
  %v1045 = vmul.f32 %v970, %v983
  %v1046 = vmul.f32 %v971, %v979
  %v1047 = vmul.f32 %v972, %v983
  %v1048 = vmul.f32 %v973, %v979
  %v1049 = vmul.f32 %v974, %v983
  %v1051 = vlaneseq
  %v1052 = vshrl.u32 %v1051, 7
  %v1053 = vsub.s32 0, %v1052
  %v1054 = vrot.slane %v101, %v1053
  %v1055 = vlaneseq
  %v1056 = vshrl.u32 %v1055, 7
  %v1057 = vsub.s32 1, %v1056
  %v1058 = vrot.slane %v101, %v1057
  %v1061 = vadd.f32 %v986, %v1054
  %v1062 = vadd.f32 %v987, %v1058
  %v1063 = vadd.f32 %v988, %v1054
  %v1064 = vadd.f32 %v989, %v1058
  %v1065 = vadd.f32 %v990, %v1054
  %v1066 = vadd.f32 %v991, %v1058
  %v1067 = vadd.f32 %v992, %v1054
  %v1068 = vadd.f32 %v993, %v1058
  %v1069 = vadd.f32 %v994, %v1054
  %v1070 = vadd.f32 %v995, %v1058
  %v1071 = vadd.f32 %v996, %v1054
  %v1072 = vadd.f32 %v997, %v1058
  %v1073 = vadd.f32 %v998, %v1054
  %v1074 = vadd.f32 %v999, %v1058
  %v1075 = vadd.f32 %v1000, %v1054
  %v1076 = vadd.f32 %v1001, %v1058
  %v1077 = vadd.f32 %v1002, %v1054
  %v1078 = vadd.f32 %v1003, %v1058
  %v1079 = vadd.f32 %v1004, %v1054
  %v1080 = vadd.f32 %v1005, %v1058
  %v1081 = vadd.f32 %v1006, %v1054
  %v1082 = vadd.f32 %v1007, %v1058
  %v1083 = vadd.f32 %v1008, %v1054
  %v1084 = vadd.f32 %v1009, %v1058
  %v1085 = vadd.f32 %v1010, %v1054
  %v1086 = vadd.f32 %v1011, %v1058
  %v1087 = vadd.f32 %v1012, %v1054
  %v1088 = vadd.f32 %v1013, %v1058
  %v1089 = vadd.f32 %v1014, %v1054
  %v1090 = vadd.f32 %v1015, %v1058
  %v1091 = vadd.f32 %v1016, %v1054
  %v1092 = vadd.f32 %v1017, %v1058
  %v1093 = vadd.f32 %v1018, %v1054
  %v1094 = vadd.f32 %v1019, %v1058
  %v1095 = vadd.f32 %v1020, %v1054
  %v1096 = vadd.f32 %v1021, %v1058
  %v1097 = vadd.f32 %v1022, %v1054
  %v1098 = vadd.f32 %v1023, %v1058
  %v1099 = vadd.f32 %v1024, %v1054
  %v1100 = vadd.f32 %v1025, %v1058
  %v1101 = vadd.f32 %v1026, %v1054
  %v1102 = vadd.f32 %v1027, %v1058
  %v1103 = vadd.f32 %v1028, %v1054
  %v1104 = vadd.f32 %v1029, %v1058
  %v1105 = vadd.f32 %v1030, %v1054
  %v1106 = vadd.f32 %v1031, %v1058
  %v1107 = vadd.f32 %v1032, %v1054
  %v1108 = vadd.f32 %v1033, %v1058
  %v1109 = vadd.f32 %v1034, %v1054
  %v1110 = vadd.f32 %v1035, %v1058
  %v1111 = vadd.f32 %v1036, %v1054
  %v1112 = vadd.f32 %v1037, %v1058
  %v1113 = vadd.f32 %v1038, %v1054
  %v1114 = vadd.f32 %v1039, %v1058
  %v1115 = vadd.f32 %v1040, %v1054
  %v1116 = vadd.f32 %v1041, %v1058
  %v1117 = vadd.f32 %v1042, %v1054
  %v1118 = vadd.f32 %v1043, %v1058
  %v1119 = vadd.f32 %v1044, %v1054
  %v1120 = vadd.f32 %v1045, %v1058
  %v1121 = vadd.f32 %v1046, %v1054
  %v1122 = vadd.f32 %v1047, %v1058
  %v1123 = vadd.f32 %v1048, %v1054
  %v1124 = vadd.f32 %v1049, %v1058
  %v1125 = vmax.f32 %v1061, 0.0
  %v1126 = vmax.f32 %v1062, 0.0
  %v1127 = vmax.f32 %v1063, 0.0
  %v1128 = vmax.f32 %v1064, 0.0
  %v1129 = vmax.f32 %v1065, 0.0
  %v1130 = vmax.f32 %v1066, 0.0
  %v1131 = vmax.f32 %v1067, 0.0
  %v1132 = vmax.f32 %v1068, 0.0
  %v1133 = vmax.f32 %v1069, 0.0
  %v1134 = vmax.f32 %v1070, 0.0
  %v1135 = vmax.f32 %v1071, 0.0
  %v1136 = vmax.f32 %v1072, 0.0
  %v1137 = vmax.f32 %v1073, 0.0
  %v1138 = vmax.f32 %v1074, 0.0
  %v1139 = vmax.f32 %v1075, 0.0
  %v1140 = vmax.f32 %v1076, 0.0
  %v1141 = vmax.f32 %v1077, 0.0
  %v1142 = vmax.f32 %v1078, 0.0
  %v1143 = vmax.f32 %v1079, 0.0
  %v1144 = vmax.f32 %v1080, 0.0
  %v1145 = vmax.f32 %v1081, 0.0
  %v1146 = vmax.f32 %v1082, 0.0
  %v1147 = vmax.f32 %v1083, 0.0
  %v1148 = vmax.f32 %v1084, 0.0
  %v1149 = vmax.f32 %v1085, 0.0
  %v1150 = vmax.f32 %v1086, 0.0
  %v1151 = vmax.f32 %v1087, 0.0
  %v1152 = vmax.f32 %v1088, 0.0
  %v1153 = vmax.f32 %v1089, 0.0
  %v1154 = vmax.f32 %v1090, 0.0
  %v1155 = vmax.f32 %v1091, 0.0
  %v1156 = vmax.f32 %v1092, 0.0
  %v1157 = vmax.f32 %v1093, 0.0
  %v1158 = vmax.f32 %v1094, 0.0
  %v1159 = vmax.f32 %v1095, 0.0
  %v1160 = vmax.f32 %v1096, 0.0
  %v1161 = vmax.f32 %v1097, 0.0
  %v1162 = vmax.f32 %v1098, 0.0
  %v1163 = vmax.f32 %v1099, 0.0
  %v1164 = vmax.f32 %v1100, 0.0
  %v1165 = vmax.f32 %v1101, 0.0
  %v1166 = vmax.f32 %v1102, 0.0
  %v1167 = vmax.f32 %v1103, 0.0
  %v1168 = vmax.f32 %v1104, 0.0
  %v1169 = vmax.f32 %v1105, 0.0
  %v1170 = vmax.f32 %v1106, 0.0
  %v1171 = vmax.f32 %v1107, 0.0
  %v1172 = vmax.f32 %v1108, 0.0
  %v1173 = vmax.f32 %v1109, 0.0
  %v1174 = vmax.f32 %v1110, 0.0
  %v1175 = vmax.f32 %v1111, 0.0
  %v1176 = vmax.f32 %v1112, 0.0
  %v1177 = vmax.f32 %v1113, 0.0
  %v1178 = vmax.f32 %v1114, 0.0
  %v1179 = vmax.f32 %v1115, 0.0
  %v1180 = vmax.f32 %v1116, 0.0
  %v1181 = vmax.f32 %v1117, 0.0
  %v1182 = vmax.f32 %v1118, 0.0
  %v1183 = vmax.f32 %v1119, 0.0
  %v1184 = vmax.f32 %v1120, 0.0
  %v1185 = vmax.f32 %v1121, 0.0
  %v1186 = vmax.f32 %v1122, 0.0
  %v1187 = vmax.f32 %v1123, 0.0
  %v1188 = vmax.f32 %v1124, 0.0
  %v1189 = vmul.f32 %v1125, %v1125
  %v1190 = vmul.f32 %v1126, %v1126
  %v1191 = vmul.f32 %v1127, %v1127
  %v1192 = vmul.f32 %v1128, %v1128
  %v1193 = vmul.f32 %v1129, %v1129
  %v1194 = vmul.f32 %v1130, %v1130
  %v1195 = vmul.f32 %v1131, %v1131
  %v1196 = vmul.f32 %v1132, %v1132
  %v1197 = vmul.f32 %v1133, %v1133
  %v1198 = vmul.f32 %v1134, %v1134
  %v1199 = vmul.f32 %v1135, %v1135
  %v1200 = vmul.f32 %v1136, %v1136
  %v1201 = vmul.f32 %v1137, %v1137
  %v1202 = vmul.f32 %v1138, %v1138
  %v1203 = vmul.f32 %v1139, %v1139
  %v1204 = vmul.f32 %v1140, %v1140
  %v1205 = vmul.f32 %v1141, %v1141
  %v1206 = vmul.f32 %v1142, %v1142
  %v1207 = vmul.f32 %v1143, %v1143
  %v1208 = vmul.f32 %v1144, %v1144
  %v1209 = vmul.f32 %v1145, %v1145
  %v1210 = vmul.f32 %v1146, %v1146
  %v1211 = vmul.f32 %v1147, %v1147
  %v1212 = vmul.f32 %v1148, %v1148
  %v1213 = vmul.f32 %v1149, %v1149
  %v1214 = vmul.f32 %v1150, %v1150
  %v1215 = vmul.f32 %v1151, %v1151
  %v1216 = vmul.f32 %v1152, %v1152
  %v1217 = vmul.f32 %v1153, %v1153
  %v1218 = vmul.f32 %v1154, %v1154
  %v1219 = vmul.f32 %v1155, %v1155
  %v1220 = vmul.f32 %v1156, %v1156
  %v1221 = vmul.f32 %v1157, %v1157
  %v1222 = vmul.f32 %v1158, %v1158
  %v1223 = vmul.f32 %v1159, %v1159
  %v1224 = vmul.f32 %v1160, %v1160
  %v1225 = vmul.f32 %v1161, %v1161
  %v1226 = vmul.f32 %v1162, %v1162
  %v1227 = vmul.f32 %v1163, %v1163
  %v1228 = vmul.f32 %v1164, %v1164
  %v1229 = vmul.f32 %v1165, %v1165
  %v1230 = vmul.f32 %v1166, %v1166
  %v1231 = vmul.f32 %v1167, %v1167
  %v1232 = vmul.f32 %v1168, %v1168
  %v1233 = vmul.f32 %v1169, %v1169
  %v1234 = vmul.f32 %v1170, %v1170
  %v1235 = vmul.f32 %v1171, %v1171
  %v1236 = vmul.f32 %v1172, %v1172
  %v1237 = vmul.f32 %v1173, %v1173
  %v1238 = vmul.f32 %v1174, %v1174
  %v1239 = vmul.f32 %v1175, %v1175
  %v1240 = vmul.f32 %v1176, %v1176
  %v1241 = vmul.f32 %v1177, %v1177
  %v1242 = vmul.f32 %v1178, %v1178
  %v1243 = vmul.f32 %v1179, %v1179
  %v1244 = vmul.f32 %v1180, %v1180
  %v1245 = vmul.f32 %v1181, %v1181
  %v1246 = vmul.f32 %v1182, %v1182
  %v1247 = vmul.f32 %v1183, %v1183
  %v1248 = vmul.f32 %v1184, %v1184
  %v1249 = vmul.f32 %v1185, %v1185
  %v1250 = vmul.f32 %v1186, %v1186
  %v1251 = vmul.f32 %v1187, %v1187
  %v1252 = vmul.f32 %v1188, %v1188
  %v1253 = vadd.f32 %v1189, %v1190
  %1254 = vadd.xlane.f32.xlu0 %v1253
  %v1255 = vpop.xlane.xlu0 %1254
  %v1256 = vadd.f32 %v1191, %v1192
  %1257 = vadd.xlane.f32.xlu0 %v1256
  %v1258 = vpop.xlane.xlu0 %1257
  %v1259 = vadd.f32 %v1193, %v1194
  %1260 = vadd.xlane.f32.xlu0 %v1259
  %v1261 = vpop.xlane.xlu0 %1260
  %v1262 = vadd.f32 %v1195, %v1196
  %1263 = vadd.xlane.f32.xlu0 %v1262
  %v1264 = vpop.xlane.xlu0 %1263
  %v1265 = vadd.f32 %v1197, %v1198
  %1266 = vadd.xlane.f32.xlu0 %v1265
  %v1267 = vpop.xlane.xlu0 %1266
  %v1268 = vadd.f32 %v1199, %v1200
  %1269 = vadd.xlane.f32.xlu0 %v1268
  %v1270 = vpop.xlane.xlu0 %1269
  %v1271 = vadd.f32 %v1201, %v1202
  %1272 = vadd.xlane.f32.xlu0 %v1271
  %v1273 = vpop.xlane.xlu0 %1272
  %v1274 = vadd.f32 %v1203, %v1204
  %1275 = vadd.xlane.f32.xlu0 %v1274
  %v1276 = vpop.xlane.xlu0 %1275
  %v1277 = vadd.f32 %v1205, %v1206
  %1278 = vadd.xlane.f32.xlu0 %v1277
  %v1279 = vpop.xlane.xlu0 %1278
  %v1280 = vadd.f32 %v1207, %v1208
  %1281 = vadd.xlane.f32.xlu0 %v1280
  %v1282 = vpop.xlane.xlu0 %1281
  %v1283 = vadd.f32 %v1209, %v1210
  %1284 = vadd.xlane.f32.xlu0 %v1283
  %v1285 = vpop.xlane.xlu0 %1284
  %v1286 = vadd.f32 %v1211, %v1212
  %1287 = vadd.xlane.f32.xlu0 %v1286
  %v1288 = vpop.xlane.xlu0 %1287
  %v1289 = vadd.f32 %v1213, %v1214
  %1290 = vadd.xlane.f32.xlu0 %v1289
  %v1291 = vpop.xlane.xlu0 %1290
  %v1292 = vadd.f32 %v1215, %v1216
  %1293 = vadd.xlane.f32.xlu0 %v1292
  %v1294 = vpop.xlane.xlu0 %1293
  %v1295 = vadd.f32 %v1217, %v1218
  %1296 = vadd.xlane.f32.xlu0 %v1295
  %v1297 = vpop.xlane.xlu0 %1296
  %v1298 = vadd.f32 %v1219, %v1220
  %1299 = vadd.xlane.f32.xlu0 %v1298
  %v1300 = vpop.xlane.xlu0 %1299
  %v1301 = vadd.f32 %v1221, %v1222
  %1302 = vadd.xlane.f32.xlu0 %v1301
  %v1303 = vpop.xlane.xlu0 %1302
  %v1304 = vadd.f32 %v1223, %v1224
  %1305 = vadd.xlane.f32.xlu0 %v1304
  %v1306 = vpop.xlane.xlu0 %1305
  %v1307 = vadd.f32 %v1225, %v1226
  %1308 = vadd.xlane.f32.xlu0 %v1307
  %v1309 = vpop.xlane.xlu0 %1308
  %v1310 = vadd.f32 %v1227, %v1228
  %1311 = vadd.xlane.f32.xlu0 %v1310
  %v1312 = vpop.xlane.xlu0 %1311
  %v1313 = vadd.f32 %v1229, %v1230
  %1314 = vadd.xlane.f32.xlu0 %v1313
  %v1315 = vpop.xlane.xlu0 %1314
  %v1316 = vadd.f32 %v1231, %v1232
  %1317 = vadd.xlane.f32.xlu0 %v1316
  %v1318 = vpop.xlane.xlu0 %1317
  %v1319 = vadd.f32 %v1233, %v1234
  %1320 = vadd.xlane.f32.xlu0 %v1319
  %v1321 = vpop.xlane.xlu0 %1320
  %v1322 = vadd.f32 %v1235, %v1236
  %1323 = vadd.xlane.f32.xlu0 %v1322
  %v1324 = vpop.xlane.xlu0 %1323
  %v1325 = vadd.f32 %v1237, %v1238
  %1326 = vadd.xlane.f32.xlu0 %v1325
  %v1327 = vpop.xlane.xlu0 %1326
  %v1328 = vadd.f32 %v1239, %v1240
  %1329 = vadd.xlane.f32.xlu0 %v1328
  %v1330 = vpop.xlane.xlu0 %1329
  %v1331 = vadd.f32 %v1241, %v1242
  %1332 = vadd.xlane.f32.xlu0 %v1331
  %v1333 = vpop.xlane.xlu0 %1332
  %v1334 = vadd.f32 %v1243, %v1244
  %1335 = vadd.xlane.f32.xlu0 %v1334
  %v1336 = vpop.xlane.xlu0 %1335
  %v1337 = vadd.f32 %v1245, %v1246
  %1338 = vadd.xlane.f32.xlu0 %v1337
  %v1339 = vpop.xlane.xlu0 %1338
  %v1340 = vadd.f32 %v1247, %v1248
  %1341 = vadd.xlane.f32.xlu0 %v1340
  %v1342 = vpop.xlane.xlu0 %1341
  %v1343 = vadd.f32 %v1249, %v1250
  %1344 = vadd.xlane.f32.xlu0 %v1343
  %v1345 = vpop.xlane.xlu0 %1344
  %v1346 = vadd.f32 %v1251, %v1252
  %1347 = vadd.xlane.f32.xlu0 %v1346
  %v1348 = vpop.xlane.xlu0 %1347
  %v1349 = vmax.f32 %v1255, 1e-24
  %v1350 = vmax.f32 %v1258, 1e-24
  %v1351 = vmax.f32 %v1261, 1e-24
  %v1352 = vmax.f32 %v1264, 1e-24
  %v1353 = vmax.f32 %v1267, 1e-24
  %v1354 = vmax.f32 %v1270, 1e-24
  %v1355 = vmax.f32 %v1273, 1e-24
  %v1356 = vmax.f32 %v1276, 1e-24
  %v1357 = vmax.f32 %v1279, 1e-24
  %v1358 = vmax.f32 %v1282, 1e-24
  %v1359 = vmax.f32 %v1285, 1e-24
  %v1360 = vmax.f32 %v1288, 1e-24
  %v1361 = vmax.f32 %v1291, 1e-24
  %v1362 = vmax.f32 %v1294, 1e-24
  %v1363 = vmax.f32 %v1297, 1e-24
  %v1364 = vmax.f32 %v1300, 1e-24
  %v1365 = vmax.f32 %v1303, 1e-24
  %v1366 = vmax.f32 %v1306, 1e-24
  %v1367 = vmax.f32 %v1309, 1e-24
  %v1368 = vmax.f32 %v1312, 1e-24
  %v1369 = vmax.f32 %v1315, 1e-24
  %v1370 = vmax.f32 %v1318, 1e-24
  %v1371 = vmax.f32 %v1321, 1e-24
  %v1372 = vmax.f32 %v1324, 1e-24
  %v1373 = vmax.f32 %v1327, 1e-24
  %v1374 = vmax.f32 %v1330, 1e-24
  %v1375 = vmax.f32 %v1333, 1e-24
  %v1376 = vmax.f32 %v1336, 1e-24
  %v1377 = vmax.f32 %v1339, 1e-24
  %v1378 = vmax.f32 %v1342, 1e-24
  %v1379 = vmax.f32 %v1345, 1e-24
  %v1380 = vmax.f32 %v1348, 1e-24
  %v1381 = vrsqrt.pop %v1349
  %v1382 = vrsqrt.pop %v1350
  %v1383 = vrsqrt.pop %v1351
  %v1384 = vrsqrt.pop %v1352
  %v1385 = vrsqrt.pop %v1353
  %v1386 = vrsqrt.pop %v1354
  %v1387 = vrsqrt.pop %v1355
  %v1388 = vrsqrt.pop %v1356
  %v1389 = vrsqrt.pop %v1357
  %v1390 = vrsqrt.pop %v1358
  %v1391 = vrsqrt.pop %v1359
  %v1392 = vrsqrt.pop %v1360
  %v1393 = vrsqrt.pop %v1361
  %v1394 = vrsqrt.pop %v1362
  %v1395 = vrsqrt.pop %v1363
  %v1396 = vrsqrt.pop %v1364
  %v1397 = vrsqrt.pop %v1365
  %v1398 = vrsqrt.pop %v1366
  %v1399 = vrsqrt.pop %v1367
  %v1400 = vrsqrt.pop %v1368
  %v1401 = vrsqrt.pop %v1369
  %v1402 = vrsqrt.pop %v1370
  %v1403 = vrsqrt.pop %v1371
  %v1404 = vrsqrt.pop %v1372
  %v1405 = vrsqrt.pop %v1373
  %v1406 = vrsqrt.pop %v1374
  %v1407 = vrsqrt.pop %v1375
  %v1408 = vrsqrt.pop %v1376
  %v1409 = vrsqrt.pop %v1377
  %v1410 = vrsqrt.pop %v1378
  %v1411 = vrsqrt.pop %v1379
  %v1412 = vrsqrt.pop %v1380
  %v1413 = vmul.f32 %v1125, %v1381
  %v1414 = vmul.f32 %v1126, %v1381
  %v1415 = vmul.f32 %v1127, %v1382
  %v1416 = vmul.f32 %v1128, %v1382
  %v1417 = vmul.f32 %v1129, %v1383
  %v1418 = vmul.f32 %v1130, %v1383
  %v1419 = vmul.f32 %v1131, %v1384
  %v1420 = vmul.f32 %v1132, %v1384
  %v1421 = vmul.f32 %v1133, %v1385
  %v1422 = vmul.f32 %v1134, %v1385
  %v1423 = vmul.f32 %v1135, %v1386
  %v1424 = vmul.f32 %v1136, %v1386
  %v1425 = vmul.f32 %v1137, %v1387
  %v1426 = vmul.f32 %v1138, %v1387
  %v1427 = vmul.f32 %v1139, %v1388
  %v1428 = vmul.f32 %v1140, %v1388
  %v1429 = vmul.f32 %v1141, %v1389
  %v1430 = vmul.f32 %v1142, %v1389
  %v1431 = vmul.f32 %v1143, %v1390
  %v1432 = vmul.f32 %v1144, %v1390
  %v1433 = vmul.f32 %v1145, %v1391
  %v1434 = vmul.f32 %v1146, %v1391
  %v1435 = vmul.f32 %v1147, %v1392
  %v1436 = vmul.f32 %v1148, %v1392
  %v1437 = vmul.f32 %v1149, %v1393
  %v1438 = vmul.f32 %v1150, %v1393
  %v1439 = vmul.f32 %v1151, %v1394
  %v1440 = vmul.f32 %v1152, %v1394
  %v1441 = vmul.f32 %v1153, %v1395
  %v1442 = vmul.f32 %v1154, %v1395
  %v1443 = vmul.f32 %v1155, %v1396
  %v1444 = vmul.f32 %v1156, %v1396
  %v1445 = vmul.f32 %v1157, %v1397
  %v1446 = vmul.f32 %v1158, %v1397
  %v1447 = vmul.f32 %v1159, %v1398
  %v1448 = vmul.f32 %v1160, %v1398
  %v1449 = vmul.f32 %v1161, %v1399
  %v1450 = vmul.f32 %v1162, %v1399
  %v1451 = vmul.f32 %v1163, %v1400
  %v1452 = vmul.f32 %v1164, %v1400
  %v1453 = vmul.f32 %v1165, %v1401
  %v1454 = vmul.f32 %v1166, %v1401
  %v1455 = vmul.f32 %v1167, %v1402
  %v1456 = vmul.f32 %v1168, %v1402
  %v1457 = vmul.f32 %v1169, %v1403
  %v1458 = vmul.f32 %v1170, %v1403
  %v1459 = vmul.f32 %v1171, %v1404
  %v1460 = vmul.f32 %v1172, %v1404
  %v1461 = vmul.f32 %v1173, %v1405
  %v1462 = vmul.f32 %v1174, %v1405
  %v1463 = vmul.f32 %v1175, %v1406
  %v1464 = vmul.f32 %v1176, %v1406
  %v1465 = vmul.f32 %v1177, %v1407
  %v1466 = vmul.f32 %v1178, %v1407
  %v1467 = vmul.f32 %v1179, %v1408
  %v1468 = vmul.f32 %v1180, %v1408
  %v1469 = vmul.f32 %v1181, %v1409
  %v1470 = vmul.f32 %v1182, %v1409
  %v1471 = vmul.f32 %v1183, %v1410
  %v1472 = vmul.f32 %v1184, %v1410
  %v1473 = vmul.f32 %v1185, %v1411
  %v1474 = vmul.f32 %v1186, %v1411
  %v1475 = vmul.f32 %v1187, %v1412
  %v1476 = vmul.f32 %v1188, %v1412
  %v1477 = vld [vmem:[%s5] sm:$0xf]
  %v1478 = vld [vmem:[%s5 + $0x4] sm:$0xf]
  %v1479 = vld [vmem:[%s5 + $0x8] sm:$0xf]
  %v1480 = vld [vmem:[%s5 + $0xc] sm:$0xf]
  %v1481 = vld [vmem:[%s5 + $0x10] sm:$0xf]
  %v1482 = vld [vmem:[%s5 + $0x14] sm:$0xf]
  %v1483 = vld [vmem:[%s5 + $0x18] sm:$0xf]
  %v1484 = vld [vmem:[%s5 + $0x1c] sm:$0xf]
  %v1485 = vld [vmem:[%s5 + $0x20] sm:$0xf]
  %v1486 = vld [vmem:[%s5 + $0x24] sm:$0xf]
  %v1487 = vld [vmem:[%s5 + $0x28] sm:$0xf]
  %v1488 = vld [vmem:[%s5 + $0x2c] sm:$0xf]
  %v1489 = vld [vmem:[%s5 + $0x30] sm:$0xf]
  %v1490 = vld [vmem:[%s5 + $0x34] sm:$0xf]
  %v1491 = vld [vmem:[%s5 + $0x38] sm:$0xf]
  %v1492 = vld [vmem:[%s5 + $0x3c] sm:$0xf]
  %v1493 = vld [vmem:[%s5 + $0x40] sm:$0xf]
  %v1494 = vld [vmem:[%s5 + $0x44] sm:$0xf]
  %v1495 = vld [vmem:[%s5 + $0x48] sm:$0xf]
  %v1496 = vld [vmem:[%s5 + $0x4c] sm:$0xf]
  %v1497 = vld [vmem:[%s5 + $0x50] sm:$0xf]
  %v1498 = vld [vmem:[%s5 + $0x54] sm:$0xf]
  %v1499 = vld [vmem:[%s5 + $0x58] sm:$0xf]
  %v1500 = vld [vmem:[%s5 + $0x5c] sm:$0xf]
  %v1501 = vld [vmem:[%s5 + $0x60] sm:$0xf]
  %v1502 = vld [vmem:[%s5 + $0x64] sm:$0xf]
  %v1503 = vld [vmem:[%s5 + $0x68] sm:$0xf]
  %v1504 = vld [vmem:[%s5 + $0x6c] sm:$0xf]
  %v1505 = vld [vmem:[%s5 + $0x70] sm:$0xf]
  %v1506 = vld [vmem:[%s5 + $0x74] sm:$0xf]
  %v1507 = vld [vmem:[%s5 + $0x78] sm:$0xf]
  %v1508 = vld [vmem:[%s5 + $0x7c] sm:$0xf]
  %v1509 = vld [vmem:[%s6] sm:$0x1]
  %v1510 = vld [vmem:[%s7] sm:$0x1]
  %v1511 = vld [vmem:[%s8] sm:$0x1]
  %v1512 = vpack.c.bf16 %v1415, %v1413
  %v1513 = vpack.c.bf16 %v1416, %v1414
  %v1514 = vpack.c.bf16 %v1419, %v1417
  %v1515 = vpack.c.bf16 %v1420, %v1418
  %v1516 = vpack.c.bf16 %v1423, %v1421
  %v1517 = vpack.c.bf16 %v1424, %v1422
  %v1518 = vpack.c.bf16 %v1427, %v1425
  %v1519 = vpack.c.bf16 %v1428, %v1426
  %v1520 = vpack.c.bf16 %v1431, %v1429
  %v1521 = vpack.c.bf16 %v1432, %v1430
  %v1522 = vpack.c.bf16 %v1435, %v1433
  %v1523 = vpack.c.bf16 %v1436, %v1434
  %v1524 = vpack.c.bf16 %v1439, %v1437
  %v1525 = vpack.c.bf16 %v1440, %v1438
  %v1526 = vpack.c.bf16 %v1443, %v1441
  %v1527 = vpack.c.bf16 %v1444, %v1442
  %v1528 = vpack.c.bf16 %v1447, %v1445
  %v1529 = vpack.c.bf16 %v1448, %v1446
  %v1530 = vpack.c.bf16 %v1451, %v1449
  %v1531 = vpack.c.bf16 %v1452, %v1450
  %v1532 = vpack.c.bf16 %v1455, %v1453
  %v1533 = vpack.c.bf16 %v1456, %v1454
  %v1534 = vpack.c.bf16 %v1459, %v1457
  %v1535 = vpack.c.bf16 %v1460, %v1458
  %v1536 = vpack.c.bf16 %v1463, %v1461
  %v1537 = vpack.c.bf16 %v1464, %v1462
  %v1538 = vpack.c.bf16 %v1467, %v1465
  %v1539 = vpack.c.bf16 %v1468, %v1466
  %v1540 = vpack.c.bf16 %v1471, %v1469
  %v1541 = vpack.c.bf16 %v1472, %v1470
  %v1542 = vpack.c.bf16 %v1475, %v1473
  %v1543 = vpack.c.bf16 %v1476, %v1474
  %v1545 = vlaneseq
  %v1546 = vshrl.u32 %v1545, 7
  %v1547 = vsub.s32 0, %v1546
  %v1548 = vrot.slane %v1509, %v1547
  %v1582 = vunpack.c.l.b16 %v1477
  %v1583 = vunpack.c.l.b16 %v1478
  %v1584 = vunpack.c.l.b16 %v1479
  %v1585 = vunpack.c.l.b16 %v1480
  %v1586 = vunpack.c.l.b16 %v1481
  %v1587 = vunpack.c.l.b16 %v1482
  %v1588 = vunpack.c.l.b16 %v1483
  %v1589 = vunpack.c.l.b16 %v1484
  %v1590 = vunpack.c.l.b16 %v1485
  %v1591 = vunpack.c.l.b16 %v1486
  %v1592 = vunpack.c.l.b16 %v1487
  %v1593 = vunpack.c.l.b16 %v1488
  %v1594 = vunpack.c.l.b16 %v1489
  %v1595 = vunpack.c.l.b16 %v1490
  %v1596 = vunpack.c.l.b16 %v1491
  %v1597 = vunpack.c.l.b16 %v1492
  %v1598 = vunpack.c.l.b16 %v1493
  %v1599 = vunpack.c.l.b16 %v1494
  %v1600 = vunpack.c.l.b16 %v1495
  %v1601 = vunpack.c.l.b16 %v1496
  %v1602 = vunpack.c.l.b16 %v1497
  %v1603 = vunpack.c.l.b16 %v1498
  %v1604 = vunpack.c.l.b16 %v1499
  %v1605 = vunpack.c.l.b16 %v1500
  %v1606 = vunpack.c.l.b16 %v1501
  %v1607 = vunpack.c.l.b16 %v1502
  %v1608 = vunpack.c.l.b16 %v1503
  %v1609 = vunpack.c.l.b16 %v1504
  %v1610 = vunpack.c.l.b16 %v1505
  %v1611 = vunpack.c.l.b16 %v1506
  %v1612 = vunpack.c.l.b16 %v1507
  %v1613 = vunpack.c.l.b16 %v1508
  %v1614 = vpack.c.b16 %v1583, %v1582
  %v1615 = vpack.c.b16 %v1585, %v1584
  %v1616 = vpack.c.b16 %v1587, %v1586
  %v1617 = vpack.c.b16 %v1589, %v1588
  %v1618 = vpack.c.b16 %v1591, %v1590
  %v1619 = vpack.c.b16 %v1593, %v1592
  %v1620 = vpack.c.b16 %v1595, %v1594
  %v1621 = vpack.c.b16 %v1597, %v1596
  %v1622 = vpack.c.b16 %v1599, %v1598
  %v1623 = vpack.c.b16 %v1601, %v1600
  %v1624 = vpack.c.b16 %v1603, %v1602
  %v1625 = vpack.c.b16 %v1605, %v1604
  %v1626 = vpack.c.b16 %v1607, %v1606
  %v1627 = vpack.c.b16 %v1609, %v1608
  %v1628 = vpack.c.b16 %v1611, %v1610
  %v1629 = vpack.c.b16 %v1613, %v1612
  %1646 = vmatprep.subr.bf16.mxu0 0
  %1647 = vmatpush1.bf16.msra.mxu0 %v1614
  %1648 = vmatprep.subr.bf16.mxu0 0
  %1649 = vmatpush1.bf16.msra.mxu0 %v1615
  %1650 = vmatprep.subr.bf16.mxu0 0
  %1651 = vmatpush1.bf16.msra.mxu0 %v1616
  %1652 = vmatprep.subr.bf16.mxu0 0
  %1653 = vmatpush1.bf16.msra.mxu0 %v1617
  %1654 = vmatprep.subr.bf16.mxu0 0
  %1655 = vmatpush1.bf16.msra.mxu0 %v1618
  %1656 = vmatprep.subr.bf16.mxu0 0
  %1657 = vmatpush1.bf16.msra.mxu0 %v1619
  %1658 = vmatprep.subr.bf16.mxu0 0
  %1659 = vmatpush1.bf16.msra.mxu0 %v1620
  %1660 = vmatprep.subr.bf16.mxu0 0
  %1661 = vmatpush1.bf16.msra.mxu0 %v1621
  %1662 = vmatprep.subr.bf16.mxu0 0
  %1663 = vmatpush1.bf16.msra.mxu0 %v1622
  %1664 = vmatprep.subr.bf16.mxu0 0
  %1665 = vmatpush1.bf16.msra.mxu0 %v1623
  %1666 = vmatprep.subr.bf16.mxu0 0
  %1667 = vmatpush1.bf16.msra.mxu0 %v1624
  %1668 = vmatprep.subr.bf16.mxu0 0
  %1669 = vmatpush1.bf16.msra.mxu0 %v1625
  %1670 = vmatprep.subr.bf16.mxu0 0
  %1671 = vmatpush1.bf16.msra.mxu0 %v1626
  %1672 = vmatprep.subr.bf16.mxu0 0
  %1673 = vmatpush1.bf16.msra.mxu0 %v1627
  %1674 = vmatprep.subr.bf16.mxu0 0
  %1675 = vmatpush1.bf16.msra.mxu0 %v1628
  %1676 = vmatprep.subr.bf16.mxu0 0
  %1677 = vmatpush1.bf16.msra.mxu0 %v1629
  %1678 = vmatprep.mubr.bf16.mxu0 %v1513
  %1679 = vmatmul.mubr.bf16.gmra.mrb[0].mxu0 %v1512
  %v1680 = vpop.f32.mrb[0].mxu0
  %v1681 = vadd.f32 %v1548, %v1680
  %v1682 = vpop.f32.mrb[0].mxu0
  %v1683 = vpop.f32.mrb[0].mxu0
  %v1684 = vadd.f32 %v1548, %v1683
  %v1685 = vpop.f32.mrb[0].mxu0
  %1686 = vmatprep.mubr.bf16.mxu0 %v1515
  %1687 = vmatmul.mubr.bf16.gmra.mrb[0].mxu0 %v1514
  %v1688 = vpop.f32.mrb[0].mxu0
  %v1689 = vadd.f32 %v1548, %v1688
  %v1690 = vpop.f32.mrb[0].mxu0
  %v1691 = vpop.f32.mrb[0].mxu0
  %v1692 = vadd.f32 %v1548, %v1691
  %v1693 = vpop.f32.mrb[0].mxu0
  %1694 = vmatprep.mubr.bf16.mxu0 %v1517
  %1695 = vmatmul.mubr.bf16.gmra.mrb[0].mxu0 %v1516
  %v1696 = vpop.f32.mrb[0].mxu0
  %v1697 = vadd.f32 %v1548, %v1696
  %v1698 = vpop.f32.mrb[0].mxu0
  %v1699 = vpop.f32.mrb[0].mxu0
  %v1700 = vadd.f32 %v1548, %v1699
  %v1701 = vpop.f32.mrb[0].mxu0
  %1702 = vmatprep.mubr.bf16.mxu0 %v1519
  %1703 = vmatmul.mubr.bf16.gmra.mrb[0].mxu0 %v1518
  %v1704 = vpop.f32.mrb[0].mxu0
  %v1705 = vadd.f32 %v1548, %v1704
  %v1706 = vpop.f32.mrb[0].mxu0
  %v1707 = vpop.f32.mrb[0].mxu0
  %v1708 = vadd.f32 %v1548, %v1707
  %v1709 = vpop.f32.mrb[0].mxu0
  %1710 = vmatprep.mubr.bf16.mxu0 %v1521
  %1711 = vmatmul.mubr.bf16.gmra.mrb[0].mxu0 %v1520
  %v1712 = vpop.f32.mrb[0].mxu0
  %v1713 = vadd.f32 %v1548, %v1712
  %v1714 = vpop.f32.mrb[0].mxu0
  %v1715 = vpop.f32.mrb[0].mxu0
  %v1716 = vadd.f32 %v1548, %v1715
  %v1717 = vpop.f32.mrb[0].mxu0
  %1718 = vmatprep.mubr.bf16.mxu0 %v1523
  %1719 = vmatmul.mubr.bf16.gmra.mrb[0].mxu0 %v1522
  %v1720 = vpop.f32.mrb[0].mxu0
  %v1721 = vadd.f32 %v1548, %v1720
  %v1722 = vpop.f32.mrb[0].mxu0
  %v1723 = vpop.f32.mrb[0].mxu0
  %v1724 = vadd.f32 %v1548, %v1723
  %v1725 = vpop.f32.mrb[0].mxu0
  %1726 = vmatprep.mubr.bf16.mxu0 %v1525
  %1727 = vmatmul.mubr.bf16.gmra.mrb[0].mxu0 %v1524
  %v1728 = vpop.f32.mrb[0].mxu0
  %v1729 = vadd.f32 %v1548, %v1728
  %v1730 = vpop.f32.mrb[0].mxu0
  %v1731 = vpop.f32.mrb[0].mxu0
  %v1732 = vadd.f32 %v1548, %v1731
  %v1733 = vpop.f32.mrb[0].mxu0
  %1734 = vmatprep.mubr.bf16.mxu0 %v1527
  %1735 = vmatmul.mubr.bf16.gmra.mrb[0].mxu0 %v1526
  %v1736 = vpop.f32.mrb[0].mxu0
  %v1737 = vadd.f32 %v1548, %v1736
  %v1738 = vpop.f32.mrb[0].mxu0
  %v1739 = vpop.f32.mrb[0].mxu0
  %v1740 = vadd.f32 %v1548, %v1739
  %v1741 = vpop.f32.mrb[0].mxu0
  %1742 = vmatprep.mubr.bf16.mxu0 %v1529
  %1743 = vmatmul.mubr.bf16.gmra.mrb[0].mxu0 %v1528
  %v1744 = vpop.f32.mrb[0].mxu0
  %v1745 = vadd.f32 %v1548, %v1744
  %v1746 = vpop.f32.mrb[0].mxu0
  %v1747 = vpop.f32.mrb[0].mxu0
  %v1748 = vadd.f32 %v1548, %v1747
  %v1749 = vpop.f32.mrb[0].mxu0
  %1750 = vmatprep.mubr.bf16.mxu0 %v1531
  %1751 = vmatmul.mubr.bf16.gmra.mrb[0].mxu0 %v1530
  %v1752 = vpop.f32.mrb[0].mxu0
  %v1753 = vadd.f32 %v1548, %v1752
  %v1754 = vpop.f32.mrb[0].mxu0
  %v1755 = vpop.f32.mrb[0].mxu0
  %v1756 = vadd.f32 %v1548, %v1755
  %v1757 = vpop.f32.mrb[0].mxu0
  %1758 = vmatprep.mubr.bf16.mxu0 %v1533
  %1759 = vmatmul.mubr.bf16.gmra.mrb[0].mxu0 %v1532
  %v1760 = vpop.f32.mrb[0].mxu0
  %v1761 = vadd.f32 %v1548, %v1760
  %v1762 = vpop.f32.mrb[0].mxu0
  %v1763 = vpop.f32.mrb[0].mxu0
  %v1764 = vadd.f32 %v1548, %v1763
  %v1765 = vpop.f32.mrb[0].mxu0
  %1766 = vmatprep.mubr.bf16.mxu0 %v1535
  %1767 = vmatmul.mubr.bf16.gmra.mrb[0].mxu0 %v1534
  %v1768 = vpop.f32.mrb[0].mxu0
  %v1769 = vadd.f32 %v1548, %v1768
  %v1770 = vpop.f32.mrb[0].mxu0
  %v1771 = vpop.f32.mrb[0].mxu0
  %v1772 = vadd.f32 %v1548, %v1771
  %v1773 = vpop.f32.mrb[0].mxu0
  %1774 = vmatprep.mubr.bf16.mxu0 %v1537
  %1775 = vmatmul.mubr.bf16.gmra.mrb[0].mxu0 %v1536
  %v1776 = vpop.f32.mrb[0].mxu0
  %v1777 = vadd.f32 %v1548, %v1776
  %v1778 = vpop.f32.mrb[0].mxu0
  %v1779 = vpop.f32.mrb[0].mxu0
  %v1780 = vadd.f32 %v1548, %v1779
  %v1781 = vpop.f32.mrb[0].mxu0
  %1782 = vmatprep.mubr.bf16.mxu0 %v1539
  %1783 = vmatmul.mubr.bf16.gmra.mrb[0].mxu0 %v1538
  %v1784 = vpop.f32.mrb[0].mxu0
  %v1785 = vadd.f32 %v1548, %v1784
  %v1786 = vpop.f32.mrb[0].mxu0
  %v1787 = vpop.f32.mrb[0].mxu0
  %v1788 = vadd.f32 %v1548, %v1787
  %v1789 = vpop.f32.mrb[0].mxu0
  %1790 = vmatprep.mubr.bf16.mxu0 %v1541
  %1791 = vmatmul.mubr.bf16.gmra.mrb[0].mxu0 %v1540
  %v1792 = vpop.f32.mrb[0].mxu0
  %v1793 = vadd.f32 %v1548, %v1792
  %v1794 = vpop.f32.mrb[0].mxu0
  %v1795 = vpop.f32.mrb[0].mxu0
  %v1796 = vadd.f32 %v1548, %v1795
  %v1797 = vpop.f32.mrb[0].mxu0
  %1798 = vmatprep.mubr.bf16.mxu0 %v1543
  %1799 = vmatmul.mubr.bf16.gmra.mrb[0].mxu0 %v1542
  %v1800 = vpop.f32.mrb[0].mxu0
  %v1801 = vadd.f32 %v1548, %v1800
  %v1802 = vpop.f32.mrb[0].mxu0
  %v1803 = vpop.f32.mrb[0].mxu0
  %v1804 = vadd.f32 %v1548, %v1803
  %v1805 = vpop.f32.mrb[0].mxu0
  %1806 = vdwg.mxu0
  %v1807 = vadd.f32 %v1681, %v1684
  %v1808 = vadd.f32 %v1807, %v1689
  %v1809 = vadd.f32 %v1808, %v1692
  %v1810 = vadd.f32 %v1809, %v1697
  %v1811 = vadd.f32 %v1810, %v1700
  %v1812 = vadd.f32 %v1811, %v1705
  %v1813 = vadd.f32 %v1812, %v1708
  %v1814 = vadd.f32 %v1813, %v1713
  %v1815 = vadd.f32 %v1814, %v1716
  %v1816 = vadd.f32 %v1815, %v1721
  %v1817 = vadd.f32 %v1816, %v1724
  %v1818 = vadd.f32 %v1817, %v1729
  %v1819 = vadd.f32 %v1818, %v1732
  %v1820 = vadd.f32 %v1819, %v1737
  %v1821 = vadd.f32 %v1820, %v1740
  %v1822 = vadd.f32 %v1821, %v1745
  %v1823 = vadd.f32 %v1822, %v1748
  %v1824 = vadd.f32 %v1823, %v1753
  %v1825 = vadd.f32 %v1824, %v1756
  %v1826 = vadd.f32 %v1825, %v1761
  %v1827 = vadd.f32 %v1826, %v1764
  %v1828 = vadd.f32 %v1827, %v1769
  %v1829 = vadd.f32 %v1828, %v1772
  %v1830 = vadd.f32 %v1829, %v1777
  %v1831 = vadd.f32 %v1830, %v1780
  %v1832 = vadd.f32 %v1831, %v1785
  %v1833 = vadd.f32 %v1832, %v1788
  %v1834 = vadd.f32 %v1833, %v1793
  %v1835 = vadd.f32 %v1834, %v1796
  %v1836 = vadd.f32 %v1835, %v1801
  %v1837 = vadd.f32 %v1836, %v1804
  %v1838 = vrot.slane %v1837, 4
  %v1839 = vadd.f32 %v1837, %v1838
  %v1840 = vrot.slane %v1839, 2
  %v1841 = vadd.f32 %v1839, %v1840
  %v1842 = vrot.slane %v1841, 1
  %v1843 = vadd.f32 %v1841, %v1842
  %v1844 = vmul.f32 %v1843, %v700
  %v1845 = vsub.f32 %v1681, %v1844
  %v1846 = vsub.f32 %v1684, %v1844
  %v1847 = vsub.f32 %v1689, %v1844
  %v1848 = vsub.f32 %v1692, %v1844
  %v1849 = vsub.f32 %v1697, %v1844
  %v1850 = vsub.f32 %v1700, %v1844
  %v1851 = vsub.f32 %v1705, %v1844
  %v1852 = vsub.f32 %v1708, %v1844
  %v1853 = vsub.f32 %v1713, %v1844
  %v1854 = vsub.f32 %v1716, %v1844
  %v1855 = vsub.f32 %v1721, %v1844
  %v1856 = vsub.f32 %v1724, %v1844
  %v1857 = vsub.f32 %v1729, %v1844
  %v1858 = vsub.f32 %v1732, %v1844
  %v1859 = vsub.f32 %v1737, %v1844
  %v1860 = vsub.f32 %v1740, %v1844
  %v1861 = vsub.f32 %v1745, %v1844
  %v1862 = vsub.f32 %v1748, %v1844
  %v1863 = vsub.f32 %v1753, %v1844
  %v1864 = vsub.f32 %v1756, %v1844
  %v1865 = vsub.f32 %v1761, %v1844
  %v1866 = vsub.f32 %v1764, %v1844
  %v1867 = vsub.f32 %v1769, %v1844
  %v1868 = vsub.f32 %v1772, %v1844
  %v1869 = vsub.f32 %v1777, %v1844
  %v1870 = vsub.f32 %v1780, %v1844
  %v1871 = vsub.f32 %v1785, %v1844
  %v1872 = vsub.f32 %v1788, %v1844
  %v1873 = vsub.f32 %v1793, %v1844
  %v1874 = vsub.f32 %v1796, %v1844
  %v1875 = vsub.f32 %v1801, %v1844
  %v1876 = vsub.f32 %v1804, %v1844
  %v1877 = vmul.f32 %v1845, %v1845
  %v1878 = vmul.f32 %v1846, %v1846
  %v1879 = vmul.f32 %v1847, %v1847
  %v1880 = vmul.f32 %v1848, %v1848
  %v1881 = vmul.f32 %v1849, %v1849
  %v1882 = vmul.f32 %v1850, %v1850
  %v1883 = vmul.f32 %v1851, %v1851
  %v1884 = vmul.f32 %v1852, %v1852
  %v1885 = vmul.f32 %v1853, %v1853
  %v1886 = vmul.f32 %v1854, %v1854
  %v1887 = vmul.f32 %v1855, %v1855
  %v1888 = vmul.f32 %v1856, %v1856
  %v1889 = vmul.f32 %v1857, %v1857
  %v1890 = vmul.f32 %v1858, %v1858
  %v1891 = vmul.f32 %v1859, %v1859
  %v1892 = vmul.f32 %v1860, %v1860
  %v1893 = vmul.f32 %v1861, %v1861
  %v1894 = vmul.f32 %v1862, %v1862
  %v1895 = vmul.f32 %v1863, %v1863
  %v1896 = vmul.f32 %v1864, %v1864
  %v1897 = vmul.f32 %v1865, %v1865
  %v1898 = vmul.f32 %v1866, %v1866
  %v1899 = vmul.f32 %v1867, %v1867
  %v1900 = vmul.f32 %v1868, %v1868
  %v1901 = vmul.f32 %v1869, %v1869
  %v1902 = vmul.f32 %v1870, %v1870
  %v1903 = vmul.f32 %v1871, %v1871
  %v1904 = vmul.f32 %v1872, %v1872
  %v1905 = vmul.f32 %v1873, %v1873
  %v1906 = vmul.f32 %v1874, %v1874
  %v1907 = vmul.f32 %v1875, %v1875
  %v1908 = vmul.f32 %v1876, %v1876
  %v1909 = vadd.f32 %v1877, %v1878
  %v1910 = vadd.f32 %v1909, %v1879
  %v1911 = vadd.f32 %v1910, %v1880
  %v1912 = vadd.f32 %v1911, %v1881
  %v1913 = vadd.f32 %v1912, %v1882
  %v1914 = vadd.f32 %v1913, %v1883
  %v1915 = vadd.f32 %v1914, %v1884
  %v1916 = vadd.f32 %v1915, %v1885
  %v1917 = vadd.f32 %v1916, %v1886
  %v1918 = vadd.f32 %v1917, %v1887
  %v1919 = vadd.f32 %v1918, %v1888
  %v1920 = vadd.f32 %v1919, %v1889
  %v1921 = vadd.f32 %v1920, %v1890
  %v1922 = vadd.f32 %v1921, %v1891
  %v1923 = vadd.f32 %v1922, %v1892
  %v1924 = vadd.f32 %v1923, %v1893
  %v1925 = vadd.f32 %v1924, %v1894
  %v1926 = vadd.f32 %v1925, %v1895
  %v1927 = vadd.f32 %v1926, %v1896
  %v1928 = vadd.f32 %v1927, %v1897
  %v1929 = vadd.f32 %v1928, %v1898
  %v1930 = vadd.f32 %v1929, %v1899
  %v1931 = vadd.f32 %v1930, %v1900
  %v1932 = vadd.f32 %v1931, %v1901
  %v1933 = vadd.f32 %v1932, %v1902
  %v1934 = vadd.f32 %v1933, %v1903
  %v1935 = vadd.f32 %v1934, %v1904
  %v1936 = vadd.f32 %v1935, %v1905
  %v1937 = vadd.f32 %v1936, %v1906
  %v1938 = vadd.f32 %v1937, %v1907
  %v1939 = vadd.f32 %v1938, %v1908
  %v1940 = vrot.slane %v1939, 4
  %v1941 = vadd.f32 %v1939, %v1940
  %v1942 = vrot.slane %v1941, 2
  %v1943 = vadd.f32 %v1941, %v1942
  %v1944 = vrot.slane %v1943, 1
  %v1945 = vadd.f32 %v1943, %v1944
  %v1946 = vmul.f32 %v1945, %v700
  %v1947 = vadd.f32 %v1946, 1e-05
  %v1948 = vrsqrt.pop %v1947
  %v1949 = vmul.f32 %v1845, %v1948
  %v1950 = vmul.f32 %v1846, %v1948
  %v1951 = vmul.f32 %v1847, %v1948
  %v1952 = vmul.f32 %v1848, %v1948
  %v1953 = vmul.f32 %v1849, %v1948
  %v1954 = vmul.f32 %v1850, %v1948
  %v1955 = vmul.f32 %v1851, %v1948
  %v1956 = vmul.f32 %v1852, %v1948
  %v1957 = vmul.f32 %v1853, %v1948
  %v1958 = vmul.f32 %v1854, %v1948
  %v1959 = vmul.f32 %v1855, %v1948
  %v1960 = vmul.f32 %v1856, %v1948
  %v1961 = vmul.f32 %v1857, %v1948
  %v1962 = vmul.f32 %v1858, %v1948
  %v1963 = vmul.f32 %v1859, %v1948
  %v1964 = vmul.f32 %v1860, %v1948
  %v1965 = vmul.f32 %v1861, %v1948
  %v1966 = vmul.f32 %v1862, %v1948
  %v1967 = vmul.f32 %v1863, %v1948
  %v1968 = vmul.f32 %v1864, %v1948
  %v1969 = vmul.f32 %v1865, %v1948
  %v1970 = vmul.f32 %v1866, %v1948
  %v1971 = vmul.f32 %v1867, %v1948
  %v1972 = vmul.f32 %v1868, %v1948
  %v1973 = vmul.f32 %v1869, %v1948
  %v1974 = vmul.f32 %v1870, %v1948
  %v1975 = vmul.f32 %v1871, %v1948
  %v1976 = vmul.f32 %v1872, %v1948
  %v1977 = vmul.f32 %v1873, %v1948
  %v1978 = vmul.f32 %v1874, %v1948
  %v1979 = vmul.f32 %v1875, %v1948
  %v1980 = vmul.f32 %v1876, %v1948
  %v1982 = vlaneseq
  %v1983 = vshrl.u32 %v1982, 7
  %v1984 = vsub.s32 0, %v1983
  %v1985 = vrot.slane %v1510, %v1984
  %v1987 = vmul.f32 %v1949, %v1985
  %v1988 = vmul.f32 %v1950, %v1985
  %v1989 = vmul.f32 %v1951, %v1985
  %v1990 = vmul.f32 %v1952, %v1985
  %v1991 = vmul.f32 %v1953, %v1985
  %v1992 = vmul.f32 %v1954, %v1985
  %v1993 = vmul.f32 %v1955, %v1985
  %v1994 = vmul.f32 %v1956, %v1985
  %v1995 = vmul.f32 %v1957, %v1985
  %v1996 = vmul.f32 %v1958, %v1985
  %v1997 = vmul.f32 %v1959, %v1985
  %v1998 = vmul.f32 %v1960, %v1985
  %v1999 = vmul.f32 %v1961, %v1985
  %v2000 = vmul.f32 %v1962, %v1985
  %v2001 = vmul.f32 %v1963, %v1985
  %v2002 = vmul.f32 %v1964, %v1985
  %v2003 = vmul.f32 %v1965, %v1985
  %v2004 = vmul.f32 %v1966, %v1985
  %v2005 = vmul.f32 %v1967, %v1985
  %v2006 = vmul.f32 %v1968, %v1985
  %v2007 = vmul.f32 %v1969, %v1985
  %v2008 = vmul.f32 %v1970, %v1985
  %v2009 = vmul.f32 %v1971, %v1985
  %v2010 = vmul.f32 %v1972, %v1985
  %v2011 = vmul.f32 %v1973, %v1985
  %v2012 = vmul.f32 %v1974, %v1985
  %v2013 = vmul.f32 %v1975, %v1985
  %v2014 = vmul.f32 %v1976, %v1985
  %v2015 = vmul.f32 %v1977, %v1985
  %v2016 = vmul.f32 %v1978, %v1985
  %v2017 = vmul.f32 %v1979, %v1985
  %v2018 = vmul.f32 %v1980, %v1985
  %v2020 = vlaneseq
  %v2021 = vshrl.u32 %v2020, 7
  %v2022 = vsub.s32 0, %v2021
  %v2023 = vrot.slane %v1511, %v2022
  %v2025 = vadd.f32 %v1987, %v2023
  %v2026 = vadd.f32 %v1988, %v2023
  %v2027 = vadd.f32 %v1989, %v2023
  %v2028 = vadd.f32 %v1990, %v2023
  %v2029 = vadd.f32 %v1991, %v2023
  %v2030 = vadd.f32 %v1992, %v2023
  %v2031 = vadd.f32 %v1993, %v2023
  %v2032 = vadd.f32 %v1994, %v2023
  %v2033 = vadd.f32 %v1995, %v2023
  %v2034 = vadd.f32 %v1996, %v2023
  %v2035 = vadd.f32 %v1997, %v2023
  %v2036 = vadd.f32 %v1998, %v2023
  %v2037 = vadd.f32 %v1999, %v2023
  %v2038 = vadd.f32 %v2000, %v2023
  %v2039 = vadd.f32 %v2001, %v2023
  %v2040 = vadd.f32 %v2002, %v2023
  %v2041 = vadd.f32 %v2003, %v2023
  %v2042 = vadd.f32 %v2004, %v2023
  %v2043 = vadd.f32 %v2005, %v2023
  %v2044 = vadd.f32 %v2006, %v2023
  %v2045 = vadd.f32 %v2007, %v2023
  %v2046 = vadd.f32 %v2008, %v2023
  %v2047 = vadd.f32 %v2009, %v2023
  %v2048 = vadd.f32 %v2010, %v2023
  %v2049 = vadd.f32 %v2011, %v2023
  %v2050 = vadd.f32 %v2012, %v2023
  %v2051 = vadd.f32 %v2013, %v2023
  %v2052 = vadd.f32 %v2014, %v2023
  %v2053 = vadd.f32 %v2015, %v2023
  %v2054 = vadd.f32 %v2016, %v2023
  %v2055 = vadd.f32 %v2017, %v2023
  %v2056 = vadd.f32 %v2018, %v2023
  %v2057 = vmax.f32 %v2025, 0.0
  %v2058 = vmax.f32 %v2026, 0.0
  %v2059 = vmax.f32 %v2027, 0.0
  %v2060 = vmax.f32 %v2028, 0.0
  %v2061 = vmax.f32 %v2029, 0.0
  %v2062 = vmax.f32 %v2030, 0.0
  %v2063 = vmax.f32 %v2031, 0.0
  %v2064 = vmax.f32 %v2032, 0.0
  %v2065 = vmax.f32 %v2033, 0.0
  %v2066 = vmax.f32 %v2034, 0.0
  %v2067 = vmax.f32 %v2035, 0.0
  %v2068 = vmax.f32 %v2036, 0.0
  %v2069 = vmax.f32 %v2037, 0.0
  %v2070 = vmax.f32 %v2038, 0.0
  %v2071 = vmax.f32 %v2039, 0.0
  %v2072 = vmax.f32 %v2040, 0.0
  %v2073 = vmax.f32 %v2041, 0.0
  %v2074 = vmax.f32 %v2042, 0.0
  %v2075 = vmax.f32 %v2043, 0.0
  %v2076 = vmax.f32 %v2044, 0.0
  %v2077 = vmax.f32 %v2045, 0.0
  %v2078 = vmax.f32 %v2046, 0.0
  %v2079 = vmax.f32 %v2047, 0.0
  %v2080 = vmax.f32 %v2048, 0.0
  %v2081 = vmax.f32 %v2049, 0.0
  %v2082 = vmax.f32 %v2050, 0.0
  %v2083 = vmax.f32 %v2051, 0.0
  %v2084 = vmax.f32 %v2052, 0.0
  %v2085 = vmax.f32 %v2053, 0.0
  %v2086 = vmax.f32 %v2054, 0.0
  %v2087 = vmax.f32 %v2055, 0.0
  %v2088 = vmax.f32 %v2056, 0.0
  %v2089 = vmul.f32 %v2057, %v2057
  %v2090 = vmul.f32 %v2058, %v2058
  %v2091 = vmul.f32 %v2059, %v2059
  %v2092 = vmul.f32 %v2060, %v2060
  %v2093 = vmul.f32 %v2061, %v2061
  %v2094 = vmul.f32 %v2062, %v2062
  %v2095 = vmul.f32 %v2063, %v2063
  %v2096 = vmul.f32 %v2064, %v2064
  %v2097 = vmul.f32 %v2065, %v2065
  %v2098 = vmul.f32 %v2066, %v2066
  %v2099 = vmul.f32 %v2067, %v2067
  %v2100 = vmul.f32 %v2068, %v2068
  %v2101 = vmul.f32 %v2069, %v2069
  %v2102 = vmul.f32 %v2070, %v2070
  %v2103 = vmul.f32 %v2071, %v2071
  %v2104 = vmul.f32 %v2072, %v2072
  %v2105 = vmul.f32 %v2073, %v2073
  %v2106 = vmul.f32 %v2074, %v2074
  %v2107 = vmul.f32 %v2075, %v2075
  %v2108 = vmul.f32 %v2076, %v2076
  %v2109 = vmul.f32 %v2077, %v2077
  %v2110 = vmul.f32 %v2078, %v2078
  %v2111 = vmul.f32 %v2079, %v2079
  %v2112 = vmul.f32 %v2080, %v2080
  %v2113 = vmul.f32 %v2081, %v2081
  %v2114 = vmul.f32 %v2082, %v2082
  %v2115 = vmul.f32 %v2083, %v2083
  %v2116 = vmul.f32 %v2084, %v2084
  %v2117 = vmul.f32 %v2085, %v2085
  %v2118 = vmul.f32 %v2086, %v2086
  %v2119 = vmul.f32 %v2087, %v2087
  %v2120 = vmul.f32 %v2088, %v2088
  %2121 = vadd.xlane.f32.xlu0 %v2089
  %v2122 = vpop.xlane.xlu0 %2121
  %2123 = vadd.xlane.f32.xlu0 %v2090
  %v2124 = vpop.xlane.xlu0 %2123
  %2125 = vadd.xlane.f32.xlu0 %v2091
  %v2126 = vpop.xlane.xlu0 %2125
  %2127 = vadd.xlane.f32.xlu0 %v2092
  %v2128 = vpop.xlane.xlu0 %2127
  %2129 = vadd.xlane.f32.xlu0 %v2093
  %v2130 = vpop.xlane.xlu0 %2129
  %2131 = vadd.xlane.f32.xlu0 %v2094
  %v2132 = vpop.xlane.xlu0 %2131
  %2133 = vadd.xlane.f32.xlu0 %v2095
  %v2134 = vpop.xlane.xlu0 %2133
  %2135 = vadd.xlane.f32.xlu0 %v2096
  %v2136 = vpop.xlane.xlu0 %2135
  %2137 = vadd.xlane.f32.xlu0 %v2097
  %v2138 = vpop.xlane.xlu0 %2137
  %2139 = vadd.xlane.f32.xlu0 %v2098
  %v2140 = vpop.xlane.xlu0 %2139
  %2141 = vadd.xlane.f32.xlu0 %v2099
  %v2142 = vpop.xlane.xlu0 %2141
  %2143 = vadd.xlane.f32.xlu0 %v2100
  %v2144 = vpop.xlane.xlu0 %2143
  %2145 = vadd.xlane.f32.xlu0 %v2101
  %v2146 = vpop.xlane.xlu0 %2145
  %2147 = vadd.xlane.f32.xlu0 %v2102
  %v2148 = vpop.xlane.xlu0 %2147
  %2149 = vadd.xlane.f32.xlu0 %v2103
  %v2150 = vpop.xlane.xlu0 %2149
  %2151 = vadd.xlane.f32.xlu0 %v2104
  %v2152 = vpop.xlane.xlu0 %2151
  %2153 = vadd.xlane.f32.xlu0 %v2105
  %v2154 = vpop.xlane.xlu0 %2153
  %2155 = vadd.xlane.f32.xlu0 %v2106
  %v2156 = vpop.xlane.xlu0 %2155
  %2157 = vadd.xlane.f32.xlu0 %v2107
  %v2158 = vpop.xlane.xlu0 %2157
  %2159 = vadd.xlane.f32.xlu0 %v2108
  %v2160 = vpop.xlane.xlu0 %2159
  %2161 = vadd.xlane.f32.xlu0 %v2109
  %v2162 = vpop.xlane.xlu0 %2161
  %2163 = vadd.xlane.f32.xlu0 %v2110
  %v2164 = vpop.xlane.xlu0 %2163
  %2165 = vadd.xlane.f32.xlu0 %v2111
  %v2166 = vpop.xlane.xlu0 %2165
  %2167 = vadd.xlane.f32.xlu0 %v2112
  %v2168 = vpop.xlane.xlu0 %2167
  %2169 = vadd.xlane.f32.xlu0 %v2113
  %v2170 = vpop.xlane.xlu0 %2169
  %2171 = vadd.xlane.f32.xlu0 %v2114
  %v2172 = vpop.xlane.xlu0 %2171
  %2173 = vadd.xlane.f32.xlu0 %v2115
  %v2174 = vpop.xlane.xlu0 %2173
  %2175 = vadd.xlane.f32.xlu0 %v2116
  %v2176 = vpop.xlane.xlu0 %2175
  %2177 = vadd.xlane.f32.xlu0 %v2117
  %v2178 = vpop.xlane.xlu0 %2177
  %2179 = vadd.xlane.f32.xlu0 %v2118
  %v2180 = vpop.xlane.xlu0 %2179
  %2181 = vadd.xlane.f32.xlu0 %v2119
  %v2182 = vpop.xlane.xlu0 %2181
  %2183 = vadd.xlane.f32.xlu0 %v2120
  %v2184 = vpop.xlane.xlu0 %2183
  %v2185 = vmax.f32 %v2122, 1e-24
  %v2186 = vmax.f32 %v2124, 1e-24
  %v2187 = vmax.f32 %v2126, 1e-24
  %v2188 = vmax.f32 %v2128, 1e-24
  %v2189 = vmax.f32 %v2130, 1e-24
  %v2190 = vmax.f32 %v2132, 1e-24
  %v2191 = vmax.f32 %v2134, 1e-24
  %v2192 = vmax.f32 %v2136, 1e-24
  %v2193 = vmax.f32 %v2138, 1e-24
  %v2194 = vmax.f32 %v2140, 1e-24
  %v2195 = vmax.f32 %v2142, 1e-24
  %v2196 = vmax.f32 %v2144, 1e-24
  %v2197 = vmax.f32 %v2146, 1e-24
  %v2198 = vmax.f32 %v2148, 1e-24
  %v2199 = vmax.f32 %v2150, 1e-24
  %v2200 = vmax.f32 %v2152, 1e-24
  %v2201 = vmax.f32 %v2154, 1e-24
  %v2202 = vmax.f32 %v2156, 1e-24
  %v2203 = vmax.f32 %v2158, 1e-24
  %v2204 = vmax.f32 %v2160, 1e-24
  %v2205 = vmax.f32 %v2162, 1e-24
  %v2206 = vmax.f32 %v2164, 1e-24
  %v2207 = vmax.f32 %v2166, 1e-24
  %v2208 = vmax.f32 %v2168, 1e-24
  %v2209 = vmax.f32 %v2170, 1e-24
  %v2210 = vmax.f32 %v2172, 1e-24
  %v2211 = vmax.f32 %v2174, 1e-24
  %v2212 = vmax.f32 %v2176, 1e-24
  %v2213 = vmax.f32 %v2178, 1e-24
  %v2214 = vmax.f32 %v2180, 1e-24
  %v2215 = vmax.f32 %v2182, 1e-24
  %v2216 = vmax.f32 %v2184, 1e-24
  %v2217 = vrsqrt.pop %v2185
  %v2218 = vrsqrt.pop %v2186
  %v2219 = vrsqrt.pop %v2187
  %v2220 = vrsqrt.pop %v2188
  %v2221 = vrsqrt.pop %v2189
  %v2222 = vrsqrt.pop %v2190
  %v2223 = vrsqrt.pop %v2191
  %v2224 = vrsqrt.pop %v2192
  %v2225 = vrsqrt.pop %v2193
  %v2226 = vrsqrt.pop %v2194
  %v2227 = vrsqrt.pop %v2195
  %v2228 = vrsqrt.pop %v2196
  %v2229 = vrsqrt.pop %v2197
  %v2230 = vrsqrt.pop %v2198
  %v2231 = vrsqrt.pop %v2199
  %v2232 = vrsqrt.pop %v2200
  %v2233 = vrsqrt.pop %v2201
  %v2234 = vrsqrt.pop %v2202
  %v2235 = vrsqrt.pop %v2203
  %v2236 = vrsqrt.pop %v2204
  %v2237 = vrsqrt.pop %v2205
  %v2238 = vrsqrt.pop %v2206
  %v2239 = vrsqrt.pop %v2207
  %v2240 = vrsqrt.pop %v2208
  %v2241 = vrsqrt.pop %v2209
  %v2242 = vrsqrt.pop %v2210
  %v2243 = vrsqrt.pop %v2211
  %v2244 = vrsqrt.pop %v2212
  %v2245 = vrsqrt.pop %v2213
  %v2246 = vrsqrt.pop %v2214
  %v2247 = vrsqrt.pop %v2215
  %v2248 = vrsqrt.pop %v2216
  %v2249 = vmul.f32 %v2057, %v2217
  %v2250 = vmul.f32 %v2058, %v2218
  %v2251 = vmul.f32 %v2059, %v2219
  %v2252 = vmul.f32 %v2060, %v2220
  %v2253 = vmul.f32 %v2061, %v2221
  %v2254 = vmul.f32 %v2062, %v2222
  %v2255 = vmul.f32 %v2063, %v2223
  %v2256 = vmul.f32 %v2064, %v2224
  %v2257 = vmul.f32 %v2065, %v2225
  %v2258 = vmul.f32 %v2066, %v2226
  %v2259 = vmul.f32 %v2067, %v2227
  %v2260 = vmul.f32 %v2068, %v2228
  %v2261 = vmul.f32 %v2069, %v2229
  %v2262 = vmul.f32 %v2070, %v2230
  %v2263 = vmul.f32 %v2071, %v2231
  %v2264 = vmul.f32 %v2072, %v2232
  %v2265 = vmul.f32 %v2073, %v2233
  %v2266 = vmul.f32 %v2074, %v2234
  %v2267 = vmul.f32 %v2075, %v2235
  %v2268 = vmul.f32 %v2076, %v2236
  %v2269 = vmul.f32 %v2077, %v2237
  %v2270 = vmul.f32 %v2078, %v2238
  %v2271 = vmul.f32 %v2079, %v2239
  %v2272 = vmul.f32 %v2080, %v2240
  %v2273 = vmul.f32 %v2081, %v2241
  %v2274 = vmul.f32 %v2082, %v2242
  %v2275 = vmul.f32 %v2083, %v2243
  %v2276 = vmul.f32 %v2084, %v2244
  %v2277 = vmul.f32 %v2085, %v2245
  %v2278 = vmul.f32 %v2086, %v2246
  %v2279 = vmul.f32 %v2087, %v2247
  %v2280 = vmul.f32 %v2088, %v2248
  %2281 = vst [vmem:[%s9] sm:$0xff] %v2249
  %2282 = vst [vmem:[%s9 + $0x8] sm:$0xff] %v2250
  %2283 = vst [vmem:[%s9 + $0x10] sm:$0xff] %v2251
  %2284 = vst [vmem:[%s9 + $0x18] sm:$0xff] %v2252
  %2285 = vst [vmem:[%s9 + $0x20] sm:$0xff] %v2253
  %2286 = vst [vmem:[%s9 + $0x28] sm:$0xff] %v2254
  %2287 = vst [vmem:[%s9 + $0x30] sm:$0xff] %v2255
  %2288 = vst [vmem:[%s9 + $0x38] sm:$0xff] %v2256
  %2289 = vst [vmem:[%s9 + $0x40] sm:$0xff] %v2257
  %2290 = vst [vmem:[%s9 + $0x48] sm:$0xff] %v2258
  %2291 = vst [vmem:[%s9 + $0x50] sm:$0xff] %v2259
  %2292 = vst [vmem:[%s9 + $0x58] sm:$0xff] %v2260
  %2293 = vst [vmem:[%s9 + $0x60] sm:$0xff] %v2261
  %2294 = vst [vmem:[%s9 + $0x68] sm:$0xff] %v2262
  %2295 = vst [vmem:[%s9 + $0x70] sm:$0xff] %v2263
  %2296 = vst [vmem:[%s9 + $0x78] sm:$0xff] %v2264
  %2297 = vst [vmem:[%s9 + $0x80] sm:$0xff] %v2265
  %2298 = vst [vmem:[%s9 + $0x88] sm:$0xff] %v2266
  %2299 = vst [vmem:[%s9 + $0x90] sm:$0xff] %v2267
  %2300 = vst [vmem:[%s9 + $0x98] sm:$0xff] %v2268
  %2301 = vst [vmem:[%s9 + $0xa0] sm:$0xff] %v2269
  %2302 = vst [vmem:[%s9 + $0xa8] sm:$0xff] %v2270
  %2303 = vst [vmem:[%s9 + $0xb0] sm:$0xff] %v2271
  %2304 = vst [vmem:[%s9 + $0xb8] sm:$0xff] %v2272
  %2305 = vst [vmem:[%s9 + $0xc0] sm:$0xff] %v2273
  %2306 = vst [vmem:[%s9 + $0xc8] sm:$0xff] %v2274
  %2307 = vst [vmem:[%s9 + $0xd0] sm:$0xff] %v2275
  %2308 = vst [vmem:[%s9 + $0xd8] sm:$0xff] %v2276
  %2309 = vst [vmem:[%s9 + $0xe0] sm:$0xff] %v2277
  %2310 = vst [vmem:[%s9 + $0xe8] sm:$0xff] %v2278
  %2311 = vst [vmem:[%s9 + $0xf0] sm:$0xff] %v2279
  %2312 = vst [vmem:[%s9 + $0xf8] sm:$0xff] %v2280
  %v2313 = vpack.c.bf16 %v2250, %v2249
  %v2314 = vpack.c.bf16 %v2252, %v2251
  %v2315 = vpack.c.bf16 %v2254, %v2253
  %v2316 = vpack.c.bf16 %v2256, %v2255
  %v2317 = vpack.c.bf16 %v2258, %v2257
  %v2318 = vpack.c.bf16 %v2260, %v2259
  %v2319 = vpack.c.bf16 %v2262, %v2261
  %v2320 = vpack.c.bf16 %v2264, %v2263
  %v2321 = vpack.c.bf16 %v2266, %v2265
  %v2322 = vpack.c.bf16 %v2268, %v2267
  %v2323 = vpack.c.bf16 %v2270, %v2269
  %v2324 = vpack.c.bf16 %v2272, %v2271
  %v2325 = vpack.c.bf16 %v2274, %v2273
  %v2326 = vpack.c.bf16 %v2276, %v2275
  %v2327 = vpack.c.bf16 %v2278, %v2277
  %v2328 = vpack.c.bf16 %v2280, %v2279
  %v2345 = vunpack.c.l.b16 %v2313
  %v2346 = vunpack.c.h.b16 %v2313
  %v2347 = vunpack.c.l.b16 %v2314
  %v2348 = vunpack.c.h.b16 %v2314
  %v2349 = vunpack.c.l.b16 %v2315
  %v2350 = vunpack.c.h.b16 %v2315
  %v2351 = vunpack.c.l.b16 %v2316
  %v2352 = vunpack.c.h.b16 %v2316
  %v2353 = vunpack.c.l.b16 %v2317
  %v2354 = vunpack.c.h.b16 %v2317
  %v2355 = vunpack.c.l.b16 %v2318
  %v2356 = vunpack.c.h.b16 %v2318
  %v2357 = vunpack.c.l.b16 %v2319
  %v2358 = vunpack.c.h.b16 %v2319
  %v2359 = vunpack.c.l.b16 %v2320
  %v2360 = vunpack.c.h.b16 %v2320
  %v2361 = vunpack.c.l.b16 %v2321
  %v2362 = vunpack.c.h.b16 %v2321
  %v2363 = vunpack.c.l.b16 %v2322
  %v2364 = vunpack.c.h.b16 %v2322
  %v2365 = vunpack.c.l.b16 %v2323
  %v2366 = vunpack.c.h.b16 %v2323
  %v2367 = vunpack.c.l.b16 %v2324
  %v2368 = vunpack.c.h.b16 %v2324
  %v2369 = vunpack.c.l.b16 %v2325
  %v2370 = vunpack.c.h.b16 %v2325
  %v2371 = vunpack.c.l.b16 %v2326
  %v2372 = vunpack.c.h.b16 %v2326
  %v2373 = vunpack.c.l.b16 %v2327
  %v2374 = vunpack.c.h.b16 %v2327
  %v2375 = vunpack.c.l.b16 %v2328
  %v2376 = vunpack.c.h.b16 %v2328
  %v2377 = vpack.c.b16 %v2345, %v2345
  %v2378 = vpack.c.b16 %v2346, %v2346
  %v2379 = vpack.c.b16 %v2347, %v2347
  %v2380 = vpack.c.b16 %v2348, %v2348
  %v2381 = vpack.c.b16 %v2349, %v2349
  %v2382 = vpack.c.b16 %v2350, %v2350
  %v2383 = vpack.c.b16 %v2351, %v2351
  %v2384 = vpack.c.b16 %v2352, %v2352
  %v2385 = vpack.c.b16 %v2353, %v2353
  %v2386 = vpack.c.b16 %v2354, %v2354
  %v2387 = vpack.c.b16 %v2355, %v2355
  %v2388 = vpack.c.b16 %v2356, %v2356
  %v2389 = vpack.c.b16 %v2357, %v2357
  %v2390 = vpack.c.b16 %v2358, %v2358
  %v2391 = vpack.c.b16 %v2359, %v2359
  %v2392 = vpack.c.b16 %v2360, %v2360
  %v2393 = vpack.c.b16 %v2361, %v2361
  %v2394 = vpack.c.b16 %v2362, %v2362
  %v2395 = vpack.c.b16 %v2363, %v2363
  %v2396 = vpack.c.b16 %v2364, %v2364
  %v2397 = vpack.c.b16 %v2365, %v2365
  %v2398 = vpack.c.b16 %v2366, %v2366
  %v2399 = vpack.c.b16 %v2367, %v2367
  %v2400 = vpack.c.b16 %v2368, %v2368
  %v2401 = vpack.c.b16 %v2369, %v2369
  %v2402 = vpack.c.b16 %v2370, %v2370
  %v2403 = vpack.c.b16 %v2371, %v2371
  %v2404 = vpack.c.b16 %v2372, %v2372
  %v2405 = vpack.c.b16 %v2373, %v2373
  %v2406 = vpack.c.b16 %v2374, %v2374
  %v2407 = vpack.c.b16 %v2375, %v2375
  %v2408 = vpack.c.b16 %v2376, %v2376
  %2441 = vst [vmem:[%s10] sm:$0xf] %v2377
  %2442 = vst [vmem:[%s10 + $0x4] sm:$0xf] %v2378
  %2443 = vst [vmem:[%s10 + $0x8] sm:$0xf] %v2379
  %2444 = vst [vmem:[%s10 + $0xc] sm:$0xf] %v2380
  %2445 = vst [vmem:[%s10 + $0x10] sm:$0xf] %v2381
  %2446 = vst [vmem:[%s10 + $0x14] sm:$0xf] %v2382
  %2447 = vst [vmem:[%s10 + $0x18] sm:$0xf] %v2383
  %2448 = vst [vmem:[%s10 + $0x1c] sm:$0xf] %v2384
  %2449 = vst [vmem:[%s10 + $0x20] sm:$0xf] %v2385
  %2450 = vst [vmem:[%s10 + $0x24] sm:$0xf] %v2386
  %2451 = vst [vmem:[%s10 + $0x28] sm:$0xf] %v2387
  %2452 = vst [vmem:[%s10 + $0x2c] sm:$0xf] %v2388
  %2453 = vst [vmem:[%s10 + $0x30] sm:$0xf] %v2389
  %2454 = vst [vmem:[%s10 + $0x34] sm:$0xf] %v2390
  %2455 = vst [vmem:[%s10 + $0x38] sm:$0xf] %v2391
  %2456 = vst [vmem:[%s10 + $0x3c] sm:$0xf] %v2392
  %2457 = vst [vmem:[%s10 + $0x40] sm:$0xf] %v2393
  %2458 = vst [vmem:[%s10 + $0x44] sm:$0xf] %v2394
  %2459 = vst [vmem:[%s10 + $0x48] sm:$0xf] %v2395
  %2460 = vst [vmem:[%s10 + $0x4c] sm:$0xf] %v2396
  %2461 = vst [vmem:[%s10 + $0x50] sm:$0xf] %v2397
  %2462 = vst [vmem:[%s10 + $0x54] sm:$0xf] %v2398
  %2463 = vst [vmem:[%s10 + $0x58] sm:$0xf] %v2399
  %2464 = vst [vmem:[%s10 + $0x5c] sm:$0xf] %v2400
  %2465 = vst [vmem:[%s10 + $0x60] sm:$0xf] %v2401
  %2466 = vst [vmem:[%s10 + $0x64] sm:$0xf] %v2402
  %2467 = vst [vmem:[%s10 + $0x68] sm:$0xf] %v2403
  %2468 = vst [vmem:[%s10 + $0x6c] sm:$0xf] %v2404
  %2469 = vst [vmem:[%s10 + $0x70] sm:$0xf] %v2405
  %2470 = vst [vmem:[%s10 + $0x74] sm:$0xf] %v2406
  %2471 = vst [vmem:[%s10 + $0x78] sm:$0xf] %v2407
  %2472 = vst [vmem:[%s10 + $0x7c] sm:$0xf] %v2408
  // Predicated region
  $region38: #{individual_mlp_encoder.3} parent=0 // pred_check
    _
  $region39: #{individual_mlp_encoder.3} parent=0 // pred_check_branch
    %2474 = sbr.rel (0) target = $region41
  $region40: #{individual_mlp_encoder.3} parent=0 // pred_region
    _
  $region41: #{individual_mlp_encoder.3} parent=0 // pred_fallthru
    _
  // Predicated region
  $region42: #{individual_mlp_encoder.3} parent=0 // pred_check
    _
  $region43: #{individual_mlp_encoder.3} parent=0 // pred_check_branch
    %2476 = sbr.rel (0) target = $region45
  $region44: #{individual_mlp_encoder.3} parent=0 // pred_region
    _
  $region45: #{individual_mlp_encoder.3} parent=0 // pred_fallthru
    _
  // Predicated region
  $region46: #{individual_mlp_encoder.3} parent=0 // pred_check
    _
  $region47: #{individual_mlp_encoder.3} parent=0 // pred_check_branch
    %2478 = sbr.rel (0) target = $region49
  $region48: #{individual_mlp_encoder.3} parent=0 // pred_region
    _
  $region49: #{individual_mlp_encoder.3} parent=0 // pred_fallthru
    _
  // Predicated region
  $region50: #{individual_mlp_encoder.3} parent=0 // pred_check
    _
  $region51: #{individual_mlp_encoder.3} parent=0 // pred_check_branch
    %2480 = sbr.rel (0) target = $region53
  $region52: #{individual_mlp_encoder.3} parent=0 // pred_region
    _
  $region53: #{individual_mlp_encoder.3} parent=0 // pred_fallthru
    _

// kernel: individual_mlp_encoder.5
$region0: #{individual_mlp_encoder.5}
  #allocation0 [shape = 'u32[]', space=smem, size = 0x4, offset = 0x4, fixed_abs, tag = 'smem constant byte address 0x4 - core index']
  #allocation1 [shape = 'u32[144,128]{1,0:T(1,128)}', space=vmem, size = 0x12000, scoped, tag = 'internal scratch']
  %s0 = inlined_call_operand.vmem [shape: f32[256,256], index: 0, kind: input, shape index: {}]
  %s1 = inlined_call_operand.vmem [shape: f32[256,128], index: 1, kind: input, shape index: {}]
  %s2 = inlined_call_operand.vmem [shape: bf16[128,256], index: 2, kind: input, shape index: {}]
  %s3 = inlined_call_operand.vmem [shape: f32[1,256], index: 3, kind: input, shape index: {}]
  %s4 = inlined_call_operand.vmem [shape: f32[1,256], index: 4, kind: input, shape index: {}]
  %s5 = inlined_call_operand.vmem [shape: f32[1,256], index: 5, kind: input, shape index: {}]
  %s6 = inlined_call_operand.vmem [shape: bf16[256,256], index: 6, kind: input, shape index: {}]
  %s7 = inlined_call_operand.vmem [shape: f32[1,256], index: 7, kind: input, shape index: {}]
  %s8 = inlined_call_operand.vmem [shape: f32[1,256], index: 8, kind: input, shape index: {}]
  %s9 = inlined_call_operand.vmem [shape: f32[1,256], index: 9, kind: input, shape index: {}]
  %s10 = inlined_call_operand.hbm [shape: f32[1], index: 10, kind: output, shape index: {}]
  %s11 = sld [smem:[#allocation0]]
  $region50: #{individual_mlp_encoder.5} parent=0
    _
  %s13 = ssub.s32 1, %s11
  %s14 = scalar_select 0, %s13, %s11
  $region1: #{individual_mlp_encoder.5} parent=0
    #allocation2 [shape = 'u8[512]{0}', space=smem, size = 0x200, scoped, tag = 'output window, operand 0, single buffered']
    #allocation3 [shape = 's32[1]{0}', space=sflag, size = 0x4, scoped, tag = 'scoped memory for individual_mlp_encoder.5']
    %15 = vsyncpa [#allocation3], 0
    // Predicated region
    $region2: #{individual_mlp_encoder.5} parent=1 // pred_check
      _
    $region3: #{individual_mlp_encoder.5} parent=1 // pred_check_branch
      %17 = sbr.rel (0) target = $region5
    $region4: #{individual_mlp_encoder.5} parent=1 // pred_region
      _
    $region5: #{individual_mlp_encoder.5} parent=1 // pred_fallthru
      _
    // Predicated region
    $region6: #{individual_mlp_encoder.5} parent=1 // pred_check
      _
    $region7: #{individual_mlp_encoder.5} parent=1 // pred_check_branch
      %19 = sbr.rel (0) target = $region9
    $region8: #{individual_mlp_encoder.5} parent=1 // pred_region
      _
    $region9: #{individual_mlp_encoder.5} parent=1 // pred_fallthru
      _
    // Predicated region
    $region10: #{individual_mlp_encoder.5} parent=1 // pred_check
      _
    $region11: #{individual_mlp_encoder.5} parent=1 // pred_check_branch
      %21 = sbr.rel (0) target = $region13
    $region12: #{individual_mlp_encoder.5} parent=1 // pred_region
      _
    $region13: #{individual_mlp_encoder.5} parent=1 // pred_fallthru
      _
    // Predicated region
    $region14: #{individual_mlp_encoder.5} parent=1 // pred_check
      _
    $region15: #{individual_mlp_encoder.5} parent=1 // pred_check_branch
      %23 = sbr.rel (0) target = $region17
    $region16: #{individual_mlp_encoder.5} parent=1 // pred_region
      _
    $region17: #{individual_mlp_encoder.5} parent=1 // pred_fallthru
      _
    // Predicated region
    $region18: #{individual_mlp_encoder.5} parent=1 // pred_check
      _
    $region19: #{individual_mlp_encoder.5} parent=1 // pred_check_branch
      %25 = sbr.rel (0) target = $region21
    $region20: #{individual_mlp_encoder.5} parent=1 // pred_region
      _
    $region21: #{individual_mlp_encoder.5} parent=1 // pred_fallthru
      _
    // Predicated region
    $region22: #{individual_mlp_encoder.5} parent=1 // pred_check
      _
    $region23: #{individual_mlp_encoder.5} parent=1 // pred_check_branch
      %27 = sbr.rel (0) target = $region25
    $region24: #{individual_mlp_encoder.5} parent=1 // pred_region
      _
    $region25: #{individual_mlp_encoder.5} parent=1 // pred_fallthru
      _
    // Predicated region
    $region26: #{individual_mlp_encoder.5} parent=1 // pred_check
      _
    $region27: #{individual_mlp_encoder.5} parent=1 // pred_check_branch
      %29 = sbr.rel (0) target = $region29
    $region28: #{individual_mlp_encoder.5} parent=1 // pred_region
      _
    $region29: #{individual_mlp_encoder.5} parent=1 // pred_fallthru
      _
    // Predicated region
    $region30: #{individual_mlp_encoder.5} parent=1 // pred_check
      _
    $region31: #{individual_mlp_encoder.5} parent=1 // pred_check_branch
      %31 = sbr.rel (0) target = $region33
    $region32: #{individual_mlp_encoder.5} parent=1 // pred_region
      _
    $region33: #{individual_mlp_encoder.5} parent=1 // pred_fallthru
      _
    // Predicated region
    $region34: #{individual_mlp_encoder.5} parent=1 // pred_check
      _
    $region35: #{individual_mlp_encoder.5} parent=1 // pred_check_branch
      %33 = sbr.rel (0) target = $region37
    $region36: #{individual_mlp_encoder.5} parent=1 // pred_region
      _
    $region37: #{individual_mlp_encoder.5} parent=1 // pred_fallthru
      _
    // Predicated region
    $region38: #{individual_mlp_encoder.5} parent=1 // pred_check
      _
    $region39: #{individual_mlp_encoder.5} parent=1 // pred_check_branch
      %35 = sbr.rel (0) target = $region41
    $region40: #{individual_mlp_encoder.5} parent=1 // pred_region
      _
    $region41: #{individual_mlp_encoder.5} parent=1 // pred_fallthru
      _
    %v37 = vld [vmem:[%s1] sm:$0xff]
    %v38 = vld [vmem:[%s1 + $0x8] sm:$0xff]
    %v39 = vld [vmem:[%s1 + $0x10] sm:$0xff]
    %v40 = vld [vmem:[%s1 + $0x18] sm:$0xff]
    %v41 = vld [vmem:[%s1 + $0x20] sm:$0xff]
    %v42 = vld [vmem:[%s1 + $0x28] sm:$0xff]
    %v43 = vld [vmem:[%s1 + $0x30] sm:$0xff]
    %v44 = vld [vmem:[%s1 + $0x38] sm:$0xff]
    %v45 = vld [vmem:[%s1 + $0x40] sm:$0xff]
    %v46 = vld [vmem:[%s1 + $0x48] sm:$0xff]
    %v47 = vld [vmem:[%s1 + $0x50] sm:$0xff]
    %v48 = vld [vmem:[%s1 + $0x58] sm:$0xff]
    %v49 = vld [vmem:[%s1 + $0x60] sm:$0xff]
    %v50 = vld [vmem:[%s1 + $0x68] sm:$0xff]
    %v51 = vld [vmem:[%s1 + $0x70] sm:$0xff]
    %v52 = vld [vmem:[%s1 + $0x78] sm:$0xff]
    %v53 = vld [vmem:[%s1 + $0x80] sm:$0xff]
    %v54 = vld [vmem:[%s1 + $0x88] sm:$0xff]
    %v55 = vld [vmem:[%s1 + $0x90] sm:$0xff]
    %v56 = vld [vmem:[%s1 + $0x98] sm:$0xff]
    %v57 = vld [vmem:[%s1 + $0xa0] sm:$0xff]
    %v58 = vld [vmem:[%s1 + $0xa8] sm:$0xff]
    %v59 = vld [vmem:[%s1 + $0xb0] sm:$0xff]
    %v60 = vld [vmem:[%s1 + $0xb8] sm:$0xff]
    %v61 = vld [vmem:[%s1 + $0xc0] sm:$0xff]
    %v62 = vld [vmem:[%s1 + $0xc8] sm:$0xff]
    %v63 = vld [vmem:[%s1 + $0xd0] sm:$0xff]
    %v64 = vld [vmem:[%s1 + $0xd8] sm:$0xff]
    %v65 = vld [vmem:[%s1 + $0xe0] sm:$0xff]
    %v66 = vld [vmem:[%s1 + $0xe8] sm:$0xff]
    %v67 = vld [vmem:[%s1 + $0xf0] sm:$0xff]
    %v68 = vld [vmem:[%s1 + $0xf8] sm:$0xff]
    %v69 = vld [vmem:[%s2] sm:$0xff]
    %v70 = vld [vmem:[%s2 + $0x8] sm:$0xff]
    %v71 = vld [vmem:[%s2 + $0x10] sm:$0xff]
    %v72 = vld [vmem:[%s2 + $0x18] sm:$0xff]
    %v73 = vld [vmem:[%s2 + $0x20] sm:$0xff]
    %v74 = vld [vmem:[%s2 + $0x28] sm:$0xff]
    %v75 = vld [vmem:[%s2 + $0x30] sm:$0xff]
    %v76 = vld [vmem:[%s2 + $0x38] sm:$0xff]
    %v77 = vld [vmem:[%s2 + $0x40] sm:$0xff]
    %v78 = vld [vmem:[%s2 + $0x48] sm:$0xff]
    %v79 = vld [vmem:[%s2 + $0x50] sm:$0xff]
    %v80 = vld [vmem:[%s2 + $0x58] sm:$0xff]
    %v81 = vld [vmem:[%s2 + $0x60] sm:$0xff]
    %v82 = vld [vmem:[%s2 + $0x68] sm:$0xff]
    %v83 = vld [vmem:[%s2 + $0x70] sm:$0xff]
    %v84 = vld [vmem:[%s2 + $0x78] sm:$0xff]
    %v85 = vld [vmem:[%s3] sm:$0x3]
    %v86 = vld [vmem:[%s4] sm:$0x3]
    %v87 = vld [vmem:[%s5] sm:$0x3]
    %v88 = vpack.c.bf16 %v38, %v37
    %v89 = vpack.c.bf16 %v40, %v39
    %v90 = vpack.c.bf16 %v42, %v41
    %v91 = vpack.c.bf16 %v44, %v43
    %v92 = vpack.c.bf16 %v46, %v45
    %v93 = vpack.c.bf16 %v48, %v47
    %v94 = vpack.c.bf16 %v50, %v49
    %v95 = vpack.c.bf16 %v52, %v51
    %v96 = vpack.c.bf16 %v54, %v53
    %v97 = vpack.c.bf16 %v56, %v55
    %v98 = vpack.c.bf16 %v58, %v57
    %v99 = vpack.c.bf16 %v60, %v59
    %v100 = vpack.c.bf16 %v62, %v61
    %v101 = vpack.c.bf16 %v64, %v63
    %v102 = vpack.c.bf16 %v66, %v65
    %v103 = vpack.c.bf16 %v68, %v67
    %v105 = vlaneseq
    %v106 = vshrl.u32 %v105, 7
    %v107 = vsub.s32 0, %v106
    %v108 = vrot.slane %v85, %v107
    %v109 = vlaneseq
    %v110 = vshrl.u32 %v109, 7
    %v111 = vsub.s32 1, %v110
    %v112 = vrot.slane %v85, %v111
    %v131 = vunpack.c.l.b16 %v69
    %v132 = vunpack.c.h.b16 %v69
    %v133 = vunpack.c.l.b16 %v70
    %v134 = vunpack.c.h.b16 %v70
    %v135 = vunpack.c.l.b16 %v71
    %v136 = vunpack.c.h.b16 %v71
    %v137 = vunpack.c.l.b16 %v72
    %v138 = vunpack.c.h.b16 %v72
    %v139 = vunpack.c.l.b16 %v73
    %v140 = vunpack.c.h.b16 %v73
    %v141 = vunpack.c.l.b16 %v74
    %v142 = vunpack.c.h.b16 %v74
    %v143 = vunpack.c.l.b16 %v75
    %v144 = vunpack.c.h.b16 %v75
    %v145 = vunpack.c.l.b16 %v76
    %v146 = vunpack.c.h.b16 %v76
    %v147 = vunpack.c.l.b16 %v77
    %v148 = vunpack.c.h.b16 %v77
    %v149 = vunpack.c.l.b16 %v78
    %v150 = vunpack.c.h.b16 %v78
    %v151 = vunpack.c.l.b16 %v79
    %v152 = vunpack.c.h.b16 %v79
    %v153 = vunpack.c.l.b16 %v80
    %v154 = vunpack.c.h.b16 %v80
    %v155 = vunpack.c.l.b16 %v81
    %v156 = vunpack.c.h.b16 %v81
    %v157 = vunpack.c.l.b16 %v82
    %v158 = vunpack.c.h.b16 %v82
    %v159 = vunpack.c.l.b16 %v83
    %v160 = vunpack.c.h.b16 %v83
    %v161 = vunpack.c.l.b16 %v84
    %v162 = vunpack.c.h.b16 %v84
    %v163 = vpack.c.b16 %v133, %v131
    %v164 = vpack.c.b16 %v134, %v132
    %v165 = vpack.c.b16 %v137, %v135
    %v166 = vpack.c.b16 %v138, %v136
    %v167 = vpack.c.b16 %v141, %v139
    %v168 = vpack.c.b16 %v142, %v140
    %v169 = vpack.c.b16 %v145, %v143
    %v170 = vpack.c.b16 %v146, %v144
    %v171 = vpack.c.b16 %v149, %v147
    %v172 = vpack.c.b16 %v150, %v148
    %v173 = vpack.c.b16 %v153, %v151
    %v174 = vpack.c.b16 %v154, %v152
    %v175 = vpack.c.b16 %v157, %v155
    %v176 = vpack.c.b16 %v158, %v156
    %v177 = vpack.c.b16 %v161, %v159
    %v178 = vpack.c.b16 %v162, %v160
    %195 = vmatprep.subr.bf16.mxu0 %v164
    %196 = vmatpush1.bf16.msra.mxu0 %v163
    %197 = vmatprep.subr.bf16.mxu0 %v166
    %198 = vmatpush1.bf16.msra.mxu0 %v165
    %199 = vmatprep.subr.bf16.mxu0 %v168
    %200 = vmatpush1.bf16.msra.mxu0 %v167
    %201 = vmatprep.subr.bf16.mxu0 %v170
    %202 = vmatpush1.bf16.msra.mxu0 %v169
    %203 = vmatprep.subr.bf16.mxu0 %v172
    %204 = vmatpush1.bf16.msra.mxu0 %v171
    %205 = vmatprep.subr.bf16.mxu0 %v174
    %206 = vmatpush1.bf16.msra.mxu0 %v173
    %207 = vmatprep.subr.bf16.mxu0 %v176
    %208 = vmatpush1.bf16.msra.mxu0 %v175
    %209 = vmatprep.subr.bf16.mxu0 %v178
    %210 = vmatpush1.bf16.msra.mxu0 %v177
    %211 = vmatprep.subr.bf16.mxu0 0
    %212 = vmatpush1.bf16.msra.mxu0 0
    %213 = vmatprep.subr.bf16.mxu0 0
    %214 = vmatpush1.bf16.msra.mxu0 0
    %215 = vmatprep.subr.bf16.mxu0 0
    %216 = vmatpush1.bf16.msra.mxu0 0
    %217 = vmatprep.subr.bf16.mxu0 0
    %218 = vmatpush1.bf16.msra.mxu0 0
    %219 = vmatprep.subr.bf16.mxu0 0
    %220 = vmatpush1.bf16.msra.mxu0 0
    %221 = vmatprep.subr.bf16.mxu0 0
    %222 = vmatpush1.bf16.msra.mxu0 0
    %223 = vmatprep.subr.bf16.mxu0 0
    %224 = vmatpush1.bf16.msra.mxu0 0
    %225 = vmatprep.subr.bf16.mxu0 0
    %226 = vmatpush1.bf16.msra.mxu0 0
    %227 = vmatprep.mubr.bf16.mxu0 0
    %228 = vmatmul.mubr.bf16.gmra.mrb[0].mxu0 %v88
    %v229 = vpop.f32.mrb[0].mxu0
    %v230 = vadd.f32 %v108, %v229
    %v231 = vpop.f32.mrb[0].mxu0
    %v232 = vadd.f32 %v112, %v231
    %v233 = vpop.f32.mrb[0].mxu0
    %v234 = vadd.f32 %v108, %v233
    %v235 = vpop.f32.mrb[0].mxu0
    %v236 = vadd.f32 %v112, %v235
    %237 = vmatprep.mubr.bf16.mxu0 0
    %238 = vmatmul.mubr.bf16.gmra.mrb[0].mxu0 %v89
    %v239 = vpop.f32.mrb[0].mxu0
    %v240 = vadd.f32 %v108, %v239
    %v241 = vpop.f32.mrb[0].mxu0
    %v242 = vadd.f32 %v112, %v241
    %v243 = vpop.f32.mrb[0].mxu0
    %v244 = vadd.f32 %v108, %v243
    %v245 = vpop.f32.mrb[0].mxu0
    %v246 = vadd.f32 %v112, %v245
    %247 = vmatprep.mubr.bf16.mxu0 0
    %248 = vmatmul.mubr.bf16.gmra.mrb[0].mxu0 %v90
    %v249 = vpop.f32.mrb[0].mxu0
    %v250 = vadd.f32 %v108, %v249
    %v251 = vpop.f32.mrb[0].mxu0
    %v252 = vadd.f32 %v112, %v251
    %v253 = vpop.f32.mrb[0].mxu0
    %v254 = vadd.f32 %v108, %v253
    %v255 = vpop.f32.mrb[0].mxu0
    %v256 = vadd.f32 %v112, %v255
    %257 = vmatprep.mubr.bf16.mxu0 0
    %258 = vmatmul.mubr.bf16.gmra.mrb[0].mxu0 %v91
    %v259 = vpop.f32.mrb[0].mxu0
    %v260 = vadd.f32 %v108, %v259
    %v261 = vpop.f32.mrb[0].mxu0
    %v262 = vadd.f32 %v112, %v261
    %v263 = vpop.f32.mrb[0].mxu0
    %v264 = vadd.f32 %v108, %v263
    %v265 = vpop.f32.mrb[0].mxu0
    %v266 = vadd.f32 %v112, %v265
    %267 = vmatprep.mubr.bf16.mxu0 0
    %268 = vmatmul.mubr.bf16.gmra.mrb[0].mxu0 %v92
    %v269 = vpop.f32.mrb[0].mxu0
    %v270 = vadd.f32 %v108, %v269
    %v271 = vpop.f32.mrb[0].mxu0
    %v272 = vadd.f32 %v112, %v271
    %v273 = vpop.f32.mrb[0].mxu0
    %v274 = vadd.f32 %v108, %v273
    %v275 = vpop.f32.mrb[0].mxu0
    %v276 = vadd.f32 %v112, %v275
    %277 = vmatprep.mubr.bf16.mxu0 0
    %278 = vmatmul.mubr.bf16.gmra.mrb[0].mxu0 %v93
    %v279 = vpop.f32.mrb[0].mxu0
    %v280 = vadd.f32 %v108, %v279
    %v281 = vpop.f32.mrb[0].mxu0
    %v282 = vadd.f32 %v112, %v281
    %v283 = vpop.f32.mrb[0].mxu0
    %v284 = vadd.f32 %v108, %v283
    %v285 = vpop.f32.mrb[0].mxu0
    %v286 = vadd.f32 %v112, %v285
    %287 = vmatprep.mubr.bf16.mxu0 0
    %288 = vmatmul.mubr.bf16.gmra.mrb[0].mxu0 %v94
    %v289 = vpop.f32.mrb[0].mxu0
    %v290 = vadd.f32 %v108, %v289
    %v291 = vpop.f32.mrb[0].mxu0
    %v292 = vadd.f32 %v112, %v291
    %v293 = vpop.f32.mrb[0].mxu0
    %v294 = vadd.f32 %v108, %v293
    %v295 = vpop.f32.mrb[0].mxu0
    %v296 = vadd.f32 %v112, %v295
    %297 = vmatprep.mubr.bf16.mxu0 0
    %298 = vmatmul.mubr.bf16.gmra.mrb[0].mxu0 %v95
    %v299 = vpop.f32.mrb[0].mxu0
    %v300 = vadd.f32 %v108, %v299
    %v301 = vpop.f32.mrb[0].mxu0
    %v302 = vadd.f32 %v112, %v301
    %v303 = vpop.f32.mrb[0].mxu0
    %v304 = vadd.f32 %v108, %v303
    %v305 = vpop.f32.mrb[0].mxu0
    %v306 = vadd.f32 %v112, %v305
    %307 = vmatprep.mubr.bf16.mxu0 0
    %308 = vmatmul.mubr.bf16.gmra.mrb[0].mxu0 %v96
    %v309 = vpop.f32.mrb[0].mxu0
    %v310 = vadd.f32 %v108, %v309
    %v311 = vpop.f32.mrb[0].mxu0
    %v312 = vadd.f32 %v112, %v311
    %v313 = vpop.f32.mrb[0].mxu0
    %v314 = vadd.f32 %v108, %v313
    %v315 = vpop.f32.mrb[0].mxu0
    %v316 = vadd.f32 %v112, %v315
    %317 = vmatprep.mubr.bf16.mxu0 0
    %318 = vmatmul.mubr.bf16.gmra.mrb[0].mxu0 %v97
    %v319 = vpop.f32.mrb[0].mxu0
    %v320 = vadd.f32 %v108, %v319
    %v321 = vpop.f32.mrb[0].mxu0
    %v322 = vadd.f32 %v112, %v321
    %v323 = vpop.f32.mrb[0].mxu0
    %v324 = vadd.f32 %v108, %v323
    %v325 = vpop.f32.mrb[0].mxu0
    %v326 = vadd.f32 %v112, %v325
    %327 = vmatprep.mubr.bf16.mxu0 0
    %328 = vmatmul.mubr.bf16.gmra.mrb[0].mxu0 %v98
    %v329 = vpop.f32.mrb[0].mxu0
    %v330 = vadd.f32 %v108, %v329
    %v331 = vpop.f32.mrb[0].mxu0
    %v332 = vadd.f32 %v112, %v331
    %v333 = vpop.f32.mrb[0].mxu0
    %v334 = vadd.f32 %v108, %v333
    %v335 = vpop.f32.mrb[0].mxu0
    %v336 = vadd.f32 %v112, %v335
    %337 = vmatprep.mubr.bf16.mxu0 0
    %338 = vmatmul.mubr.bf16.gmra.mrb[0].mxu0 %v99
    %v339 = vpop.f32.mrb[0].mxu0
    %v340 = vadd.f32 %v108, %v339
    %v341 = vpop.f32.mrb[0].mxu0
    %v342 = vadd.f32 %v112, %v341
    %v343 = vpop.f32.mrb[0].mxu0
    %v344 = vadd.f32 %v108, %v343
    %v345 = vpop.f32.mrb[0].mxu0
    %v346 = vadd.f32 %v112, %v345
    %347 = vmatprep.mubr.bf16.mxu0 0
    %348 = vmatmul.mubr.bf16.gmra.mrb[0].mxu0 %v100
    %v349 = vpop.f32.mrb[0].mxu0
    %v350 = vadd.f32 %v108, %v349
    %v351 = vpop.f32.mrb[0].mxu0
    %v352 = vadd.f32 %v112, %v351
    %v353 = vpop.f32.mrb[0].mxu0
    %v354 = vadd.f32 %v108, %v353
    %v355 = vpop.f32.mrb[0].mxu0
    %v356 = vadd.f32 %v112, %v355
    %357 = vmatprep.mubr.bf16.mxu0 0
    %358 = vmatmul.mubr.bf16.gmra.mrb[0].mxu0 %v101
    %v359 = vpop.f32.mrb[0].mxu0
    %v360 = vadd.f32 %v108, %v359
    %v361 = vpop.f32.mrb[0].mxu0
    %v362 = vadd.f32 %v112, %v361
    %v363 = vpop.f32.mrb[0].mxu0
    %v364 = vadd.f32 %v108, %v363
    %v365 = vpop.f32.mrb[0].mxu0
    %v366 = vadd.f32 %v112, %v365
    %367 = vmatprep.mubr.bf16.mxu0 0
    %368 = vmatmul.mubr.bf16.gmra.mrb[0].mxu0 %v102
    %v369 = vpop.f32.mrb[0].mxu0
    %v370 = vadd.f32 %v108, %v369
    %v371 = vpop.f32.mrb[0].mxu0
    %v372 = vadd.f32 %v112, %v371
    %v373 = vpop.f32.mrb[0].mxu0
    %v374 = vadd.f32 %v108, %v373
    %v375 = vpop.f32.mrb[0].mxu0
    %v376 = vadd.f32 %v112, %v375
    %377 = vmatprep.mubr.bf16.mxu0 0
    %378 = vmatmul.mubr.bf16.gmra.mrb[0].mxu0 %v103
    %v379 = vpop.f32.mrb[0].mxu0
    %v380 = vadd.f32 %v108, %v379
    %v381 = vpop.f32.mrb[0].mxu0
    %v382 = vadd.f32 %v112, %v381
    %v383 = vpop.f32.mrb[0].mxu0
    %v384 = vadd.f32 %v108, %v383
    %v385 = vpop.f32.mrb[0].mxu0
    %v386 = vadd.f32 %v112, %v385
    %387 = vdwg.mxu0
    %v388 = vadd.f32 %v230, %v234
    %v389 = vadd.f32 %v388, %v240
    %v390 = vadd.f32 %v389, %v244
    %v391 = vadd.f32 %v390, %v250
    %v392 = vadd.f32 %v391, %v254
    %v393 = vadd.f32 %v392, %v260
    %v394 = vadd.f32 %v393, %v264
    %v395 = vadd.f32 %v394, %v270
    %v396 = vadd.f32 %v395, %v274
    %v397 = vadd.f32 %v396, %v280
    %v398 = vadd.f32 %v397, %v284
    %v399 = vadd.f32 %v398, %v290
    %v400 = vadd.f32 %v399, %v294
    %v401 = vadd.f32 %v400, %v300
    %v402 = vadd.f32 %v401, %v304
    %v403 = vadd.f32 %v402, %v310
    %v404 = vadd.f32 %v403, %v314
    %v405 = vadd.f32 %v404, %v320
    %v406 = vadd.f32 %v405, %v324
    %v407 = vadd.f32 %v406, %v330
    %v408 = vadd.f32 %v407, %v334
    %v409 = vadd.f32 %v408, %v340
    %v410 = vadd.f32 %v409, %v344
    %v411 = vadd.f32 %v410, %v350
    %v412 = vadd.f32 %v411, %v354
    %v413 = vadd.f32 %v412, %v360
    %v414 = vadd.f32 %v413, %v364
    %v415 = vadd.f32 %v414, %v370
    %v416 = vadd.f32 %v415, %v374
    %v417 = vadd.f32 %v416, %v380
    %v418 = vadd.f32 %v417, %v384
    %v419 = vrot.slane %v418, 4
    %v420 = vadd.f32 %v418, %v419
    %v421 = vrot.slane %v420, 2
    %v422 = vadd.f32 %v420, %v421
    %v423 = vrot.slane %v422, 1
    %v424 = vadd.f32 %v422, %v423
    %v425 = vadd.f32 %v232, %v236
    %v426 = vadd.f32 %v425, %v242
    %v427 = vadd.f32 %v426, %v246
    %v428 = vadd.f32 %v427, %v252
    %v429 = vadd.f32 %v428, %v256
    %v430 = vadd.f32 %v429, %v262
    %v431 = vadd.f32 %v430, %v266
    %v432 = vadd.f32 %v431, %v272
    %v433 = vadd.f32 %v432, %v276
    %v434 = vadd.f32 %v433, %v282
    %v435 = vadd.f32 %v434, %v286
    %v436 = vadd.f32 %v435, %v292
    %v437 = vadd.f32 %v436, %v296
    %v438 = vadd.f32 %v437, %v302
    %v439 = vadd.f32 %v438, %v306
    %v440 = vadd.f32 %v439, %v312
    %v441 = vadd.f32 %v440, %v316
    %v442 = vadd.f32 %v441, %v322
    %v443 = vadd.f32 %v442, %v326
    %v444 = vadd.f32 %v443, %v332
    %v445 = vadd.f32 %v444, %v336
    %v446 = vadd.f32 %v445, %v342
    %v447 = vadd.f32 %v446, %v346
    %v448 = vadd.f32 %v447, %v352
    %v449 = vadd.f32 %v448, %v356
    %v450 = vadd.f32 %v449, %v362
    %v451 = vadd.f32 %v450, %v366
    %v452 = vadd.f32 %v451, %v372
    %v453 = vadd.f32 %v452, %v376
    %v454 = vadd.f32 %v453, %v382
    %v455 = vadd.f32 %v454, %v386
    %v456 = vrot.slane %v455, 4
    %v457 = vadd.f32 %v455, %v456
    %v458 = vrot.slane %v457, 2
    %v459 = vadd.f32 %v457, %v458
    %v460 = vrot.slane %v459, 1
    %v461 = vadd.f32 %v459, %v460
    %v462 = vrcp.pop 256.0
    %v463 = vmul.f32 %v424, %v462
    %v464 = vmul.f32 %v461, %v462
    %v465 = vsub.f32 %v230, %v463
    %v466 = vsub.f32 %v232, %v464
    %v467 = vsub.f32 %v234, %v463
    %v468 = vsub.f32 %v236, %v464
    %v469 = vsub.f32 %v240, %v463
    %v470 = vsub.f32 %v242, %v464
    %v471 = vsub.f32 %v244, %v463
    %v472 = vsub.f32 %v246, %v464
    %v473 = vsub.f32 %v250, %v463
    %v474 = vsub.f32 %v252, %v464
    %v475 = vsub.f32 %v254, %v463
    %v476 = vsub.f32 %v256, %v464
    %v477 = vsub.f32 %v260, %v463
    %v478 = vsub.f32 %v262, %v464
    %v479 = vsub.f32 %v264, %v463
    %v480 = vsub.f32 %v266, %v464
    %v481 = vsub.f32 %v270, %v463
    %v482 = vsub.f32 %v272, %v464
    %v483 = vsub.f32 %v274, %v463
    %v484 = vsub.f32 %v276, %v464
    %v485 = vsub.f32 %v280, %v463
    %v486 = vsub.f32 %v282, %v464
    %v487 = vsub.f32 %v284, %v463
    %v488 = vsub.f32 %v286, %v464
    %v489 = vsub.f32 %v290, %v463
    %v490 = vsub.f32 %v292, %v464
    %v491 = vsub.f32 %v294, %v463
    %v492 = vsub.f32 %v296, %v464
    %v493 = vsub.f32 %v300, %v463
    %v494 = vsub.f32 %v302, %v464
    %v495 = vsub.f32 %v304, %v463
    %v496 = vsub.f32 %v306, %v464
    %v497 = vsub.f32 %v310, %v463
    %v498 = vsub.f32 %v312, %v464
    %v499 = vsub.f32 %v314, %v463
    %v500 = vsub.f32 %v316, %v464
    %v501 = vsub.f32 %v320, %v463
    %v502 = vsub.f32 %v322, %v464
    %v503 = vsub.f32 %v324, %v463
    %v504 = vsub.f32 %v326, %v464
    %v505 = vsub.f32 %v330, %v463
    %v506 = vsub.f32 %v332, %v464
    %v507 = vsub.f32 %v334, %v463
    %v508 = vsub.f32 %v336, %v464
    %v509 = vsub.f32 %v340, %v463
    %v510 = vsub.f32 %v342, %v464
    %v511 = vsub.f32 %v344, %v463
    %v512 = vsub.f32 %v346, %v464
    %v513 = vsub.f32 %v350, %v463
    %v514 = vsub.f32 %v352, %v464
    %v515 = vsub.f32 %v354, %v463
    %v516 = vsub.f32 %v356, %v464
    %v517 = vsub.f32 %v360, %v463
    %v518 = vsub.f32 %v362, %v464
    %v519 = vsub.f32 %v364, %v463
    %v520 = vsub.f32 %v366, %v464
    %v521 = vsub.f32 %v370, %v463
    %v522 = vsub.f32 %v372, %v464
    %v523 = vsub.f32 %v374, %v463
    %v524 = vsub.f32 %v376, %v464
    %v525 = vsub.f32 %v380, %v463
    %v526 = vsub.f32 %v382, %v464
    %v527 = vsub.f32 %v384, %v463
    %v528 = vsub.f32 %v386, %v464
    %v529 = vmul.f32 %v465, %v465
    %v530 = vmul.f32 %v466, %v466
    %v531 = vmul.f32 %v467, %v467
    %v532 = vmul.f32 %v468, %v468
    %v533 = vmul.f32 %v469, %v469
    %v534 = vmul.f32 %v470, %v470
    %v535 = vmul.f32 %v471, %v471
    %v536 = vmul.f32 %v472, %v472
    %v537 = vmul.f32 %v473, %v473
    %v538 = vmul.f32 %v474, %v474
    %v539 = vmul.f32 %v475, %v475
    %v540 = vmul.f32 %v476, %v476
    %v541 = vmul.f32 %v477, %v477
    %v542 = vmul.f32 %v478, %v478
    %v543 = vmul.f32 %v479, %v479
    %v544 = vmul.f32 %v480, %v480
    %v545 = vmul.f32 %v481, %v481
    %v546 = vmul.f32 %v482, %v482
    %v547 = vmul.f32 %v483, %v483
    %v548 = vmul.f32 %v484, %v484
    %v549 = vmul.f32 %v485, %v485
    %v550 = vmul.f32 %v486, %v486
    %v551 = vmul.f32 %v487, %v487
    %v552 = vmul.f32 %v488, %v488
    %v553 = vmul.f32 %v489, %v489
    %v554 = vmul.f32 %v490, %v490
    %v555 = vmul.f32 %v491, %v491
    %v556 = vmul.f32 %v492, %v492
    %v557 = vmul.f32 %v493, %v493
    %v558 = vmul.f32 %v494, %v494
    %v559 = vmul.f32 %v495, %v495
    %v560 = vmul.f32 %v496, %v496
    %v561 = vmul.f32 %v497, %v497
    %v562 = vmul.f32 %v498, %v498
    %v563 = vmul.f32 %v499, %v499
    %v564 = vmul.f32 %v500, %v500
    %v565 = vmul.f32 %v501, %v501
    %v566 = vmul.f32 %v502, %v502
    %v567 = vmul.f32 %v503, %v503
    %v568 = vmul.f32 %v504, %v504
    %v569 = vmul.f32 %v505, %v505
    %v570 = vmul.f32 %v506, %v506
    %v571 = vmul.f32 %v507, %v507
    %v572 = vmul.f32 %v508, %v508
    %v573 = vmul.f32 %v509, %v509
    %v574 = vmul.f32 %v510, %v510
    %v575 = vmul.f32 %v511, %v511
    %v576 = vmul.f32 %v512, %v512
    %v577 = vmul.f32 %v513, %v513
    %v578 = vmul.f32 %v514, %v514
    %v579 = vmul.f32 %v515, %v515
    %v580 = vmul.f32 %v516, %v516
    %v581 = vmul.f32 %v517, %v517
    %v582 = vmul.f32 %v518, %v518
    %v583 = vmul.f32 %v519, %v519
    %v584 = vmul.f32 %v520, %v520
    %v585 = vmul.f32 %v521, %v521
    %v586 = vmul.f32 %v522, %v522
    %v587 = vmul.f32 %v523, %v523
    %v588 = vmul.f32 %v524, %v524
    %v589 = vmul.f32 %v525, %v525
    %v590 = vmul.f32 %v526, %v526
    %v591 = vmul.f32 %v527, %v527
    %v592 = vmul.f32 %v528, %v528
    %v593 = vadd.f32 %v529, %v531
    %v594 = vadd.f32 %v593, %v533
    %v595 = vadd.f32 %v594, %v535
    %v596 = vadd.f32 %v595, %v537
    %v597 = vadd.f32 %v596, %v539
    %v598 = vadd.f32 %v597, %v541
    %v599 = vadd.f32 %v598, %v543
    %v600 = vadd.f32 %v599, %v545
    %v601 = vadd.f32 %v600, %v547
    %v602 = vadd.f32 %v601, %v549
    %v603 = vadd.f32 %v602, %v551
    %v604 = vadd.f32 %v603, %v553
    %v605 = vadd.f32 %v604, %v555
    %v606 = vadd.f32 %v605, %v557
    %v607 = vadd.f32 %v606, %v559
    %v608 = vadd.f32 %v607, %v561
    %v609 = vadd.f32 %v608, %v563
    %v610 = vadd.f32 %v609, %v565
    %v611 = vadd.f32 %v610, %v567
    %v612 = vadd.f32 %v611, %v569
    %v613 = vadd.f32 %v612, %v571
    %v614 = vadd.f32 %v613, %v573
    %v615 = vadd.f32 %v614, %v575
    %v616 = vadd.f32 %v615, %v577
    %v617 = vadd.f32 %v616, %v579
    %v618 = vadd.f32 %v617, %v581
    %v619 = vadd.f32 %v618, %v583
    %v620 = vadd.f32 %v619, %v585
    %v621 = vadd.f32 %v620, %v587
    %v622 = vadd.f32 %v621, %v589
    %v623 = vadd.f32 %v622, %v591
    %v624 = vrot.slane %v623, 4
    %v625 = vadd.f32 %v623, %v624
    %v626 = vrot.slane %v625, 2
    %v627 = vadd.f32 %v625, %v626
    %v628 = vrot.slane %v627, 1
    %v629 = vadd.f32 %v627, %v628
    %v630 = vadd.f32 %v530, %v532
    %v631 = vadd.f32 %v630, %v534
    %v632 = vadd.f32 %v631, %v536
    %v633 = vadd.f32 %v632, %v538
    %v634 = vadd.f32 %v633, %v540
    %v635 = vadd.f32 %v634, %v542
    %v636 = vadd.f32 %v635, %v544
    %v637 = vadd.f32 %v636, %v546
    %v638 = vadd.f32 %v637, %v548
    %v639 = vadd.f32 %v638, %v550
    %v640 = vadd.f32 %v639, %v552
    %v641 = vadd.f32 %v640, %v554
    %v642 = vadd.f32 %v641, %v556
    %v643 = vadd.f32 %v642, %v558
    %v644 = vadd.f32 %v643, %v560
    %v645 = vadd.f32 %v644, %v562
    %v646 = vadd.f32 %v645, %v564
    %v647 = vadd.f32 %v646, %v566
    %v648 = vadd.f32 %v647, %v568
    %v649 = vadd.f32 %v648, %v570
    %v650 = vadd.f32 %v649, %v572
    %v651 = vadd.f32 %v650, %v574
    %v652 = vadd.f32 %v651, %v576
    %v653 = vadd.f32 %v652, %v578
    %v654 = vadd.f32 %v653, %v580
    %v655 = vadd.f32 %v654, %v582
    %v656 = vadd.f32 %v655, %v584
    %v657 = vadd.f32 %v656, %v586
    %v658 = vadd.f32 %v657, %v588
    %v659 = vadd.f32 %v658, %v590
    %v660 = vadd.f32 %v659, %v592
    %v661 = vrot.slane %v660, 4
    %v662 = vadd.f32 %v660, %v661
    %v663 = vrot.slane %v662, 2
    %v664 = vadd.f32 %v662, %v663
    %v665 = vrot.slane %v664, 1
    %v666 = vadd.f32 %v664, %v665
    %v667 = vmul.f32 %v629, %v462
    %v668 = vmul.f32 %v666, %v462
    %v669 = vadd.f32 %v667, 1e-05
    %v670 = vadd.f32 %v668, 1e-05
    %v671 = vrsqrt.pop %v669
    %v672 = vrsqrt.pop %v670
    %v673 = vmul.f32 %v465, %v671
    %v674 = vmul.f32 %v466, %v672
    %v675 = vmul.f32 %v467, %v671
    %v676 = vmul.f32 %v468, %v672
    %v677 = vmul.f32 %v469, %v671
    %v678 = vmul.f32 %v470, %v672
    %v679 = vmul.f32 %v471, %v671
    %v680 = vmul.f32 %v472, %v672
    %v681 = vmul.f32 %v473, %v671
    %v682 = vmul.f32 %v474, %v672
    %v683 = vmul.f32 %v475, %v671
    %v684 = vmul.f32 %v476, %v672
    %v685 = vmul.f32 %v477, %v671
    %v686 = vmul.f32 %v478, %v672
    %v687 = vmul.f32 %v479, %v671
    %v688 = vmul.f32 %v480, %v672
    %v689 = vmul.f32 %v481, %v671
    %v690 = vmul.f32 %v482, %v672
    %v691 = vmul.f32 %v483, %v671
    %v692 = vmul.f32 %v484, %v672
    %v693 = vmul.f32 %v485, %v671
    %v694 = vmul.f32 %v486, %v672
    %v695 = vmul.f32 %v487, %v671
    %v696 = vmul.f32 %v488, %v672
    %v697 = vmul.f32 %v489, %v671
    %v698 = vmul.f32 %v490, %v672
    %v699 = vmul.f32 %v491, %v671
    %v700 = vmul.f32 %v492, %v672
    %v701 = vmul.f32 %v493, %v671
    %v702 = vmul.f32 %v494, %v672
    %v703 = vmul.f32 %v495, %v671
    %v704 = vmul.f32 %v496, %v672
    %v705 = vmul.f32 %v497, %v671
    %v706 = vmul.f32 %v498, %v672
    %v707 = vmul.f32 %v499, %v671
    %v708 = vmul.f32 %v500, %v672
    %v709 = vmul.f32 %v501, %v671
    %v710 = vmul.f32 %v502, %v672
    %v711 = vmul.f32 %v503, %v671
    %v712 = vmul.f32 %v504, %v672
    %v713 = vmul.f32 %v505, %v671
    %v714 = vmul.f32 %v506, %v672
    %v715 = vmul.f32 %v507, %v671
    %v716 = vmul.f32 %v508, %v672
    %v717 = vmul.f32 %v509, %v671
    %v718 = vmul.f32 %v510, %v672
    %v719 = vmul.f32 %v511, %v671
    %v720 = vmul.f32 %v512, %v672
    %v721 = vmul.f32 %v513, %v671
    %v722 = vmul.f32 %v514, %v672
    %v723 = vmul.f32 %v515, %v671
    %v724 = vmul.f32 %v516, %v672
    %v725 = vmul.f32 %v517, %v671
    %v726 = vmul.f32 %v518, %v672
    %v727 = vmul.f32 %v519, %v671
    %v728 = vmul.f32 %v520, %v672
    %v729 = vmul.f32 %v521, %v671
    %v730 = vmul.f32 %v522, %v672
    %v731 = vmul.f32 %v523, %v671
    %v732 = vmul.f32 %v524, %v672
    %v733 = vmul.f32 %v525, %v671
    %v734 = vmul.f32 %v526, %v672
    %v735 = vmul.f32 %v527, %v671
    %v736 = vmul.f32 %v528, %v672
    %v738 = vlaneseq
    %v739 = vshrl.u32 %v738, 7
    %v740 = vsub.s32 0, %v739
    %v741 = vrot.slane %v86, %v740
    %v742 = vlaneseq
    %v743 = vshrl.u32 %v742, 7
    %v744 = vsub.s32 1, %v743
    %v745 = vrot.slane %v86, %v744
    %v748 = vmul.f32 %v673, %v741
    %v749 = vmul.f32 %v674, %v745
    %v750 = vmul.f32 %v675, %v741
    %v751 = vmul.f32 %v676, %v745
    %v752 = vmul.f32 %v677, %v741
    %v753 = vmul.f32 %v678, %v745
    %v754 = vmul.f32 %v679, %v741
    %v755 = vmul.f32 %v680, %v745
    %v756 = vmul.f32 %v681, %v741
    %v757 = vmul.f32 %v682, %v745
    %v758 = vmul.f32 %v683, %v741
    %v759 = vmul.f32 %v684, %v745
    %v760 = vmul.f32 %v685, %v741
    %v761 = vmul.f32 %v686, %v745
    %v762 = vmul.f32 %v687, %v741
    %v763 = vmul.f32 %v688, %v745
    %v764 = vmul.f32 %v689, %v741
    %v765 = vmul.f32 %v690, %v745
    %v766 = vmul.f32 %v691, %v741
    %v767 = vmul.f32 %v692, %v745
    %v768 = vmul.f32 %v693, %v741
    %v769 = vmul.f32 %v694, %v745
    %v770 = vmul.f32 %v695, %v741
    %v771 = vmul.f32 %v696, %v745
    %v772 = vmul.f32 %v697, %v741
    %v773 = vmul.f32 %v698, %v745
    %v774 = vmul.f32 %v699, %v741
    %v775 = vmul.f32 %v700, %v745
    %v776 = vmul.f32 %v701, %v741
    %v777 = vmul.f32 %v702, %v745
    %v778 = vmul.f32 %v703, %v741
    %v779 = vmul.f32 %v704, %v745
    %v780 = vmul.f32 %v705, %v741
    %v781 = vmul.f32 %v706, %v745
    %v782 = vmul.f32 %v707, %v741
    %v783 = vmul.f32 %v708, %v745
    %v784 = vmul.f32 %v709, %v741
    %v785 = vmul.f32 %v710, %v745
    %v786 = vmul.f32 %v711, %v741
    %v787 = vmul.f32 %v712, %v745
    %v788 = vmul.f32 %v713, %v741
    %v789 = vmul.f32 %v714, %v745
    %v790 = vmul.f32 %v715, %v741
    %v791 = vmul.f32 %v716, %v745
    %v792 = vmul.f32 %v717, %v741
    %v793 = vmul.f32 %v718, %v745
    %v794 = vmul.f32 %v719, %v741
    %v795 = vmul.f32 %v720, %v745
    %v796 = vmul.f32 %v721, %v741
    %v797 = vmul.f32 %v722, %v745
    %v798 = vmul.f32 %v723, %v741
    %v799 = vmul.f32 %v724, %v745
    %v800 = vmul.f32 %v725, %v741
    %v801 = vmul.f32 %v726, %v745
    %v802 = vmul.f32 %v727, %v741
    %v803 = vmul.f32 %v728, %v745
    %v804 = vmul.f32 %v729, %v741
    %v805 = vmul.f32 %v730, %v745
    %v806 = vmul.f32 %v731, %v741
    %v807 = vmul.f32 %v732, %v745
    %v808 = vmul.f32 %v733, %v741
    %v809 = vmul.f32 %v734, %v745
    %v810 = vmul.f32 %v735, %v741
    %v811 = vmul.f32 %v736, %v745
    %v813 = vlaneseq
    %v814 = vshrl.u32 %v813, 7
    %v815 = vsub.s32 0, %v814
    %v816 = vrot.slane %v87, %v815
    %v817 = vlaneseq
    %v818 = vshrl.u32 %v817, 7
    %v819 = vsub.s32 1, %v818
    %v820 = vrot.slane %v87, %v819
    %v823 = vadd.f32 %v748, %v816
    %v824 = vadd.f32 %v749, %v820
    %v825 = vadd.f32 %v750, %v816
    %v826 = vadd.f32 %v751, %v820
    %v827 = vadd.f32 %v752, %v816
    %v828 = vadd.f32 %v753, %v820
    %v829 = vadd.f32 %v754, %v816
    %v830 = vadd.f32 %v755, %v820
    %v831 = vadd.f32 %v756, %v816
    %v832 = vadd.f32 %v757, %v820
    %v833 = vadd.f32 %v758, %v816
    %v834 = vadd.f32 %v759, %v820
    %v835 = vadd.f32 %v760, %v816
    %v836 = vadd.f32 %v761, %v820
    %v837 = vadd.f32 %v762, %v816
    %v838 = vadd.f32 %v763, %v820
    %v839 = vadd.f32 %v764, %v816
    %v840 = vadd.f32 %v765, %v820
    %v841 = vadd.f32 %v766, %v816
    %v842 = vadd.f32 %v767, %v820
    %v843 = vadd.f32 %v768, %v816
    %v844 = vadd.f32 %v769, %v820
    %v845 = vadd.f32 %v770, %v816
    %v846 = vadd.f32 %v771, %v820
    %v847 = vadd.f32 %v772, %v816
    %v848 = vadd.f32 %v773, %v820
    %v849 = vadd.f32 %v774, %v816
    %v850 = vadd.f32 %v775, %v820
    %v851 = vadd.f32 %v776, %v816
    %v852 = vadd.f32 %v777, %v820
    %v853 = vadd.f32 %v778, %v816
    %v854 = vadd.f32 %v779, %v820
    %v855 = vadd.f32 %v780, %v816
    %v856 = vadd.f32 %v781, %v820
    %v857 = vadd.f32 %v782, %v816
    %v858 = vadd.f32 %v783, %v820
    %v859 = vadd.f32 %v784, %v816
    %v860 = vadd.f32 %v785, %v820
    %v861 = vadd.f32 %v786, %v816
    %v862 = vadd.f32 %v787, %v820
    %v863 = vadd.f32 %v788, %v816
    %v864 = vadd.f32 %v789, %v820
    %v865 = vadd.f32 %v790, %v816
    %v866 = vadd.f32 %v791, %v820
    %v867 = vadd.f32 %v792, %v816
    %v868 = vadd.f32 %v793, %v820
    %v869 = vadd.f32 %v794, %v816
    %v870 = vadd.f32 %v795, %v820
    %v871 = vadd.f32 %v796, %v816
    %v872 = vadd.f32 %v797, %v820
    %v873 = vadd.f32 %v798, %v816
    %v874 = vadd.f32 %v799, %v820
    %v875 = vadd.f32 %v800, %v816
    %v876 = vadd.f32 %v801, %v820
    %v877 = vadd.f32 %v802, %v816
    %v878 = vadd.f32 %v803, %v820
    %v879 = vadd.f32 %v804, %v816
    %v880 = vadd.f32 %v805, %v820
    %v881 = vadd.f32 %v806, %v816
    %v882 = vadd.f32 %v807, %v820
    %v883 = vadd.f32 %v808, %v816
    %v884 = vadd.f32 %v809, %v820
    %v885 = vadd.f32 %v810, %v816
    %v886 = vadd.f32 %v811, %v820
    %v887 = vmax.f32 %v823, 0.0
    %v888 = vmax.f32 %v824, 0.0
    %v889 = vmax.f32 %v825, 0.0
    %v890 = vmax.f32 %v826, 0.0
    %v891 = vmax.f32 %v827, 0.0
    %v892 = vmax.f32 %v828, 0.0
    %v893 = vmax.f32 %v829, 0.0
    %v894 = vmax.f32 %v830, 0.0
    %v895 = vmax.f32 %v831, 0.0
    %v896 = vmax.f32 %v832, 0.0
    %v897 = vmax.f32 %v833, 0.0
    %v898 = vmax.f32 %v834, 0.0
    %v899 = vmax.f32 %v835, 0.0
    %v900 = vmax.f32 %v836, 0.0
    %v901 = vmax.f32 %v837, 0.0
    %v902 = vmax.f32 %v838, 0.0
    %v903 = vmax.f32 %v839, 0.0
    %v904 = vmax.f32 %v840, 0.0
    %v905 = vmax.f32 %v841, 0.0
    %v906 = vmax.f32 %v842, 0.0
    %v907 = vmax.f32 %v843, 0.0
    %v908 = vmax.f32 %v844, 0.0
    %v909 = vmax.f32 %v845, 0.0
    %v910 = vmax.f32 %v846, 0.0
    %v911 = vmax.f32 %v847, 0.0
    %v912 = vmax.f32 %v848, 0.0
    %v913 = vmax.f32 %v849, 0.0
    %v914 = vmax.f32 %v850, 0.0
    %v915 = vmax.f32 %v851, 0.0
    %v916 = vmax.f32 %v852, 0.0
    %v917 = vmax.f32 %v853, 0.0
    %v918 = vmax.f32 %v854, 0.0
    %v919 = vmax.f32 %v855, 0.0
    %v920 = vmax.f32 %v856, 0.0
    %v921 = vmax.f32 %v857, 0.0
    %v922 = vmax.f32 %v858, 0.0
    %v923 = vmax.f32 %v859, 0.0
    %v924 = vmax.f32 %v860, 0.0
    %v925 = vmax.f32 %v861, 0.0
    %v926 = vmax.f32 %v862, 0.0
    %v927 = vmax.f32 %v863, 0.0
    %v928 = vmax.f32 %v864, 0.0
    %v929 = vmax.f32 %v865, 0.0
    %v930 = vmax.f32 %v866, 0.0
    %v931 = vmax.f32 %v867, 0.0
    %v932 = vmax.f32 %v868, 0.0
    %v933 = vmax.f32 %v869, 0.0
    %v934 = vmax.f32 %v870, 0.0
    %v935 = vmax.f32 %v871, 0.0
    %v936 = vmax.f32 %v872, 0.0
    %v937 = vmax.f32 %v873, 0.0
    %v938 = vmax.f32 %v874, 0.0
    %v939 = vmax.f32 %v875, 0.0
    %v940 = vmax.f32 %v876, 0.0
    %v941 = vmax.f32 %v877, 0.0
    %v942 = vmax.f32 %v878, 0.0
    %v943 = vmax.f32 %v879, 0.0
    %v944 = vmax.f32 %v880, 0.0
    %v945 = vmax.f32 %v881, 0.0
    %v946 = vmax.f32 %v882, 0.0
    %v947 = vmax.f32 %v883, 0.0
    %v948 = vmax.f32 %v884, 0.0
    %v949 = vmax.f32 %v885, 0.0
    %v950 = vmax.f32 %v886, 0.0
    %v951 = vmul.f32 %v887, %v887
    %v952 = vmul.f32 %v888, %v888
    %v953 = vmul.f32 %v889, %v889
    %v954 = vmul.f32 %v890, %v890
    %v955 = vmul.f32 %v891, %v891
    %v956 = vmul.f32 %v892, %v892
    %v957 = vmul.f32 %v893, %v893
    %v958 = vmul.f32 %v894, %v894
    %v959 = vmul.f32 %v895, %v895
    %v960 = vmul.f32 %v896, %v896
    %v961 = vmul.f32 %v897, %v897
    %v962 = vmul.f32 %v898, %v898
    %v963 = vmul.f32 %v899, %v899
    %v964 = vmul.f32 %v900, %v900
    %v965 = vmul.f32 %v901, %v901
    %v966 = vmul.f32 %v902, %v902
    %v967 = vmul.f32 %v903, %v903
    %v968 = vmul.f32 %v904, %v904
    %v969 = vmul.f32 %v905, %v905
    %v970 = vmul.f32 %v906, %v906
    %v971 = vmul.f32 %v907, %v907
    %v972 = vmul.f32 %v908, %v908
    %v973 = vmul.f32 %v909, %v909
    %v974 = vmul.f32 %v910, %v910
    %v975 = vmul.f32 %v911, %v911
    %v976 = vmul.f32 %v912, %v912
    %v977 = vmul.f32 %v913, %v913
    %v978 = vmul.f32 %v914, %v914
    %v979 = vmul.f32 %v915, %v915
    %v980 = vmul.f32 %v916, %v916
    %v981 = vmul.f32 %v917, %v917
    %v982 = vmul.f32 %v918, %v918
    %v983 = vmul.f32 %v919, %v919
    %v984 = vmul.f32 %v920, %v920
    %v985 = vmul.f32 %v921, %v921
    %v986 = vmul.f32 %v922, %v922
    %v987 = vmul.f32 %v923, %v923
    %v988 = vmul.f32 %v924, %v924
    %v989 = vmul.f32 %v925, %v925
    %v990 = vmul.f32 %v926, %v926
    %v991 = vmul.f32 %v927, %v927
    %v992 = vmul.f32 %v928, %v928
    %v993 = vmul.f32 %v929, %v929
    %v994 = vmul.f32 %v930, %v930
    %v995 = vmul.f32 %v931, %v931
    %v996 = vmul.f32 %v932, %v932
    %v997 = vmul.f32 %v933, %v933
    %v998 = vmul.f32 %v934, %v934
    %v999 = vmul.f32 %v935, %v935
    %v1000 = vmul.f32 %v936, %v936
    %v1001 = vmul.f32 %v937, %v937
    %v1002 = vmul.f32 %v938, %v938
    %v1003 = vmul.f32 %v939, %v939
    %v1004 = vmul.f32 %v940, %v940
    %v1005 = vmul.f32 %v941, %v941
    %v1006 = vmul.f32 %v942, %v942
    %v1007 = vmul.f32 %v943, %v943
    %v1008 = vmul.f32 %v944, %v944
    %v1009 = vmul.f32 %v945, %v945
    %v1010 = vmul.f32 %v946, %v946
    %v1011 = vmul.f32 %v947, %v947
    %v1012 = vmul.f32 %v948, %v948
    %v1013 = vmul.f32 %v949, %v949
    %v1014 = vmul.f32 %v950, %v950
    %v1015 = vadd.f32 %v951, %v952
    %1016 = vadd.xlane.f32.xlu0 %v1015
    %v1017 = vpop.xlane.xlu0 %1016
    %v1018 = vadd.f32 %v953, %v954
    %1019 = vadd.xlane.f32.xlu0 %v1018
    %v1020 = vpop.xlane.xlu0 %1019
    %v1021 = vadd.f32 %v955, %v956
    %1022 = vadd.xlane.f32.xlu0 %v1021
    %v1023 = vpop.xlane.xlu0 %1022
    %v1024 = vadd.f32 %v957, %v958
    %1025 = vadd.xlane.f32.xlu0 %v1024
    %v1026 = vpop.xlane.xlu0 %1025
    %v1027 = vadd.f32 %v959, %v960
    %1028 = vadd.xlane.f32.xlu0 %v1027
    %v1029 = vpop.xlane.xlu0 %1028
    %v1030 = vadd.f32 %v961, %v962
    %1031 = vadd.xlane.f32.xlu0 %v1030
    %v1032 = vpop.xlane.xlu0 %1031
    %v1033 = vadd.f32 %v963, %v964
    %1034 = vadd.xlane.f32.xlu0 %v1033
    %v1035 = vpop.xlane.xlu0 %1034
    %v1036 = vadd.f32 %v965, %v966
    %1037 = vadd.xlane.f32.xlu0 %v1036
    %v1038 = vpop.xlane.xlu0 %1037
    %v1039 = vadd.f32 %v967, %v968
    %1040 = vadd.xlane.f32.xlu0 %v1039
    %v1041 = vpop.xlane.xlu0 %1040
    %v1042 = vadd.f32 %v969, %v970
    %1043 = vadd.xlane.f32.xlu0 %v1042
    %v1044 = vpop.xlane.xlu0 %1043
    %v1045 = vadd.f32 %v971, %v972
    %1046 = vadd.xlane.f32.xlu0 %v1045
    %v1047 = vpop.xlane.xlu0 %1046
    %v1048 = vadd.f32 %v973, %v974
    %1049 = vadd.xlane.f32.xlu0 %v1048
    %v1050 = vpop.xlane.xlu0 %1049
    %v1051 = vadd.f32 %v975, %v976
    %1052 = vadd.xlane.f32.xlu0 %v1051
    %v1053 = vpop.xlane.xlu0 %1052
    %v1054 = vadd.f32 %v977, %v978
    %1055 = vadd.xlane.f32.xlu0 %v1054
    %v1056 = vpop.xlane.xlu0 %1055
    %v1057 = vadd.f32 %v979, %v980
    %1058 = vadd.xlane.f32.xlu0 %v1057
    %v1059 = vpop.xlane.xlu0 %1058
    %v1060 = vadd.f32 %v981, %v982
    %1061 = vadd.xlane.f32.xlu0 %v1060
    %v1062 = vpop.xlane.xlu0 %1061
    %v1063 = vadd.f32 %v983, %v984
    %1064 = vadd.xlane.f32.xlu0 %v1063
    %v1065 = vpop.xlane.xlu0 %1064
    %v1066 = vadd.f32 %v985, %v986
    %1067 = vadd.xlane.f32.xlu0 %v1066
    %v1068 = vpop.xlane.xlu0 %1067
    %v1069 = vadd.f32 %v987, %v988
    %1070 = vadd.xlane.f32.xlu0 %v1069
    %v1071 = vpop.xlane.xlu0 %1070
    %v1072 = vadd.f32 %v989, %v990
    %1073 = vadd.xlane.f32.xlu0 %v1072
    %v1074 = vpop.xlane.xlu0 %1073
    %v1075 = vadd.f32 %v991, %v992
    %1076 = vadd.xlane.f32.xlu0 %v1075
    %v1077 = vpop.xlane.xlu0 %1076
    %v1078 = vadd.f32 %v993, %v994
    %1079 = vadd.xlane.f32.xlu0 %v1078
    %v1080 = vpop.xlane.xlu0 %1079
    %v1081 = vadd.f32 %v995, %v996
    %1082 = vadd.xlane.f32.xlu0 %v1081
    %v1083 = vpop.xlane.xlu0 %1082
    %v1084 = vadd.f32 %v997, %v998
    %1085 = vadd.xlane.f32.xlu0 %v1084
    %v1086 = vpop.xlane.xlu0 %1085
    %v1087 = vadd.f32 %v999, %v1000
    %1088 = vadd.xlane.f32.xlu0 %v1087
    %v1089 = vpop.xlane.xlu0 %1088
    %v1090 = vadd.f32 %v1001, %v1002
    %1091 = vadd.xlane.f32.xlu0 %v1090
    %v1092 = vpop.xlane.xlu0 %1091
    %v1093 = vadd.f32 %v1003, %v1004
    %1094 = vadd.xlane.f32.xlu0 %v1093
    %v1095 = vpop.xlane.xlu0 %1094
    %v1096 = vadd.f32 %v1005, %v1006
    %1097 = vadd.xlane.f32.xlu0 %v1096
    %v1098 = vpop.xlane.xlu0 %1097
    %v1099 = vadd.f32 %v1007, %v1008
    %1100 = vadd.xlane.f32.xlu0 %v1099
    %v1101 = vpop.xlane.xlu0 %1100
    %v1102 = vadd.f32 %v1009, %v1010
    %1103 = vadd.xlane.f32.xlu0 %v1102
    %v1104 = vpop.xlane.xlu0 %1103
    %v1105 = vadd.f32 %v1011, %v1012
    %1106 = vadd.xlane.f32.xlu0 %v1105
    %v1107 = vpop.xlane.xlu0 %1106
    %v1108 = vadd.f32 %v1013, %v1014
    %1109 = vadd.xlane.f32.xlu0 %v1108
    %v1110 = vpop.xlane.xlu0 %1109
    %v1111 = vmax.f32 %v1017, 1e-24
    %v1112 = vmax.f32 %v1020, 1e-24
    %v1113 = vmax.f32 %v1023, 1e-24
    %v1114 = vmax.f32 %v1026, 1e-24
    %v1115 = vmax.f32 %v1029, 1e-24
    %v1116 = vmax.f32 %v1032, 1e-24
    %v1117 = vmax.f32 %v1035, 1e-24
    %v1118 = vmax.f32 %v1038, 1e-24
    %v1119 = vmax.f32 %v1041, 1e-24
    %v1120 = vmax.f32 %v1044, 1e-24
    %v1121 = vmax.f32 %v1047, 1e-24
    %v1122 = vmax.f32 %v1050, 1e-24
    %v1123 = vmax.f32 %v1053, 1e-24
    %v1124 = vmax.f32 %v1056, 1e-24
    %v1125 = vmax.f32 %v1059, 1e-24
    %v1126 = vmax.f32 %v1062, 1e-24
    %v1127 = vmax.f32 %v1065, 1e-24
    %v1128 = vmax.f32 %v1068, 1e-24
    %v1129 = vmax.f32 %v1071, 1e-24
    %v1130 = vmax.f32 %v1074, 1e-24
    %v1131 = vmax.f32 %v1077, 1e-24
    %v1132 = vmax.f32 %v1080, 1e-24
    %v1133 = vmax.f32 %v1083, 1e-24
    %v1134 = vmax.f32 %v1086, 1e-24
    %v1135 = vmax.f32 %v1089, 1e-24
    %v1136 = vmax.f32 %v1092, 1e-24
    %v1137 = vmax.f32 %v1095, 1e-24
    %v1138 = vmax.f32 %v1098, 1e-24
    %v1139 = vmax.f32 %v1101, 1e-24
    %v1140 = vmax.f32 %v1104, 1e-24
    %v1141 = vmax.f32 %v1107, 1e-24
    %v1142 = vmax.f32 %v1110, 1e-24
    %v1143 = vrsqrt.pop %v1111
    %v1144 = vrsqrt.pop %v1112
    %v1145 = vrsqrt.pop %v1113
    %v1146 = vrsqrt.pop %v1114
    %v1147 = vrsqrt.pop %v1115
    %v1148 = vrsqrt.pop %v1116
    %v1149 = vrsqrt.pop %v1117
    %v1150 = vrsqrt.pop %v1118
    %v1151 = vrsqrt.pop %v1119
    %v1152 = vrsqrt.pop %v1120
    %v1153 = vrsqrt.pop %v1121
    %v1154 = vrsqrt.pop %v1122
    %v1155 = vrsqrt.pop %v1123
    %v1156 = vrsqrt.pop %v1124
    %v1157 = vrsqrt.pop %v1125
    %v1158 = vrsqrt.pop %v1126
    %v1159 = vrsqrt.pop %v1127
    %v1160 = vrsqrt.pop %v1128
    %v1161 = vrsqrt.pop %v1129
    %v1162 = vrsqrt.pop %v1130
    %v1163 = vrsqrt.pop %v1131
    %v1164 = vrsqrt.pop %v1132
    %v1165 = vrsqrt.pop %v1133
    %v1166 = vrsqrt.pop %v1134
    %v1167 = vrsqrt.pop %v1135
    %v1168 = vrsqrt.pop %v1136
    %v1169 = vrsqrt.pop %v1137
    %v1170 = vrsqrt.pop %v1138
    %v1171 = vrsqrt.pop %v1139
    %v1172 = vrsqrt.pop %v1140
    %v1173 = vrsqrt.pop %v1141
    %v1174 = vrsqrt.pop %v1142
    %v1175 = vmul.f32 %v887, %v1143
    %v1176 = vmul.f32 %v888, %v1143
    %v1177 = vmul.f32 %v889, %v1144
    %v1178 = vmul.f32 %v890, %v1144
    %v1179 = vmul.f32 %v891, %v1145
    %v1180 = vmul.f32 %v892, %v1145
    %v1181 = vmul.f32 %v893, %v1146
    %v1182 = vmul.f32 %v894, %v1146
    %v1183 = vmul.f32 %v895, %v1147
    %v1184 = vmul.f32 %v896, %v1147
    %v1185 = vmul.f32 %v897, %v1148
    %v1186 = vmul.f32 %v898, %v1148
    %v1187 = vmul.f32 %v899, %v1149
    %v1188 = vmul.f32 %v900, %v1149
    %v1189 = vmul.f32 %v901, %v1150
    %v1190 = vmul.f32 %v902, %v1150
    %v1191 = vmul.f32 %v903, %v1151
    %v1192 = vmul.f32 %v904, %v1151
    %v1193 = vmul.f32 %v905, %v1152
    %v1194 = vmul.f32 %v906, %v1152
    %v1195 = vmul.f32 %v907, %v1153
    %v1196 = vmul.f32 %v908, %v1153
    %v1197 = vmul.f32 %v909, %v1154
    %v1198 = vmul.f32 %v910, %v1154
    %v1199 = vmul.f32 %v911, %v1155
    %v1200 = vmul.f32 %v912, %v1155
    %v1201 = vmul.f32 %v913, %v1156
    %v1202 = vmul.f32 %v914, %v1156
    %v1203 = vmul.f32 %v915, %v1157
    %v1204 = vmul.f32 %v916, %v1157
    %v1205 = vmul.f32 %v917, %v1158
    %v1206 = vmul.f32 %v918, %v1158
    %v1207 = vmul.f32 %v919, %v1159
    %v1208 = vmul.f32 %v920, %v1159
    %v1209 = vmul.f32 %v921, %v1160
    %v1210 = vmul.f32 %v922, %v1160
    %v1211 = vmul.f32 %v923, %v1161
    %v1212 = vmul.f32 %v924, %v1161
    %v1213 = vmul.f32 %v925, %v1162
    %v1214 = vmul.f32 %v926, %v1162
    %v1215 = vmul.f32 %v927, %v1163
    %v1216 = vmul.f32 %v928, %v1163
    %v1217 = vmul.f32 %v929, %v1164
    %v1218 = vmul.f32 %v930, %v1164
    %v1219 = vmul.f32 %v931, %v1165
    %v1220 = vmul.f32 %v932, %v1165
    %v1221 = vmul.f32 %v933, %v1166
    %v1222 = vmul.f32 %v934, %v1166
    %v1223 = vmul.f32 %v935, %v1167
    %v1224 = vmul.f32 %v936, %v1167
    %v1225 = vmul.f32 %v937, %v1168
    %v1226 = vmul.f32 %v938, %v1168
    %v1227 = vmul.f32 %v939, %v1169
    %v1228 = vmul.f32 %v940, %v1169
    %v1229 = vmul.f32 %v941, %v1170
    %v1230 = vmul.f32 %v942, %v1170
    %v1231 = vmul.f32 %v943, %v1171
    %v1232 = vmul.f32 %v944, %v1171
    %v1233 = vmul.f32 %v945, %v1172
    %v1234 = vmul.f32 %v946, %v1172
    %v1235 = vmul.f32 %v947, %v1173
    %v1236 = vmul.f32 %v948, %v1173
    %v1237 = vmul.f32 %v949, %v1174
    %v1238 = vmul.f32 %v950, %v1174
    %v1239 = vld [vmem:[%s6] sm:$0xff]
    %v1240 = vld [vmem:[%s6 + $0x8] sm:$0xff]
    %v1241 = vld [vmem:[%s6 + $0x10] sm:$0xff]
    %v1242 = vld [vmem:[%s6 + $0x18] sm:$0xff]
    %v1243 = vld [vmem:[%s6 + $0x20] sm:$0xff]
    %v1244 = vld [vmem:[%s6 + $0x28] sm:$0xff]
    %v1245 = vld [vmem:[%s6 + $0x30] sm:$0xff]
    %v1246 = vld [vmem:[%s6 + $0x38] sm:$0xff]
    %v1247 = vld [vmem:[%s6 + $0x40] sm:$0xff]
    %v1248 = vld [vmem:[%s6 + $0x48] sm:$0xff]
    %v1249 = vld [vmem:[%s6 + $0x50] sm:$0xff]
    %v1250 = vld [vmem:[%s6 + $0x58] sm:$0xff]
    %v1251 = vld [vmem:[%s6 + $0x60] sm:$0xff]
    %v1252 = vld [vmem:[%s6 + $0x68] sm:$0xff]
    %v1253 = vld [vmem:[%s6 + $0x70] sm:$0xff]
    %v1254 = vld [vmem:[%s6 + $0x78] sm:$0xff]
    %v1255 = vld [vmem:[%s6 + $0x80] sm:$0xff]
    %v1256 = vld [vmem:[%s6 + $0x88] sm:$0xff]
    %v1257 = vld [vmem:[%s6 + $0x90] sm:$0xff]
    %v1258 = vld [vmem:[%s6 + $0x98] sm:$0xff]
    %v1259 = vld [vmem:[%s6 + $0xa0] sm:$0xff]
    %v1260 = vld [vmem:[%s6 + $0xa8] sm:$0xff]
    %v1261 = vld [vmem:[%s6 + $0xb0] sm:$0xff]
    %v1262 = vld [vmem:[%s6 + $0xb8] sm:$0xff]
    %v1263 = vld [vmem:[%s6 + $0xc0] sm:$0xff]
    %v1264 = vld [vmem:[%s6 + $0xc8] sm:$0xff]
    %v1265 = vld [vmem:[%s6 + $0xd0] sm:$0xff]
    %v1266 = vld [vmem:[%s6 + $0xd8] sm:$0xff]
    %v1267 = vld [vmem:[%s6 + $0xe0] sm:$0xff]
    %v1268 = vld [vmem:[%s6 + $0xe8] sm:$0xff]
    %v1269 = vld [vmem:[%s6 + $0xf0] sm:$0xff]
    %v1270 = vld [vmem:[%s6 + $0xf8] sm:$0xff]
    %v1271 = vld [vmem:[%s7] sm:$0x3]
    %v1272 = vld [vmem:[%s8] sm:$0x3]
    %v1273 = vld [vmem:[%s9] sm:$0x3]
    %v1274 = vpack.c.bf16 %v1177, %v1175
    %v1275 = vpack.c.bf16 %v1178, %v1176
    %v1276 = vpack.c.bf16 %v1181, %v1179
    %v1277 = vpack.c.bf16 %v1182, %v1180
    %v1278 = vpack.c.bf16 %v1185, %v1183
    %v1279 = vpack.c.bf16 %v1186, %v1184
    %v1280 = vpack.c.bf16 %v1189, %v1187
    %v1281 = vpack.c.bf16 %v1190, %v1188
    %v1282 = vpack.c.bf16 %v1193, %v1191
    %v1283 = vpack.c.bf16 %v1194, %v1192
    %v1284 = vpack.c.bf16 %v1197, %v1195
    %v1285 = vpack.c.bf16 %v1198, %v1196
    %v1286 = vpack.c.bf16 %v1201, %v1199
    %v1287 = vpack.c.bf16 %v1202, %v1200
    %v1288 = vpack.c.bf16 %v1205, %v1203
    %v1289 = vpack.c.bf16 %v1206, %v1204
    %v1290 = vpack.c.bf16 %v1209, %v1207
    %v1291 = vpack.c.bf16 %v1210, %v1208
    %v1292 = vpack.c.bf16 %v1213, %v1211
    %v1293 = vpack.c.bf16 %v1214, %v1212
    %v1294 = vpack.c.bf16 %v1217, %v1215
    %v1295 = vpack.c.bf16 %v1218, %v1216
    %v1296 = vpack.c.bf16 %v1221, %v1219
    %v1297 = vpack.c.bf16 %v1222, %v1220
    %v1298 = vpack.c.bf16 %v1225, %v1223
    %v1299 = vpack.c.bf16 %v1226, %v1224
    %v1300 = vpack.c.bf16 %v1229, %v1227
    %v1301 = vpack.c.bf16 %v1230, %v1228
    %v1302 = vpack.c.bf16 %v1233, %v1231
    %v1303 = vpack.c.bf16 %v1234, %v1232
    %v1304 = vpack.c.bf16 %v1237, %v1235
    %v1305 = vpack.c.bf16 %v1238, %v1236
    %v1307 = vlaneseq
    %v1308 = vshrl.u32 %v1307, 7
    %v1309 = vsub.s32 0, %v1308
    %v1310 = vrot.slane %v1271, %v1309
    %v1311 = vlaneseq
    %v1312 = vshrl.u32 %v1311, 7
    %v1313 = vsub.s32 1, %v1312
    %v1314 = vrot.slane %v1271, %v1313
    %v1349 = vunpack.c.l.b16 %v1239
    %v1350 = vunpack.c.h.b16 %v1239
    %v1351 = vunpack.c.l.b16 %v1240
    %v1352 = vunpack.c.h.b16 %v1240
    %v1353 = vunpack.c.l.b16 %v1241
    %v1354 = vunpack.c.h.b16 %v1241
    %v1355 = vunpack.c.l.b16 %v1242
    %v1356 = vunpack.c.h.b16 %v1242
    %v1357 = vunpack.c.l.b16 %v1243
    %v1358 = vunpack.c.h.b16 %v1243
    %v1359 = vunpack.c.l.b16 %v1244
    %v1360 = vunpack.c.h.b16 %v1244
    %v1361 = vunpack.c.l.b16 %v1245
    %v1362 = vunpack.c.h.b16 %v1245
    %v1363 = vunpack.c.l.b16 %v1246
    %v1364 = vunpack.c.h.b16 %v1246
    %v1365 = vunpack.c.l.b16 %v1247
    %v1366 = vunpack.c.h.b16 %v1247
    %v1367 = vunpack.c.l.b16 %v1248
    %v1368 = vunpack.c.h.b16 %v1248
    %v1369 = vunpack.c.l.b16 %v1249
    %v1370 = vunpack.c.h.b16 %v1249
    %v1371 = vunpack.c.l.b16 %v1250
    %v1372 = vunpack.c.h.b16 %v1250
    %v1373 = vunpack.c.l.b16 %v1251
    %v1374 = vunpack.c.h.b16 %v1251
    %v1375 = vunpack.c.l.b16 %v1252
    %v1376 = vunpack.c.h.b16 %v1252
    %v1377 = vunpack.c.l.b16 %v1253
    %v1378 = vunpack.c.h.b16 %v1253
    %v1379 = vunpack.c.l.b16 %v1254
    %v1380 = vunpack.c.h.b16 %v1254
    %v1381 = vunpack.c.l.b16 %v1255
    %v1382 = vunpack.c.h.b16 %v1255
    %v1383 = vunpack.c.l.b16 %v1256
    %v1384 = vunpack.c.h.b16 %v1256
    %v1385 = vunpack.c.l.b16 %v1257
    %v1386 = vunpack.c.h.b16 %v1257
    %v1387 = vunpack.c.l.b16 %v1258
    %v1388 = vunpack.c.h.b16 %v1258
    %v1389 = vunpack.c.l.b16 %v1259
    %v1390 = vunpack.c.h.b16 %v1259
    %v1391 = vunpack.c.l.b16 %v1260
    %v1392 = vunpack.c.h.b16 %v1260
    %v1393 = vunpack.c.l.b16 %v1261
    %v1394 = vunpack.c.h.b16 %v1261
    %v1395 = vunpack.c.l.b16 %v1262
    %v1396 = vunpack.c.h.b16 %v1262
    %v1397 = vunpack.c.l.b16 %v1263
    %v1398 = vunpack.c.h.b16 %v1263
    %v1399 = vunpack.c.l.b16 %v1264
    %v1400 = vunpack.c.h.b16 %v1264
    %v1401 = vunpack.c.l.b16 %v1265
    %v1402 = vunpack.c.h.b16 %v1265
    %v1403 = vunpack.c.l.b16 %v1266
    %v1404 = vunpack.c.h.b16 %v1266
    %v1405 = vunpack.c.l.b16 %v1267
    %v1406 = vunpack.c.h.b16 %v1267
    %v1407 = vunpack.c.l.b16 %v1268
    %v1408 = vunpack.c.h.b16 %v1268
    %v1409 = vunpack.c.l.b16 %v1269
    %v1410 = vunpack.c.h.b16 %v1269
    %v1411 = vunpack.c.l.b16 %v1270
    %v1412 = vunpack.c.h.b16 %v1270
    %v1413 = vpack.c.b16 %v1351, %v1349
    %v1414 = vpack.c.b16 %v1352, %v1350
    %v1415 = vpack.c.b16 %v1355, %v1353
    %v1416 = vpack.c.b16 %v1356, %v1354
    %v1417 = vpack.c.b16 %v1359, %v1357
    %v1418 = vpack.c.b16 %v1360, %v1358
    %v1419 = vpack.c.b16 %v1363, %v1361
    %v1420 = vpack.c.b16 %v1364, %v1362
    %v1421 = vpack.c.b16 %v1367, %v1365
    %v1422 = vpack.c.b16 %v1368, %v1366
    %v1423 = vpack.c.b16 %v1371, %v1369
    %v1424 = vpack.c.b16 %v1372, %v1370
    %v1425 = vpack.c.b16 %v1375, %v1373
    %v1426 = vpack.c.b16 %v1376, %v1374
    %v1427 = vpack.c.b16 %v1379, %v1377
    %v1428 = vpack.c.b16 %v1380, %v1378
    %v1429 = vpack.c.b16 %v1383, %v1381
    %v1430 = vpack.c.b16 %v1384, %v1382
    %v1431 = vpack.c.b16 %v1387, %v1385
    %v1432 = vpack.c.b16 %v1388, %v1386
    %v1433 = vpack.c.b16 %v1391, %v1389
    %v1434 = vpack.c.b16 %v1392, %v1390
    %v1435 = vpack.c.b16 %v1395, %v1393
    %v1436 = vpack.c.b16 %v1396, %v1394
    %v1437 = vpack.c.b16 %v1399, %v1397
    %v1438 = vpack.c.b16 %v1400, %v1398
    %v1439 = vpack.c.b16 %v1403, %v1401
    %v1440 = vpack.c.b16 %v1404, %v1402
    %v1441 = vpack.c.b16 %v1407, %v1405
    %v1442 = vpack.c.b16 %v1408, %v1406
    %v1443 = vpack.c.b16 %v1411, %v1409
    %v1444 = vpack.c.b16 %v1412, %v1410
    %1477 = vmatprep.subr.bf16.mxu0 %v1414
    %1478 = vmatpush1.bf16.msra.mxu0 %v1413
    %1479 = vmatprep.subr.bf16.mxu0 %v1416
    %1480 = vmatpush1.bf16.msra.mxu0 %v1415
    %1481 = vmatprep.subr.bf16.mxu0 %v1418
    %1482 = vmatpush1.bf16.msra.mxu0 %v1417
    %1483 = vmatprep.subr.bf16.mxu0 %v1420
    %1484 = vmatpush1.bf16.msra.mxu0 %v1419
    %1485 = vmatprep.subr.bf16.mxu0 %v1422
    %1486 = vmatpush1.bf16.msra.mxu0 %v1421
    %1487 = vmatprep.subr.bf16.mxu0 %v1424
    %1488 = vmatpush1.bf16.msra.mxu0 %v1423
    %1489 = vmatprep.subr.bf16.mxu0 %v1426
    %1490 = vmatpush1.bf16.msra.mxu0 %v1425
    %1491 = vmatprep.subr.bf16.mxu0 %v1428
    %1492 = vmatpush1.bf16.msra.mxu0 %v1427
    %1493 = vmatprep.subr.bf16.mxu0 %v1430
    %1494 = vmatpush1.bf16.msra.mxu0 %v1429
    %1495 = vmatprep.subr.bf16.mxu0 %v1432
    %1496 = vmatpush1.bf16.msra.mxu0 %v1431
    %1497 = vmatprep.subr.bf16.mxu0 %v1434
    %1498 = vmatpush1.bf16.msra.mxu0 %v1433
    %1499 = vmatprep.subr.bf16.mxu0 %v1436
    %1500 = vmatpush1.bf16.msra.mxu0 %v1435
    %1501 = vmatprep.subr.bf16.mxu0 %v1438
    %1502 = vmatpush1.bf16.msra.mxu0 %v1437
    %1503 = vmatprep.subr.bf16.mxu0 %v1440
    %1504 = vmatpush1.bf16.msra.mxu0 %v1439
    %1505 = vmatprep.subr.bf16.mxu0 %v1442
    %1506 = vmatpush1.bf16.msra.mxu0 %v1441
    %1507 = vmatprep.subr.bf16.mxu0 %v1444
    %1508 = vmatpush1.bf16.msra.mxu0 %v1443
    %1509 = vmatprep.mubr.bf16.mxu0 %v1275
    %1510 = vmatmul.mubr.bf16.gmra.mrb[0].mxu0 %v1274
    %v1511 = vpop.f32.mrb[0].mxu0
    %v1512 = vadd.f32 %v1310, %v1511
    %v1513 = vpop.f32.mrb[0].mxu0
    %v1514 = vadd.f32 %v1314, %v1513
    %v1515 = vpop.f32.mrb[0].mxu0
    %v1516 = vadd.f32 %v1310, %v1515
    %v1517 = vpop.f32.mrb[0].mxu0
    %v1518 = vadd.f32 %v1314, %v1517
    %1519 = vmatprep.mubr.bf16.mxu0 %v1277
    %1520 = vmatmul.mubr.bf16.gmra.mrb[0].mxu0 %v1276
    %v1521 = vpop.f32.mrb[0].mxu0
    %v1522 = vadd.f32 %v1310, %v1521
    %v1523 = vpop.f32.mrb[0].mxu0
    %v1524 = vadd.f32 %v1314, %v1523
    %v1525 = vpop.f32.mrb[0].mxu0
    %v1526 = vadd.f32 %v1310, %v1525
    %v1527 = vpop.f32.mrb[0].mxu0
    %v1528 = vadd.f32 %v1314, %v1527
    %1529 = vmatprep.mubr.bf16.mxu0 %v1279
    %1530 = vmatmul.mubr.bf16.gmra.mrb[0].mxu0 %v1278
    %v1531 = vpop.f32.mrb[0].mxu0
    %v1532 = vadd.f32 %v1310, %v1531
    %v1533 = vpop.f32.mrb[0].mxu0
    %v1534 = vadd.f32 %v1314, %v1533
    %v1535 = vpop.f32.mrb[0].mxu0
    %v1536 = vadd.f32 %v1310, %v1535
    %v1537 = vpop.f32.mrb[0].mxu0
    %v1538 = vadd.f32 %v1314, %v1537
    %1539 = vmatprep.mubr.bf16.mxu0 %v1281
    %1540 = vmatmul.mubr.bf16.gmra.mrb[0].mxu0 %v1280
    %v1541 = vpop.f32.mrb[0].mxu0
    %v1542 = vadd.f32 %v1310, %v1541
    %v1543 = vpop.f32.mrb[0].mxu0
    %v1544 = vadd.f32 %v1314, %v1543
    %v1545 = vpop.f32.mrb[0].mxu0
    %v1546 = vadd.f32 %v1310, %v1545
    %v1547 = vpop.f32.mrb[0].mxu0
    %v1548 = vadd.f32 %v1314, %v1547
    %1549 = vmatprep.mubr.bf16.mxu0 %v1283
    %1550 = vmatmul.mubr.bf16.gmra.mrb[0].mxu0 %v1282
    %v1551 = vpop.f32.mrb[0].mxu0
    %v1552 = vadd.f32 %v1310, %v1551
    %v1553 = vpop.f32.mrb[0].mxu0
    %v1554 = vadd.f32 %v1314, %v1553
    %v1555 = vpop.f32.mrb[0].mxu0
    %v1556 = vadd.f32 %v1310, %v1555
    %v1557 = vpop.f32.mrb[0].mxu0
    %v1558 = vadd.f32 %v1314, %v1557
    %1559 = vmatprep.mubr.bf16.mxu0 %v1285
    %1560 = vmatmul.mubr.bf16.gmra.mrb[0].mxu0 %v1284
    %v1561 = vpop.f32.mrb[0].mxu0
    %v1562 = vadd.f32 %v1310, %v1561
    %v1563 = vpop.f32.mrb[0].mxu0
    %v1564 = vadd.f32 %v1314, %v1563
    %v1565 = vpop.f32.mrb[0].mxu0
    %v1566 = vadd.f32 %v1310, %v1565
    %v1567 = vpop.f32.mrb[0].mxu0
    %v1568 = vadd.f32 %v1314, %v1567
    %1569 = vmatprep.mubr.bf16.mxu0 %v1287
    %1570 = vmatmul.mubr.bf16.gmra.mrb[0].mxu0 %v1286
    %v1571 = vpop.f32.mrb[0].mxu0
    %v1572 = vadd.f32 %v1310, %v1571
    %v1573 = vpop.f32.mrb[0].mxu0
    %v1574 = vadd.f32 %v1314, %v1573
    %v1575 = vpop.f32.mrb[0].mxu0
    %v1576 = vadd.f32 %v1310, %v1575
    %v1577 = vpop.f32.mrb[0].mxu0
    %v1578 = vadd.f32 %v1314, %v1577
    %1579 = vmatprep.mubr.bf16.mxu0 %v1289
    %1580 = vmatmul.mubr.bf16.gmra.mrb[0].mxu0 %v1288
    %v1581 = vpop.f32.mrb[0].mxu0
    %v1582 = vadd.f32 %v1310, %v1581
    %v1583 = vpop.f32.mrb[0].mxu0
    %v1584 = vadd.f32 %v1314, %v1583
    %v1585 = vpop.f32.mrb[0].mxu0
    %v1586 = vadd.f32 %v1310, %v1585
    %v1587 = vpop.f32.mrb[0].mxu0
    %v1588 = vadd.f32 %v1314, %v1587
    %1589 = vmatprep.mubr.bf16.mxu0 %v1291
    %1590 = vmatmul.mubr.bf16.gmra.mrb[0].mxu0 %v1290
    %v1591 = vpop.f32.mrb[0].mxu0
    %v1592 = vadd.f32 %v1310, %v1591
    %v1593 = vpop.f32.mrb[0].mxu0
    %v1594 = vadd.f32 %v1314, %v1593
    %v1595 = vpop.f32.mrb[0].mxu0
    %v1596 = vadd.f32 %v1310, %v1595
    %v1597 = vpop.f32.mrb[0].mxu0
    %v1598 = vadd.f32 %v1314, %v1597
    %1599 = vmatprep.mubr.bf16.mxu0 %v1293
    %1600 = vmatmul.mubr.bf16.gmra.mrb[0].mxu0 %v1292
    %v1601 = vpop.f32.mrb[0].mxu0
    %v1602 = vadd.f32 %v1310, %v1601
    %v1603 = vpop.f32.mrb[0].mxu0
    %v1604 = vadd.f32 %v1314, %v1603
    %v1605 = vpop.f32.mrb[0].mxu0
    %v1606 = vadd.f32 %v1310, %v1605
    %v1607 = vpop.f32.mrb[0].mxu0
    %v1608 = vadd.f32 %v1314, %v1607
    %1609 = vmatprep.mubr.bf16.mxu0 %v1295
    %1610 = vmatmul.mubr.bf16.gmra.mrb[0].mxu0 %v1294
    %v1611 = vpop.f32.mrb[0].mxu0
    %v1612 = vadd.f32 %v1310, %v1611
    %v1613 = vpop.f32.mrb[0].mxu0
    %v1614 = vadd.f32 %v1314, %v1613
    %v1615 = vpop.f32.mrb[0].mxu0
    %v1616 = vadd.f32 %v1310, %v1615
    %v1617 = vpop.f32.mrb[0].mxu0
    %v1618 = vadd.f32 %v1314, %v1617
    %1619 = vmatprep.mubr.bf16.mxu0 %v1297
    %1620 = vmatmul.mubr.bf16.gmra.mrb[0].mxu0 %v1296
    %v1621 = vpop.f32.mrb[0].mxu0
    %v1622 = vadd.f32 %v1310, %v1621
    %v1623 = vpop.f32.mrb[0].mxu0
    %v1624 = vadd.f32 %v1314, %v1623
    %v1625 = vpop.f32.mrb[0].mxu0
    %v1626 = vadd.f32 %v1310, %v1625
    %v1627 = vpop.f32.mrb[0].mxu0
    %v1628 = vadd.f32 %v1314, %v1627
    %1629 = vmatprep.mubr.bf16.mxu0 %v1299
    %1630 = vmatmul.mubr.bf16.gmra.mrb[0].mxu0 %v1298
    %v1631 = vpop.f32.mrb[0].mxu0
    %v1632 = vadd.f32 %v1310, %v1631
    %v1633 = vpop.f32.mrb[0].mxu0
    %v1634 = vadd.f32 %v1314, %v1633
    %v1635 = vpop.f32.mrb[0].mxu0
    %v1636 = vadd.f32 %v1310, %v1635
    %v1637 = vpop.f32.mrb[0].mxu0
    %v1638 = vadd.f32 %v1314, %v1637
    %1639 = vmatprep.mubr.bf16.mxu0 %v1301
    %1640 = vmatmul.mubr.bf16.gmra.mrb[0].mxu0 %v1300
    %v1641 = vpop.f32.mrb[0].mxu0
    %v1642 = vadd.f32 %v1310, %v1641
    %v1643 = vpop.f32.mrb[0].mxu0
    %v1644 = vadd.f32 %v1314, %v1643
    %v1645 = vpop.f32.mrb[0].mxu0
    %v1646 = vadd.f32 %v1310, %v1645
    %v1647 = vpop.f32.mrb[0].mxu0
    %v1648 = vadd.f32 %v1314, %v1647
    %1649 = vmatprep.mubr.bf16.mxu0 %v1303
    %1650 = vmatmul.mubr.bf16.gmra.mrb[0].mxu0 %v1302
    %v1651 = vpop.f32.mrb[0].mxu0
    %v1652 = vadd.f32 %v1310, %v1651
    %v1653 = vpop.f32.mrb[0].mxu0
    %v1654 = vadd.f32 %v1314, %v1653
    %v1655 = vpop.f32.mrb[0].mxu0
    %v1656 = vadd.f32 %v1310, %v1655
    %v1657 = vpop.f32.mrb[0].mxu0
    %v1658 = vadd.f32 %v1314, %v1657
    %1659 = vmatprep.mubr.bf16.mxu0 %v1305
    %1660 = vmatmul.mubr.bf16.gmra.mrb[0].mxu0 %v1304
    %v1661 = vpop.f32.mrb[0].mxu0
    %v1662 = vadd.f32 %v1310, %v1661
    %v1663 = vpop.f32.mrb[0].mxu0
    %v1664 = vadd.f32 %v1314, %v1663
    %v1665 = vpop.f32.mrb[0].mxu0
    %v1666 = vadd.f32 %v1310, %v1665
    %v1667 = vpop.f32.mrb[0].mxu0
    %v1668 = vadd.f32 %v1314, %v1667
    %1669 = vdwg.mxu0
    %v1670 = vadd.f32 %v1512, %v1516
    %v1671 = vadd.f32 %v1670, %v1522
    %v1672 = vadd.f32 %v1671, %v1526
    %v1673 = vadd.f32 %v1672, %v1532
    %v1674 = vadd.f32 %v1673, %v1536
    %v1675 = vadd.f32 %v1674, %v1542
    %v1676 = vadd.f32 %v1675, %v1546
    %v1677 = vadd.f32 %v1676, %v1552
    %v1678 = vadd.f32 %v1677, %v1556
    %v1679 = vadd.f32 %v1678, %v1562
    %v1680 = vadd.f32 %v1679, %v1566
    %v1681 = vadd.f32 %v1680, %v1572
    %v1682 = vadd.f32 %v1681, %v1576
    %v1683 = vadd.f32 %v1682, %v1582
    %v1684 = vadd.f32 %v1683, %v1586
    %v1685 = vadd.f32 %v1684, %v1592
    %v1686 = vadd.f32 %v1685, %v1596
    %v1687 = vadd.f32 %v1686, %v1602
    %v1688 = vadd.f32 %v1687, %v1606
    %v1689 = vadd.f32 %v1688, %v1612
    %v1690 = vadd.f32 %v1689, %v1616
    %v1691 = vadd.f32 %v1690, %v1622
    %v1692 = vadd.f32 %v1691, %v1626
    %v1693 = vadd.f32 %v1692, %v1632
    %v1694 = vadd.f32 %v1693, %v1636
    %v1695 = vadd.f32 %v1694, %v1642
    %v1696 = vadd.f32 %v1695, %v1646
    %v1697 = vadd.f32 %v1696, %v1652
    %v1698 = vadd.f32 %v1697, %v1656
    %v1699 = vadd.f32 %v1698, %v1662
    %v1700 = vadd.f32 %v1699, %v1666
    %v1701 = vrot.slane %v1700, 4
    %v1702 = vadd.f32 %v1700, %v1701
    %v1703 = vrot.slane %v1702, 2
    %v1704 = vadd.f32 %v1702, %v1703
    %v1705 = vrot.slane %v1704, 1
    %v1706 = vadd.f32 %v1704, %v1705
    %v1707 = vadd.f32 %v1514, %v1518
    %v1708 = vadd.f32 %v1707, %v1524
    %v1709 = vadd.f32 %v1708, %v1528
    %v1710 = vadd.f32 %v1709, %v1534
    %v1711 = vadd.f32 %v1710, %v1538
    %v1712 = vadd.f32 %v1711, %v1544
    %v1713 = vadd.f32 %v1712, %v1548
    %v1714 = vadd.f32 %v1713, %v1554
    %v1715 = vadd.f32 %v1714, %v1558
    %v1716 = vadd.f32 %v1715, %v1564
    %v1717 = vadd.f32 %v1716, %v1568
    %v1718 = vadd.f32 %v1717, %v1574
    %v1719 = vadd.f32 %v1718, %v1578
    %v1720 = vadd.f32 %v1719, %v1584
    %v1721 = vadd.f32 %v1720, %v1588
    %v1722 = vadd.f32 %v1721, %v1594
    %v1723 = vadd.f32 %v1722, %v1598
    %v1724 = vadd.f32 %v1723, %v1604
    %v1725 = vadd.f32 %v1724, %v1608
    %v1726 = vadd.f32 %v1725, %v1614
    %v1727 = vadd.f32 %v1726, %v1618
    %v1728 = vadd.f32 %v1727, %v1624
    %v1729 = vadd.f32 %v1728, %v1628
    %v1730 = vadd.f32 %v1729, %v1634
    %v1731 = vadd.f32 %v1730, %v1638
    %v1732 = vadd.f32 %v1731, %v1644
    %v1733 = vadd.f32 %v1732, %v1648
    %v1734 = vadd.f32 %v1733, %v1654
    %v1735 = vadd.f32 %v1734, %v1658
    %v1736 = vadd.f32 %v1735, %v1664
    %v1737 = vadd.f32 %v1736, %v1668
    %v1738 = vrot.slane %v1737, 4
    %v1739 = vadd.f32 %v1737, %v1738
    %v1740 = vrot.slane %v1739, 2
    %v1741 = vadd.f32 %v1739, %v1740
    %v1742 = vrot.slane %v1741, 1
    %v1743 = vadd.f32 %v1741, %v1742
    %v1744 = vmul.f32 %v1706, %v462
    %v1745 = vmul.f32 %v1743, %v462
    %v1746 = vsub.f32 %v1512, %v1744
    %v1747 = vsub.f32 %v1514, %v1745
    %v1748 = vsub.f32 %v1516, %v1744
    %v1749 = vsub.f32 %v1518, %v1745
    %v1750 = vsub.f32 %v1522, %v1744
    %v1751 = vsub.f32 %v1524, %v1745
    %v1752 = vsub.f32 %v1526, %v1744
    %v1753 = vsub.f32 %v1528, %v1745
    %v1754 = vsub.f32 %v1532, %v1744
    %v1755 = vsub.f32 %v1534, %v1745
    %v1756 = vsub.f32 %v1536, %v1744
    %v1757 = vsub.f32 %v1538, %v1745
    %v1758 = vsub.f32 %v1542, %v1744
    %v1759 = vsub.f32 %v1544, %v1745
    %v1760 = vsub.f32 %v1546, %v1744
    %v1761 = vsub.f32 %v1548, %v1745
    %v1762 = vsub.f32 %v1552, %v1744
    %v1763 = vsub.f32 %v1554, %v1745
    %v1764 = vsub.f32 %v1556, %v1744
    %v1765 = vsub.f32 %v1558, %v1745
    %v1766 = vsub.f32 %v1562, %v1744
    %v1767 = vsub.f32 %v1564, %v1745
    %v1768 = vsub.f32 %v1566, %v1744
    %v1769 = vsub.f32 %v1568, %v1745
    %v1770 = vsub.f32 %v1572, %v1744
    %v1771 = vsub.f32 %v1574, %v1745
    %v1772 = vsub.f32 %v1576, %v1744
    %v1773 = vsub.f32 %v1578, %v1745
    %v1774 = vsub.f32 %v1582, %v1744
    %v1775 = vsub.f32 %v1584, %v1745
    %v1776 = vsub.f32 %v1586, %v1744
    %v1777 = vsub.f32 %v1588, %v1745
    %v1778 = vsub.f32 %v1592, %v1744
    %v1779 = vsub.f32 %v1594, %v1745
    %v1780 = vsub.f32 %v1596, %v1744
    %v1781 = vsub.f32 %v1598, %v1745
    %v1782 = vsub.f32 %v1602, %v1744
    %v1783 = vsub.f32 %v1604, %v1745
    %v1784 = vsub.f32 %v1606, %v1744
    %v1785 = vsub.f32 %v1608, %v1745
    %v1786 = vsub.f32 %v1612, %v1744
    %v1787 = vsub.f32 %v1614, %v1745
    %v1788 = vsub.f32 %v1616, %v1744
    %v1789 = vsub.f32 %v1618, %v1745
    %v1790 = vsub.f32 %v1622, %v1744
    %v1791 = vsub.f32 %v1624, %v1745
    %v1792 = vsub.f32 %v1626, %v1744
    %v1793 = vsub.f32 %v1628, %v1745
    %v1794 = vsub.f32 %v1632, %v1744
    %v1795 = vsub.f32 %v1634, %v1745
    %v1796 = vsub.f32 %v1636, %v1744
    %v1797 = vsub.f32 %v1638, %v1745
    %v1798 = vsub.f32 %v1642, %v1744
    %v1799 = vsub.f32 %v1644, %v1745
    %v1800 = vsub.f32 %v1646, %v1744
    %v1801 = vsub.f32 %v1648, %v1745
    %v1802 = vsub.f32 %v1652, %v1744
    %v1803 = vsub.f32 %v1654, %v1745
    %v1804 = vsub.f32 %v1656, %v1744
    %v1805 = vsub.f32 %v1658, %v1745
    %v1806 = vsub.f32 %v1662, %v1744
    %v1807 = vsub.f32 %v1664, %v1745
    %v1808 = vsub.f32 %v1666, %v1744
    %v1809 = vsub.f32 %v1668, %v1745
    %v1810 = vmul.f32 %v1746, %v1746
    %v1811 = vmul.f32 %v1747, %v1747
    %v1812 = vmul.f32 %v1748, %v1748
    %v1813 = vmul.f32 %v1749, %v1749
    %v1814 = vmul.f32 %v1750, %v1750
    %v1815 = vmul.f32 %v1751, %v1751
    %v1816 = vmul.f32 %v1752, %v1752
    %v1817 = vmul.f32 %v1753, %v1753
    %v1818 = vmul.f32 %v1754, %v1754
    %v1819 = vmul.f32 %v1755, %v1755
    %v1820 = vmul.f32 %v1756, %v1756
    %v1821 = vmul.f32 %v1757, %v1757
    %v1822 = vmul.f32 %v1758, %v1758
    %v1823 = vmul.f32 %v1759, %v1759
    %v1824 = vmul.f32 %v1760, %v1760
    %v1825 = vmul.f32 %v1761, %v1761
    %v1826 = vmul.f32 %v1762, %v1762
    %v1827 = vmul.f32 %v1763, %v1763
    %v1828 = vmul.f32 %v1764, %v1764
    %v1829 = vmul.f32 %v1765, %v1765
    %v1830 = vmul.f32 %v1766, %v1766
    %v1831 = vmul.f32 %v1767, %v1767
    %v1832 = vmul.f32 %v1768, %v1768
    %v1833 = vmul.f32 %v1769, %v1769
    %v1834 = vmul.f32 %v1770, %v1770
    %v1835 = vmul.f32 %v1771, %v1771
    %v1836 = vmul.f32 %v1772, %v1772
    %v1837 = vmul.f32 %v1773, %v1773
    %v1838 = vmul.f32 %v1774, %v1774
    %v1839 = vmul.f32 %v1775, %v1775
    %v1840 = vmul.f32 %v1776, %v1776
    %v1841 = vmul.f32 %v1777, %v1777
    %v1842 = vmul.f32 %v1778, %v1778
    %v1843 = vmul.f32 %v1779, %v1779
    %v1844 = vmul.f32 %v1780, %v1780
    %v1845 = vmul.f32 %v1781, %v1781
    %v1846 = vmul.f32 %v1782, %v1782
    %v1847 = vmul.f32 %v1783, %v1783
    %v1848 = vmul.f32 %v1784, %v1784
    %v1849 = vmul.f32 %v1785, %v1785
    %v1850 = vmul.f32 %v1786, %v1786
    %v1851 = vmul.f32 %v1787, %v1787
    %v1852 = vmul.f32 %v1788, %v1788
    %v1853 = vmul.f32 %v1789, %v1789
    %v1854 = vmul.f32 %v1790, %v1790
    %v1855 = vmul.f32 %v1791, %v1791
    %v1856 = vmul.f32 %v1792, %v1792
    %v1857 = vmul.f32 %v1793, %v1793
    %v1858 = vmul.f32 %v1794, %v1794
    %v1859 = vmul.f32 %v1795, %v1795
    %v1860 = vmul.f32 %v1796, %v1796
    %v1861 = vmul.f32 %v1797, %v1797
    %v1862 = vmul.f32 %v1798, %v1798
    %v1863 = vmul.f32 %v1799, %v1799
    %v1864 = vmul.f32 %v1800, %v1800
    %v1865 = vmul.f32 %v1801, %v1801
    %v1866 = vmul.f32 %v1802, %v1802
    %v1867 = vmul.f32 %v1803, %v1803
    %v1868 = vmul.f32 %v1804, %v1804
    %v1869 = vmul.f32 %v1805, %v1805
    %v1870 = vmul.f32 %v1806, %v1806
    %v1871 = vmul.f32 %v1807, %v1807
    %v1872 = vmul.f32 %v1808, %v1808
    %v1873 = vmul.f32 %v1809, %v1809
    %v1874 = vadd.f32 %v1810, %v1812
    %v1875 = vadd.f32 %v1874, %v1814
    %v1876 = vadd.f32 %v1875, %v1816
    %v1877 = vadd.f32 %v1876, %v1818
    %v1878 = vadd.f32 %v1877, %v1820
    %v1879 = vadd.f32 %v1878, %v1822
    %v1880 = vadd.f32 %v1879, %v1824
    %v1881 = vadd.f32 %v1880, %v1826
    %v1882 = vadd.f32 %v1881, %v1828
    %v1883 = vadd.f32 %v1882, %v1830
    %v1884 = vadd.f32 %v1883, %v1832
    %v1885 = vadd.f32 %v1884, %v1834
    %v1886 = vadd.f32 %v1885, %v1836
    %v1887 = vadd.f32 %v1886, %v1838
    %v1888 = vadd.f32 %v1887, %v1840
    %v1889 = vadd.f32 %v1888, %v1842
    %v1890 = vadd.f32 %v1889, %v1844
    %v1891 = vadd.f32 %v1890, %v1846
    %v1892 = vadd.f32 %v1891, %v1848
    %v1893 = vadd.f32 %v1892, %v1850
    %v1894 = vadd.f32 %v1893, %v1852
    %v1895 = vadd.f32 %v1894, %v1854
    %v1896 = vadd.f32 %v1895, %v1856
    %v1897 = vadd.f32 %v1896, %v1858
    %v1898 = vadd.f32 %v1897, %v1860
    %v1899 = vadd.f32 %v1898, %v1862
    %v1900 = vadd.f32 %v1899, %v1864
    %v1901 = vadd.f32 %v1900, %v1866
    %v1902 = vadd.f32 %v1901, %v1868
    %v1903 = vadd.f32 %v1902, %v1870
    %v1904 = vadd.f32 %v1903, %v1872
    %v1905 = vrot.slane %v1904, 4
    %v1906 = vadd.f32 %v1904, %v1905
    %v1907 = vrot.slane %v1906, 2
    %v1908 = vadd.f32 %v1906, %v1907
    %v1909 = vrot.slane %v1908, 1
    %v1910 = vadd.f32 %v1908, %v1909
    %v1911 = vadd.f32 %v1811, %v1813
    %v1912 = vadd.f32 %v1911, %v1815
    %v1913 = vadd.f32 %v1912, %v1817
    %v1914 = vadd.f32 %v1913, %v1819
    %v1915 = vadd.f32 %v1914, %v1821
    %v1916 = vadd.f32 %v1915, %v1823
    %v1917 = vadd.f32 %v1916, %v1825
    %v1918 = vadd.f32 %v1917, %v1827
    %v1919 = vadd.f32 %v1918, %v1829
    %v1920 = vadd.f32 %v1919, %v1831
    %v1921 = vadd.f32 %v1920, %v1833
    %v1922 = vadd.f32 %v1921, %v1835
    %v1923 = vadd.f32 %v1922, %v1837
    %v1924 = vadd.f32 %v1923, %v1839
    %v1925 = vadd.f32 %v1924, %v1841
    %v1926 = vadd.f32 %v1925, %v1843
    %v1927 = vadd.f32 %v1926, %v1845
    %v1928 = vadd.f32 %v1927, %v1847
    %v1929 = vadd.f32 %v1928, %v1849
    %v1930 = vadd.f32 %v1929, %v1851
    %v1931 = vadd.f32 %v1930, %v1853
    %v1932 = vadd.f32 %v1931, %v1855
    %v1933 = vadd.f32 %v1932, %v1857
    %v1934 = vadd.f32 %v1933, %v1859
    %v1935 = vadd.f32 %v1934, %v1861
    %v1936 = vadd.f32 %v1935, %v1863
    %v1937 = vadd.f32 %v1936, %v1865
    %v1938 = vadd.f32 %v1937, %v1867
    %v1939 = vadd.f32 %v1938, %v1869
    %v1940 = vadd.f32 %v1939, %v1871
    %v1941 = vadd.f32 %v1940, %v1873
    %v1942 = vrot.slane %v1941, 4
    %v1943 = vadd.f32 %v1941, %v1942
    %v1944 = vrot.slane %v1943, 2
    %v1945 = vadd.f32 %v1943, %v1944
    %v1946 = vrot.slane %v1945, 1
    %v1947 = vadd.f32 %v1945, %v1946
    %v1948 = vmul.f32 %v1910, %v462
    %v1949 = vmul.f32 %v1947, %v462
    %v1950 = vadd.f32 %v1948, 1e-05
    %v1951 = vadd.f32 %v1949, 1e-05
    %v1952 = vrsqrt.pop %v1950
    %v1953 = vrsqrt.pop %v1951
    %v1954 = vmul.f32 %v1746, %v1952
    %v1955 = vmul.f32 %v1747, %v1953
    %v1956 = vmul.f32 %v1748, %v1952
    %v1957 = vmul.f32 %v1749, %v1953
    %v1958 = vmul.f32 %v1750, %v1952
    %v1959 = vmul.f32 %v1751, %v1953
    %v1960 = vmul.f32 %v1752, %v1952
    %v1961 = vmul.f32 %v1753, %v1953
    %v1962 = vmul.f32 %v1754, %v1952
    %v1963 = vmul.f32 %v1755, %v1953
    %v1964 = vmul.f32 %v1756, %v1952
    %v1965 = vmul.f32 %v1757, %v1953
    %v1966 = vmul.f32 %v1758, %v1952
    %v1967 = vmul.f32 %v1759, %v1953
    %v1968 = vmul.f32 %v1760, %v1952
    %v1969 = vmul.f32 %v1761, %v1953
    %v1970 = vmul.f32 %v1762, %v1952
    %v1971 = vmul.f32 %v1763, %v1953
    %v1972 = vmul.f32 %v1764, %v1952
    %v1973 = vmul.f32 %v1765, %v1953
    %v1974 = vmul.f32 %v1766, %v1952
    %v1975 = vmul.f32 %v1767, %v1953
    %v1976 = vmul.f32 %v1768, %v1952
    %v1977 = vmul.f32 %v1769, %v1953
    %v1978 = vmul.f32 %v1770, %v1952
    %v1979 = vmul.f32 %v1771, %v1953
    %v1980 = vmul.f32 %v1772, %v1952
    %v1981 = vmul.f32 %v1773, %v1953
    %v1982 = vmul.f32 %v1774, %v1952
    %v1983 = vmul.f32 %v1775, %v1953
    %v1984 = vmul.f32 %v1776, %v1952
    %v1985 = vmul.f32 %v1777, %v1953
    %v1986 = vmul.f32 %v1778, %v1952
    %v1987 = vmul.f32 %v1779, %v1953
    %v1988 = vmul.f32 %v1780, %v1952
    %v1989 = vmul.f32 %v1781, %v1953
    %v1990 = vmul.f32 %v1782, %v1952
    %v1991 = vmul.f32 %v1783, %v1953
    %v1992 = vmul.f32 %v1784, %v1952
    %v1993 = vmul.f32 %v1785, %v1953
    %v1994 = vmul.f32 %v1786, %v1952
    %v1995 = vmul.f32 %v1787, %v1953
    %v1996 = vmul.f32 %v1788, %v1952
    %v1997 = vmul.f32 %v1789, %v1953
    %v1998 = vmul.f32 %v1790, %v1952
    %v1999 = vmul.f32 %v1791, %v1953
    %v2000 = vmul.f32 %v1792, %v1952
    %v2001 = vmul.f32 %v1793, %v1953
    %v2002 = vmul.f32 %v1794, %v1952
    %v2003 = vmul.f32 %v1795, %v1953
    %v2004 = vmul.f32 %v1796, %v1952
    %v2005 = vmul.f32 %v1797, %v1953
    %v2006 = vmul.f32 %v1798, %v1952
    %v2007 = vmul.f32 %v1799, %v1953
    %v2008 = vmul.f32 %v1800, %v1952
    %v2009 = vmul.f32 %v1801, %v1953
    %v2010 = vmul.f32 %v1802, %v1952
    %v2011 = vmul.f32 %v1803, %v1953
    %v2012 = vmul.f32 %v1804, %v1952
    %v2013 = vmul.f32 %v1805, %v1953
    %v2014 = vmul.f32 %v1806, %v1952
    %v2015 = vmul.f32 %v1807, %v1953
    %v2016 = vmul.f32 %v1808, %v1952
    %v2017 = vmul.f32 %v1809, %v1953
    %v2019 = vlaneseq
    %v2020 = vshrl.u32 %v2019, 7
    %v2021 = vsub.s32 0, %v2020
    %v2022 = vrot.slane %v1272, %v2021
    %v2023 = vlaneseq
    %v2024 = vshrl.u32 %v2023, 7
    %v2025 = vsub.s32 1, %v2024
    %v2026 = vrot.slane %v1272, %v2025
    %v2029 = vmul.f32 %v1954, %v2022
    %v2030 = vmul.f32 %v1955, %v2026
    %v2031 = vmul.f32 %v1956, %v2022
    %v2032 = vmul.f32 %v1957, %v2026
    %v2033 = vmul.f32 %v1958, %v2022
    %v2034 = vmul.f32 %v1959, %v2026
    %v2035 = vmul.f32 %v1960, %v2022
    %v2036 = vmul.f32 %v1961, %v2026
    %v2037 = vmul.f32 %v1962, %v2022
    %v2038 = vmul.f32 %v1963, %v2026
    %v2039 = vmul.f32 %v1964, %v2022
    %v2040 = vmul.f32 %v1965, %v2026
    %v2041 = vmul.f32 %v1966, %v2022
    %v2042 = vmul.f32 %v1967, %v2026
    %v2043 = vmul.f32 %v1968, %v2022
    %v2044 = vmul.f32 %v1969, %v2026
    %v2045 = vmul.f32 %v1970, %v2022
    %v2046 = vmul.f32 %v1971, %v2026
    %v2047 = vmul.f32 %v1972, %v2022
    %v2048 = vmul.f32 %v1973, %v2026
    %v2049 = vmul.f32 %v1974, %v2022
    %v2050 = vmul.f32 %v1975, %v2026
    %v2051 = vmul.f32 %v1976, %v2022
    %v2052 = vmul.f32 %v1977, %v2026
    %v2053 = vmul.f32 %v1978, %v2022
    %v2054 = vmul.f32 %v1979, %v2026
    %v2055 = vmul.f32 %v1980, %v2022
    %v2056 = vmul.f32 %v1981, %v2026
    %v2057 = vmul.f32 %v1982, %v2022
    %v2058 = vmul.f32 %v1983, %v2026
    %v2059 = vmul.f32 %v1984, %v2022
    %v2060 = vmul.f32 %v1985, %v2026
    %v2061 = vmul.f32 %v1986, %v2022
    %v2062 = vmul.f32 %v1987, %v2026
    %v2063 = vmul.f32 %v1988, %v2022
    %v2064 = vmul.f32 %v1989, %v2026
    %v2065 = vmul.f32 %v1990, %v2022
    %v2066 = vmul.f32 %v1991, %v2026
    %v2067 = vmul.f32 %v1992, %v2022
    %v2068 = vmul.f32 %v1993, %v2026
    %v2069 = vmul.f32 %v1994, %v2022
    %v2070 = vmul.f32 %v1995, %v2026
    %v2071 = vmul.f32 %v1996, %v2022
    %v2072 = vmul.f32 %v1997, %v2026
    %v2073 = vmul.f32 %v1998, %v2022
    %v2074 = vmul.f32 %v1999, %v2026
    %v2075 = vmul.f32 %v2000, %v2022
    %v2076 = vmul.f32 %v2001, %v2026
    %v2077 = vmul.f32 %v2002, %v2022
    %v2078 = vmul.f32 %v2003, %v2026
    %v2079 = vmul.f32 %v2004, %v2022
    %v2080 = vmul.f32 %v2005, %v2026
    %v2081 = vmul.f32 %v2006, %v2022
    %v2082 = vmul.f32 %v2007, %v2026
    %v2083 = vmul.f32 %v2008, %v2022
    %v2084 = vmul.f32 %v2009, %v2026
    %v2085 = vmul.f32 %v2010, %v2022
    %v2086 = vmul.f32 %v2011, %v2026
    %v2087 = vmul.f32 %v2012, %v2022
    %v2088 = vmul.f32 %v2013, %v2026
    %v2089 = vmul.f32 %v2014, %v2022
    %v2090 = vmul.f32 %v2015, %v2026
    %v2091 = vmul.f32 %v2016, %v2022
    %v2092 = vmul.f32 %v2017, %v2026
    %v2094 = vlaneseq
    %v2095 = vshrl.u32 %v2094, 7
    %v2096 = vsub.s32 0, %v2095
    %v2097 = vrot.slane %v1273, %v2096
    %v2098 = vlaneseq
    %v2099 = vshrl.u32 %v2098, 7
    %v2100 = vsub.s32 1, %v2099
    %v2101 = vrot.slane %v1273, %v2100
    %v2104 = vadd.f32 %v2029, %v2097
    %v2105 = vadd.f32 %v2030, %v2101
    %v2106 = vadd.f32 %v2031, %v2097
    %v2107 = vadd.f32 %v2032, %v2101
    %v2108 = vadd.f32 %v2033, %v2097
    %v2109 = vadd.f32 %v2034, %v2101
    %v2110 = vadd.f32 %v2035, %v2097
    %v2111 = vadd.f32 %v2036, %v2101
    %v2112 = vadd.f32 %v2037, %v2097
    %v2113 = vadd.f32 %v2038, %v2101
    %v2114 = vadd.f32 %v2039, %v2097
    %v2115 = vadd.f32 %v2040, %v2101
    %v2116 = vadd.f32 %v2041, %v2097
    %v2117 = vadd.f32 %v2042, %v2101
    %v2118 = vadd.f32 %v2043, %v2097
    %v2119 = vadd.f32 %v2044, %v2101
    %v2120 = vadd.f32 %v2045, %v2097
    %v2121 = vadd.f32 %v2046, %v2101
    %v2122 = vadd.f32 %v2047, %v2097
    %v2123 = vadd.f32 %v2048, %v2101
    %v2124 = vadd.f32 %v2049, %v2097
    %v2125 = vadd.f32 %v2050, %v2101
    %v2126 = vadd.f32 %v2051, %v2097
    %v2127 = vadd.f32 %v2052, %v2101
    %v2128 = vadd.f32 %v2053, %v2097
    %v2129 = vadd.f32 %v2054, %v2101
    %v2130 = vadd.f32 %v2055, %v2097
    %v2131 = vadd.f32 %v2056, %v2101
    %v2132 = vadd.f32 %v2057, %v2097
    %v2133 = vadd.f32 %v2058, %v2101
    %v2134 = vadd.f32 %v2059, %v2097
    %v2135 = vadd.f32 %v2060, %v2101
    %v2136 = vadd.f32 %v2061, %v2097
    %v2137 = vadd.f32 %v2062, %v2101
    %v2138 = vadd.f32 %v2063, %v2097
    %v2139 = vadd.f32 %v2064, %v2101
    %v2140 = vadd.f32 %v2065, %v2097
    %v2141 = vadd.f32 %v2066, %v2101
    %v2142 = vadd.f32 %v2067, %v2097
    %v2143 = vadd.f32 %v2068, %v2101
    %v2144 = vadd.f32 %v2069, %v2097
    %v2145 = vadd.f32 %v2070, %v2101
    %v2146 = vadd.f32 %v2071, %v2097
    %v2147 = vadd.f32 %v2072, %v2101
    %v2148 = vadd.f32 %v2073, %v2097
    %v2149 = vadd.f32 %v2074, %v2101
    %v2150 = vadd.f32 %v2075, %v2097
    %v2151 = vadd.f32 %v2076, %v2101
    %v2152 = vadd.f32 %v2077, %v2097
    %v2153 = vadd.f32 %v2078, %v2101
    %v2154 = vadd.f32 %v2079, %v2097
    %v2155 = vadd.f32 %v2080, %v2101
    %v2156 = vadd.f32 %v2081, %v2097
    %v2157 = vadd.f32 %v2082, %v2101
    %v2158 = vadd.f32 %v2083, %v2097
    %v2159 = vadd.f32 %v2084, %v2101
    %v2160 = vadd.f32 %v2085, %v2097
    %v2161 = vadd.f32 %v2086, %v2101
    %v2162 = vadd.f32 %v2087, %v2097
    %v2163 = vadd.f32 %v2088, %v2101
    %v2164 = vadd.f32 %v2089, %v2097
    %v2165 = vadd.f32 %v2090, %v2101
    %v2166 = vadd.f32 %v2091, %v2097
    %v2167 = vadd.f32 %v2092, %v2101
    %v2168 = vmax.f32 %v2104, 0.0
    %v2169 = vmax.f32 %v2105, 0.0
    %v2170 = vmax.f32 %v2106, 0.0
    %v2171 = vmax.f32 %v2107, 0.0
    %v2172 = vmax.f32 %v2108, 0.0
    %v2173 = vmax.f32 %v2109, 0.0
    %v2174 = vmax.f32 %v2110, 0.0
    %v2175 = vmax.f32 %v2111, 0.0
    %v2176 = vmax.f32 %v2112, 0.0
    %v2177 = vmax.f32 %v2113, 0.0
    %v2178 = vmax.f32 %v2114, 0.0
    %v2179 = vmax.f32 %v2115, 0.0
    %v2180 = vmax.f32 %v2116, 0.0
    %v2181 = vmax.f32 %v2117, 0.0
    %v2182 = vmax.f32 %v2118, 0.0
    %v2183 = vmax.f32 %v2119, 0.0
    %v2184 = vmax.f32 %v2120, 0.0
    %v2185 = vmax.f32 %v2121, 0.0
    %v2186 = vmax.f32 %v2122, 0.0
    %v2187 = vmax.f32 %v2123, 0.0
    %v2188 = vmax.f32 %v2124, 0.0
    %v2189 = vmax.f32 %v2125, 0.0
    %v2190 = vmax.f32 %v2126, 0.0
    %v2191 = vmax.f32 %v2127, 0.0
    %v2192 = vmax.f32 %v2128, 0.0
    %v2193 = vmax.f32 %v2129, 0.0
    %v2194 = vmax.f32 %v2130, 0.0
    %v2195 = vmax.f32 %v2131, 0.0
    %v2196 = vmax.f32 %v2132, 0.0
    %v2197 = vmax.f32 %v2133, 0.0
    %v2198 = vmax.f32 %v2134, 0.0
    %v2199 = vmax.f32 %v2135, 0.0
    %v2200 = vmax.f32 %v2136, 0.0
    %v2201 = vmax.f32 %v2137, 0.0
    %v2202 = vmax.f32 %v2138, 0.0
    %v2203 = vmax.f32 %v2139, 0.0
    %v2204 = vmax.f32 %v2140, 0.0
    %v2205 = vmax.f32 %v2141, 0.0
    %v2206 = vmax.f32 %v2142, 0.0
    %v2207 = vmax.f32 %v2143, 0.0
    %v2208 = vmax.f32 %v2144, 0.0
    %v2209 = vmax.f32 %v2145, 0.0
    %v2210 = vmax.f32 %v2146, 0.0
    %v2211 = vmax.f32 %v2147, 0.0
    %v2212 = vmax.f32 %v2148, 0.0
    %v2213 = vmax.f32 %v2149, 0.0
    %v2214 = vmax.f32 %v2150, 0.0
    %v2215 = vmax.f32 %v2151, 0.0
    %v2216 = vmax.f32 %v2152, 0.0
    %v2217 = vmax.f32 %v2153, 0.0
    %v2218 = vmax.f32 %v2154, 0.0
    %v2219 = vmax.f32 %v2155, 0.0
    %v2220 = vmax.f32 %v2156, 0.0
    %v2221 = vmax.f32 %v2157, 0.0
    %v2222 = vmax.f32 %v2158, 0.0
    %v2223 = vmax.f32 %v2159, 0.0
    %v2224 = vmax.f32 %v2160, 0.0
    %v2225 = vmax.f32 %v2161, 0.0
    %v2226 = vmax.f32 %v2162, 0.0
    %v2227 = vmax.f32 %v2163, 0.0
    %v2228 = vmax.f32 %v2164, 0.0
    %v2229 = vmax.f32 %v2165, 0.0
    %v2230 = vmax.f32 %v2166, 0.0
    %v2231 = vmax.f32 %v2167, 0.0
    %v2232 = vmul.f32 %v2168, %v2168
    %v2233 = vmul.f32 %v2169, %v2169
    %v2234 = vmul.f32 %v2170, %v2170
    %v2235 = vmul.f32 %v2171, %v2171
    %v2236 = vmul.f32 %v2172, %v2172
    %v2237 = vmul.f32 %v2173, %v2173
    %v2238 = vmul.f32 %v2174, %v2174
    %v2239 = vmul.f32 %v2175, %v2175
    %v2240 = vmul.f32 %v2176, %v2176
    %v2241 = vmul.f32 %v2177, %v2177
    %v2242 = vmul.f32 %v2178, %v2178
    %v2243 = vmul.f32 %v2179, %v2179
    %v2244 = vmul.f32 %v2180, %v2180
    %v2245 = vmul.f32 %v2181, %v2181
    %v2246 = vmul.f32 %v2182, %v2182
    %v2247 = vmul.f32 %v2183, %v2183
    %v2248 = vmul.f32 %v2184, %v2184
    %v2249 = vmul.f32 %v2185, %v2185
    %v2250 = vmul.f32 %v2186, %v2186
    %v2251 = vmul.f32 %v2187, %v2187
    %v2252 = vmul.f32 %v2188, %v2188
    %v2253 = vmul.f32 %v2189, %v2189
    %v2254 = vmul.f32 %v2190, %v2190
    %v2255 = vmul.f32 %v2191, %v2191
    %v2256 = vmul.f32 %v2192, %v2192
    %v2257 = vmul.f32 %v2193, %v2193
    %v2258 = vmul.f32 %v2194, %v2194
    %v2259 = vmul.f32 %v2195, %v2195
    %v2260 = vmul.f32 %v2196, %v2196
    %v2261 = vmul.f32 %v2197, %v2197
    %v2262 = vmul.f32 %v2198, %v2198
    %v2263 = vmul.f32 %v2199, %v2199
    %v2264 = vmul.f32 %v2200, %v2200
    %v2265 = vmul.f32 %v2201, %v2201
    %v2266 = vmul.f32 %v2202, %v2202
    %v2267 = vmul.f32 %v2203, %v2203
    %v2268 = vmul.f32 %v2204, %v2204
    %v2269 = vmul.f32 %v2205, %v2205
    %v2270 = vmul.f32 %v2206, %v2206
    %v2271 = vmul.f32 %v2207, %v2207
    %v2272 = vmul.f32 %v2208, %v2208
    %v2273 = vmul.f32 %v2209, %v2209
    %v2274 = vmul.f32 %v2210, %v2210
    %v2275 = vmul.f32 %v2211, %v2211
    %v2276 = vmul.f32 %v2212, %v2212
    %v2277 = vmul.f32 %v2213, %v2213
    %v2278 = vmul.f32 %v2214, %v2214
    %v2279 = vmul.f32 %v2215, %v2215
    %v2280 = vmul.f32 %v2216, %v2216
    %v2281 = vmul.f32 %v2217, %v2217
    %v2282 = vmul.f32 %v2218, %v2218
    %v2283 = vmul.f32 %v2219, %v2219
    %v2284 = vmul.f32 %v2220, %v2220
    %v2285 = vmul.f32 %v2221, %v2221
    %v2286 = vmul.f32 %v2222, %v2222
    %v2287 = vmul.f32 %v2223, %v2223
    %v2288 = vmul.f32 %v2224, %v2224
    %v2289 = vmul.f32 %v2225, %v2225
    %v2290 = vmul.f32 %v2226, %v2226
    %v2291 = vmul.f32 %v2227, %v2227
    %v2292 = vmul.f32 %v2228, %v2228
    %v2293 = vmul.f32 %v2229, %v2229
    %v2294 = vmul.f32 %v2230, %v2230
    %v2295 = vmul.f32 %v2231, %v2231
    %v2296 = vadd.f32 %v2232, %v2233
    %2297 = vadd.xlane.f32.xlu0 %v2296
    %v2298 = vpop.xlane.xlu0 %2297
    %v2299 = vadd.f32 %v2234, %v2235
    %2300 = vadd.xlane.f32.xlu0 %v2299
    %v2301 = vpop.xlane.xlu0 %2300
    %v2302 = vadd.f32 %v2236, %v2237
    %2303 = vadd.xlane.f32.xlu0 %v2302
    %v2304 = vpop.xlane.xlu0 %2303
    %v2305 = vadd.f32 %v2238, %v2239
    %2306 = vadd.xlane.f32.xlu0 %v2305
    %v2307 = vpop.xlane.xlu0 %2306
    %v2308 = vadd.f32 %v2240, %v2241
    %2309 = vadd.xlane.f32.xlu0 %v2308
    %v2310 = vpop.xlane.xlu0 %2309
    %v2311 = vadd.f32 %v2242, %v2243
    %2312 = vadd.xlane.f32.xlu0 %v2311
    %v2313 = vpop.xlane.xlu0 %2312
    %v2314 = vadd.f32 %v2244, %v2245
    %2315 = vadd.xlane.f32.xlu0 %v2314
    %v2316 = vpop.xlane.xlu0 %2315
    %v2317 = vadd.f32 %v2246, %v2247
    %2318 = vadd.xlane.f32.xlu0 %v2317
    %v2319 = vpop.xlane.xlu0 %2318
    %v2320 = vadd.f32 %v2248, %v2249
    %2321 = vadd.xlane.f32.xlu0 %v2320
    %v2322 = vpop.xlane.xlu0 %2321
    %v2323 = vadd.f32 %v2250, %v2251
    %2324 = vadd.xlane.f32.xlu0 %v2323
    %v2325 = vpop.xlane.xlu0 %2324
    %v2326 = vadd.f32 %v2252, %v2253
    %2327 = vadd.xlane.f32.xlu0 %v2326
    %v2328 = vpop.xlane.xlu0 %2327
    %v2329 = vadd.f32 %v2254, %v2255
    %2330 = vadd.xlane.f32.xlu0 %v2329
    %v2331 = vpop.xlane.xlu0 %2330
    %v2332 = vadd.f32 %v2256, %v2257
    %2333 = vadd.xlane.f32.xlu0 %v2332
    %v2334 = vpop.xlane.xlu0 %2333
    %v2335 = vadd.f32 %v2258, %v2259
    %2336 = vadd.xlane.f32.xlu0 %v2335
    %v2337 = vpop.xlane.xlu0 %2336
    %v2338 = vadd.f32 %v2260, %v2261
    %2339 = vadd.xlane.f32.xlu0 %v2338
    %v2340 = vpop.xlane.xlu0 %2339
    %v2341 = vadd.f32 %v2262, %v2263
    %2342 = vadd.xlane.f32.xlu0 %v2341
    %v2343 = vpop.xlane.xlu0 %2342
    %v2344 = vadd.f32 %v2264, %v2265
    %2345 = vadd.xlane.f32.xlu0 %v2344
    %v2346 = vpop.xlane.xlu0 %2345
    %v2347 = vadd.f32 %v2266, %v2267
    %2348 = vadd.xlane.f32.xlu0 %v2347
    %v2349 = vpop.xlane.xlu0 %2348
    %v2350 = vadd.f32 %v2268, %v2269
    %2351 = vadd.xlane.f32.xlu0 %v2350
    %v2352 = vpop.xlane.xlu0 %2351
    %v2353 = vadd.f32 %v2270, %v2271
    %2354 = vadd.xlane.f32.xlu0 %v2353
    %v2355 = vpop.xlane.xlu0 %2354
    %v2356 = vadd.f32 %v2272, %v2273
    %2357 = vadd.xlane.f32.xlu0 %v2356
    %v2358 = vpop.xlane.xlu0 %2357
    %v2359 = vadd.f32 %v2274, %v2275
    %2360 = vadd.xlane.f32.xlu0 %v2359
    %v2361 = vpop.xlane.xlu0 %2360
    %v2362 = vadd.f32 %v2276, %v2277
    %2363 = vadd.xlane.f32.xlu0 %v2362
    %v2364 = vpop.xlane.xlu0 %2363
    %v2365 = vadd.f32 %v2278, %v2279
    %2366 = vadd.xlane.f32.xlu0 %v2365
    %v2367 = vpop.xlane.xlu0 %2366
    %v2368 = vadd.f32 %v2280, %v2281
    %2369 = vadd.xlane.f32.xlu0 %v2368
    %v2370 = vpop.xlane.xlu0 %2369
    %v2371 = vadd.f32 %v2282, %v2283
    %2372 = vadd.xlane.f32.xlu0 %v2371
    %v2373 = vpop.xlane.xlu0 %2372
    %v2374 = vadd.f32 %v2284, %v2285
    %2375 = vadd.xlane.f32.xlu0 %v2374
    %v2376 = vpop.xlane.xlu0 %2375
    %v2377 = vadd.f32 %v2286, %v2287
    %2378 = vadd.xlane.f32.xlu0 %v2377
    %v2379 = vpop.xlane.xlu0 %2378
    %v2380 = vadd.f32 %v2288, %v2289
    %2381 = vadd.xlane.f32.xlu0 %v2380
    %v2382 = vpop.xlane.xlu0 %2381
    %v2383 = vadd.f32 %v2290, %v2291
    %2384 = vadd.xlane.f32.xlu0 %v2383
    %v2385 = vpop.xlane.xlu0 %2384
    %v2386 = vadd.f32 %v2292, %v2293
    %2387 = vadd.xlane.f32.xlu0 %v2386
    %v2388 = vpop.xlane.xlu0 %2387
    %v2389 = vadd.f32 %v2294, %v2295
    %2390 = vadd.xlane.f32.xlu0 %v2389
    %v2391 = vpop.xlane.xlu0 %2390
    %v2392 = vmax.f32 %v2298, 1e-24
    %v2393 = vmax.f32 %v2301, 1e-24
    %v2394 = vmax.f32 %v2304, 1e-24
    %v2395 = vmax.f32 %v2307, 1e-24
    %v2396 = vmax.f32 %v2310, 1e-24
    %v2397 = vmax.f32 %v2313, 1e-24
    %v2398 = vmax.f32 %v2316, 1e-24
    %v2399 = vmax.f32 %v2319, 1e-24
    %v2400 = vmax.f32 %v2322, 1e-24
    %v2401 = vmax.f32 %v2325, 1e-24
    %v2402 = vmax.f32 %v2328, 1e-24
    %v2403 = vmax.f32 %v2331, 1e-24
    %v2404 = vmax.f32 %v2334, 1e-24
    %v2405 = vmax.f32 %v2337, 1e-24
    %v2406 = vmax.f32 %v2340, 1e-24
    %v2407 = vmax.f32 %v2343, 1e-24
    %v2408 = vmax.f32 %v2346, 1e-24
    %v2409 = vmax.f32 %v2349, 1e-24
    %v2410 = vmax.f32 %v2352, 1e-24
    %v2411 = vmax.f32 %v2355, 1e-24
    %v2412 = vmax.f32 %v2358, 1e-24
    %v2413 = vmax.f32 %v2361, 1e-24
    %v2414 = vmax.f32 %v2364, 1e-24
    %v2415 = vmax.f32 %v2367, 1e-24
    %v2416 = vmax.f32 %v2370, 1e-24
    %v2417 = vmax.f32 %v2373, 1e-24
    %v2418 = vmax.f32 %v2376, 1e-24
    %v2419 = vmax.f32 %v2379, 1e-24
    %v2420 = vmax.f32 %v2382, 1e-24
    %v2421 = vmax.f32 %v2385, 1e-24
    %v2422 = vmax.f32 %v2388, 1e-24
    %v2423 = vmax.f32 %v2391, 1e-24
    %v2424 = vrsqrt.pop %v2392
    %v2425 = vrsqrt.pop %v2393
    %v2426 = vrsqrt.pop %v2394
    %v2427 = vrsqrt.pop %v2395
    %v2428 = vrsqrt.pop %v2396
    %v2429 = vrsqrt.pop %v2397
    %v2430 = vrsqrt.pop %v2398
    %v2431 = vrsqrt.pop %v2399
    %v2432 = vrsqrt.pop %v2400
    %v2433 = vrsqrt.pop %v2401
    %v2434 = vrsqrt.pop %v2402
    %v2435 = vrsqrt.pop %v2403
    %v2436 = vrsqrt.pop %v2404
    %v2437 = vrsqrt.pop %v2405
    %v2438 = vrsqrt.pop %v2406
    %v2439 = vrsqrt.pop %v2407
    %v2440 = vrsqrt.pop %v2408
    %v2441 = vrsqrt.pop %v2409
    %v2442 = vrsqrt.pop %v2410
    %v2443 = vrsqrt.pop %v2411
    %v2444 = vrsqrt.pop %v2412
    %v2445 = vrsqrt.pop %v2413
    %v2446 = vrsqrt.pop %v2414
    %v2447 = vrsqrt.pop %v2415
    %v2448 = vrsqrt.pop %v2416
    %v2449 = vrsqrt.pop %v2417
    %v2450 = vrsqrt.pop %v2418
    %v2451 = vrsqrt.pop %v2419
    %v2452 = vrsqrt.pop %v2420
    %v2453 = vrsqrt.pop %v2421
    %v2454 = vrsqrt.pop %v2422
    %v2455 = vrsqrt.pop %v2423
    %v2456 = vmul.f32 %v2168, %v2424
    %v2457 = vmul.f32 %v2169, %v2424
    %v2458 = vmul.f32 %v2170, %v2425
    %v2459 = vmul.f32 %v2171, %v2425
    %v2460 = vmul.f32 %v2172, %v2426
    %v2461 = vmul.f32 %v2173, %v2426
    %v2462 = vmul.f32 %v2174, %v2427
    %v2463 = vmul.f32 %v2175, %v2427
    %v2464 = vmul.f32 %v2176, %v2428
    %v2465 = vmul.f32 %v2177, %v2428
    %v2466 = vmul.f32 %v2178, %v2429
    %v2467 = vmul.f32 %v2179, %v2429
    %v2468 = vmul.f32 %v2180, %v2430
    %v2469 = vmul.f32 %v2181, %v2430
    %v2470 = vmul.f32 %v2182, %v2431
    %v2471 = vmul.f32 %v2183, %v2431
    %v2472 = vmul.f32 %v2184, %v2432
    %v2473 = vmul.f32 %v2185, %v2432
    %v2474 = vmul.f32 %v2186, %v2433
    %v2475 = vmul.f32 %v2187, %v2433
    %v2476 = vmul.f32 %v2188, %v2434
    %v2477 = vmul.f32 %v2189, %v2434
    %v2478 = vmul.f32 %v2190, %v2435
    %v2479 = vmul.f32 %v2191, %v2435
    %v2480 = vmul.f32 %v2192, %v2436
    %v2481 = vmul.f32 %v2193, %v2436
    %v2482 = vmul.f32 %v2194, %v2437
    %v2483 = vmul.f32 %v2195, %v2437
    %v2484 = vmul.f32 %v2196, %v2438
    %v2485 = vmul.f32 %v2197, %v2438
    %v2486 = vmul.f32 %v2198, %v2439
    %v2487 = vmul.f32 %v2199, %v2439
    %v2488 = vmul.f32 %v2200, %v2440
    %v2489 = vmul.f32 %v2201, %v2440
    %v2490 = vmul.f32 %v2202, %v2441
    %v2491 = vmul.f32 %v2203, %v2441
    %v2492 = vmul.f32 %v2204, %v2442
    %v2493 = vmul.f32 %v2205, %v2442
    %v2494 = vmul.f32 %v2206, %v2443
    %v2495 = vmul.f32 %v2207, %v2443
    %v2496 = vmul.f32 %v2208, %v2444
    %v2497 = vmul.f32 %v2209, %v2444
    %v2498 = vmul.f32 %v2210, %v2445
    %v2499 = vmul.f32 %v2211, %v2445
    %v2500 = vmul.f32 %v2212, %v2446
    %v2501 = vmul.f32 %v2213, %v2446
    %v2502 = vmul.f32 %v2214, %v2447
    %v2503 = vmul.f32 %v2215, %v2447
    %v2504 = vmul.f32 %v2216, %v2448
    %v2505 = vmul.f32 %v2217, %v2448
    %v2506 = vmul.f32 %v2218, %v2449
    %v2507 = vmul.f32 %v2219, %v2449
    %v2508 = vmul.f32 %v2220, %v2450
    %v2509 = vmul.f32 %v2221, %v2450
    %v2510 = vmul.f32 %v2222, %v2451
    %v2511 = vmul.f32 %v2223, %v2451
    %v2512 = vmul.f32 %v2224, %v2452
    %v2513 = vmul.f32 %v2225, %v2452
    %v2514 = vmul.f32 %v2226, %v2453
    %v2515 = vmul.f32 %v2227, %v2453
    %v2516 = vmul.f32 %v2228, %v2454
    %v2517 = vmul.f32 %v2229, %v2454
    %v2518 = vmul.f32 %v2230, %v2455
    %v2519 = vmul.f32 %v2231, %v2455
    %v2520 = vld [vmem:[%s0] sm:$0xff]
    %v2521 = vld [vmem:[%s0 + $0x8] sm:$0xff]
    %v2522 = vld [vmem:[%s0 + $0x10] sm:$0xff]
    %v2523 = vld [vmem:[%s0 + $0x18] sm:$0xff]
    %v2524 = vld [vmem:[%s0 + $0x20] sm:$0xff]
    %v2525 = vld [vmem:[%s0 + $0x28] sm:$0xff]
    %v2526 = vld [vmem:[%s0 + $0x30] sm:$0xff]
    %v2527 = vld [vmem:[%s0 + $0x38] sm:$0xff]
    %v2528 = vld [vmem:[%s0 + $0x40] sm:$0xff]
    %v2529 = vld [vmem:[%s0 + $0x48] sm:$0xff]
    %v2530 = vld [vmem:[%s0 + $0x50] sm:$0xff]
    %v2531 = vld [vmem:[%s0 + $0x58] sm:$0xff]
    %v2532 = vld [vmem:[%s0 + $0x60] sm:$0xff]
    %v2533 = vld [vmem:[%s0 + $0x68] sm:$0xff]
    %v2534 = vld [vmem:[%s0 + $0x70] sm:$0xff]
    %v2535 = vld [vmem:[%s0 + $0x78] sm:$0xff]
    %v2536 = vld [vmem:[%s0 + $0x80] sm:$0xff]
    %v2537 = vld [vmem:[%s0 + $0x88] sm:$0xff]
    %v2538 = vld [vmem:[%s0 + $0x90] sm:$0xff]
    %v2539 = vld [vmem:[%s0 + $0x98] sm:$0xff]
    %v2540 = vld [vmem:[%s0 + $0xa0] sm:$0xff]
    %v2541 = vld [vmem:[%s0 + $0xa8] sm:$0xff]
    %v2542 = vld [vmem:[%s0 + $0xb0] sm:$0xff]
    %v2543 = vld [vmem:[%s0 + $0xb8] sm:$0xff]
    %v2544 = vld [vmem:[%s0 + $0xc0] sm:$0xff]
    %v2545 = vld [vmem:[%s0 + $0xc8] sm:$0xff]
    %v2546 = vld [vmem:[%s0 + $0xd0] sm:$0xff]
    %v2547 = vld [vmem:[%s0 + $0xd8] sm:$0xff]
    %v2548 = vld [vmem:[%s0 + $0xe0] sm:$0xff]
    %v2549 = vld [vmem:[%s0 + $0xe8] sm:$0xff]
    %v2550 = vld [vmem:[%s0 + $0xf0] sm:$0xff]
    %v2551 = vld [vmem:[%s0 + $0xf8] sm:$0xff]
    %v2552 = vld [vmem:[%s0 + $0x100] sm:$0xff]
    %v2553 = vld [vmem:[%s0 + $0x108] sm:$0xff]
    %v2554 = vld [vmem:[%s0 + $0x110] sm:$0xff]
    %v2555 = vld [vmem:[%s0 + $0x118] sm:$0xff]
    %v2556 = vld [vmem:[%s0 + $0x120] sm:$0xff]
    %v2557 = vld [vmem:[%s0 + $0x128] sm:$0xff]
    %v2558 = vld [vmem:[%s0 + $0x130] sm:$0xff]
    %v2559 = vld [vmem:[%s0 + $0x138] sm:$0xff]
    %v2560 = vld [vmem:[%s0 + $0x140] sm:$0xff]
    %v2561 = vld [vmem:[%s0 + $0x148] sm:$0xff]
    %v2562 = vld [vmem:[%s0 + $0x150] sm:$0xff]
    %v2563 = vld [vmem:[%s0 + $0x158] sm:$0xff]
    %v2564 = vld [vmem:[%s0 + $0x160] sm:$0xff]
    %v2565 = vld [vmem:[%s0 + $0x168] sm:$0xff]
    %v2566 = vld [vmem:[%s0 + $0x170] sm:$0xff]
    %v2567 = vld [vmem:[%s0 + $0x178] sm:$0xff]
    %v2568 = vld [vmem:[%s0 + $0x180] sm:$0xff]
    %v2569 = vld [vmem:[%s0 + $0x188] sm:$0xff]
    %v2570 = vld [vmem:[%s0 + $0x190] sm:$0xff]
    %v2571 = vld [vmem:[%s0 + $0x198] sm:$0xff]
    %v2572 = vld [vmem:[%s0 + $0x1a0] sm:$0xff]
    %v2573 = vld [vmem:[%s0 + $0x1a8] sm:$0xff]
    %v2574 = vld [vmem:[%s0 + $0x1b0] sm:$0xff]
    %v2575 = vld [vmem:[%s0 + $0x1b8] sm:$0xff]
    %v2576 = vld [vmem:[%s0 + $0x1c0] sm:$0xff]
    %v2577 = vld [vmem:[%s0 + $0x1c8] sm:$0xff]
    %v2578 = vld [vmem:[%s0 + $0x1d0] sm:$0xff]
    %v2579 = vld [vmem:[%s0 + $0x1d8] sm:$0xff]
    %v2580 = vld [vmem:[%s0 + $0x1e0] sm:$0xff]
    %v2581 = vld [vmem:[%s0 + $0x1e8] sm:$0xff]
    %v2582 = vld [vmem:[%s0 + $0x1f0] sm:$0xff]
    %v2583 = vld [vmem:[%s0 + $0x1f8] sm:$0xff]
    %v2584 = vsub.f32 %v2520, %v2456
    %v2585 = vsub.f32 %v2521, %v2457
    %v2586 = vsub.f32 %v2522, %v2458
    %v2587 = vsub.f32 %v2523, %v2459
    %v2588 = vsub.f32 %v2524, %v2460
    %v2589 = vsub.f32 %v2525, %v2461
    %v2590 = vsub.f32 %v2526, %v2462
    %v2591 = vsub.f32 %v2527, %v2463
    %v2592 = vsub.f32 %v2528, %v2464
    %v2593 = vsub.f32 %v2529, %v2465
    %v2594 = vsub.f32 %v2530, %v2466
    %v2595 = vsub.f32 %v2531, %v2467
    %v2596 = vsub.f32 %v2532, %v2468
    %v2597 = vsub.f32 %v2533, %v2469
    %v2598 = vsub.f32 %v2534, %v2470
    %v2599 = vsub.f32 %v2535, %v2471
    %v2600 = vsub.f32 %v2536, %v2472
    %v2601 = vsub.f32 %v2537, %v2473
    %v2602 = vsub.f32 %v2538, %v2474
    %v2603 = vsub.f32 %v2539, %v2475
    %v2604 = vsub.f32 %v2540, %v2476
    %v2605 = vsub.f32 %v2541, %v2477
    %v2606 = vsub.f32 %v2542, %v2478
    %v2607 = vsub.f32 %v2543, %v2479
    %v2608 = vsub.f32 %v2544, %v2480
    %v2609 = vsub.f32 %v2545, %v2481
    %v2610 = vsub.f32 %v2546, %v2482
    %v2611 = vsub.f32 %v2547, %v2483
    %v2612 = vsub.f32 %v2548, %v2484
    %v2613 = vsub.f32 %v2549, %v2485
    %v2614 = vsub.f32 %v2550, %v2486
    %v2615 = vsub.f32 %v2551, %v2487
    %v2616 = vsub.f32 %v2552, %v2488
    %v2617 = vsub.f32 %v2553, %v2489
    %v2618 = vsub.f32 %v2554, %v2490
    %v2619 = vsub.f32 %v2555, %v2491
    %v2620 = vsub.f32 %v2556, %v2492
    %v2621 = vsub.f32 %v2557, %v2493
    %v2622 = vsub.f32 %v2558, %v2494
    %v2623 = vsub.f32 %v2559, %v2495
    %v2624 = vsub.f32 %v2560, %v2496
    %v2625 = vsub.f32 %v2561, %v2497
    %v2626 = vsub.f32 %v2562, %v2498
    %v2627 = vsub.f32 %v2563, %v2499
    %v2628 = vsub.f32 %v2564, %v2500
    %v2629 = vsub.f32 %v2565, %v2501
    %v2630 = vsub.f32 %v2566, %v2502
    %v2631 = vsub.f32 %v2567, %v2503
    %v2632 = vsub.f32 %v2568, %v2504
    %v2633 = vsub.f32 %v2569, %v2505
    %v2634 = vsub.f32 %v2570, %v2506
    %v2635 = vsub.f32 %v2571, %v2507
    %v2636 = vsub.f32 %v2572, %v2508
    %v2637 = vsub.f32 %v2573, %v2509
    %v2638 = vsub.f32 %v2574, %v2510
    %v2639 = vsub.f32 %v2575, %v2511
    %v2640 = vsub.f32 %v2576, %v2512
    %v2641 = vsub.f32 %v2577, %v2513
    %v2642 = vsub.f32 %v2578, %v2514
    %v2643 = vsub.f32 %v2579, %v2515
    %v2644 = vsub.f32 %v2580, %v2516
    %v2645 = vsub.f32 %v2581, %v2517
    %v2646 = vsub.f32 %v2582, %v2518
    %v2647 = vsub.f32 %v2583, %v2519
    %v2648 = vmul.f32 %v2584, %v2584
    %v2649 = vmul.f32 %v2585, %v2585
    %v2650 = vmul.f32 %v2586, %v2586
    %v2651 = vmul.f32 %v2587, %v2587
    %v2652 = vmul.f32 %v2588, %v2588
    %v2653 = vmul.f32 %v2589, %v2589
    %v2654 = vmul.f32 %v2590, %v2590
    %v2655 = vmul.f32 %v2591, %v2591
    %v2656 = vmul.f32 %v2592, %v2592
    %v2657 = vmul.f32 %v2593, %v2593
    %v2658 = vmul.f32 %v2594, %v2594
    %v2659 = vmul.f32 %v2595, %v2595
    %v2660 = vmul.f32 %v2596, %v2596
    %v2661 = vmul.f32 %v2597, %v2597
    %v2662 = vmul.f32 %v2598, %v2598
    %v2663 = vmul.f32 %v2599, %v2599
    %v2664 = vmul.f32 %v2600, %v2600
    %v2665 = vmul.f32 %v2601, %v2601
    %v2666 = vmul.f32 %v2602, %v2602
    %v2667 = vmul.f32 %v2603, %v2603
    %v2668 = vmul.f32 %v2604, %v2604
    %v2669 = vmul.f32 %v2605, %v2605
    %v2670 = vmul.f32 %v2606, %v2606
    %v2671 = vmul.f32 %v2607, %v2607
    %v2672 = vmul.f32 %v2608, %v2608
    %v2673 = vmul.f32 %v2609, %v2609
    %v2674 = vmul.f32 %v2610, %v2610
    %v2675 = vmul.f32 %v2611, %v2611
    %v2676 = vmul.f32 %v2612, %v2612
    %v2677 = vmul.f32 %v2613, %v2613
    %v2678 = vmul.f32 %v2614, %v2614
    %v2679 = vmul.f32 %v2615, %v2615
    %v2680 = vmul.f32 %v2616, %v2616
    %v2681 = vmul.f32 %v2617, %v2617
    %v2682 = vmul.f32 %v2618, %v2618
    %v2683 = vmul.f32 %v2619, %v2619
    %v2684 = vmul.f32 %v2620, %v2620
    %v2685 = vmul.f32 %v2621, %v2621
    %v2686 = vmul.f32 %v2622, %v2622
    %v2687 = vmul.f32 %v2623, %v2623
    %v2688 = vmul.f32 %v2624, %v2624
    %v2689 = vmul.f32 %v2625, %v2625
    %v2690 = vmul.f32 %v2626, %v2626
    %v2691 = vmul.f32 %v2627, %v2627
    %v2692 = vmul.f32 %v2628, %v2628
    %v2693 = vmul.f32 %v2629, %v2629
    %v2694 = vmul.f32 %v2630, %v2630
    %v2695 = vmul.f32 %v2631, %v2631
    %v2696 = vmul.f32 %v2632, %v2632
    %v2697 = vmul.f32 %v2633, %v2633
    %v2698 = vmul.f32 %v2634, %v2634
    %v2699 = vmul.f32 %v2635, %v2635
    %v2700 = vmul.f32 %v2636, %v2636
    %v2701 = vmul.f32 %v2637, %v2637
    %v2702 = vmul.f32 %v2638, %v2638
    %v2703 = vmul.f32 %v2639, %v2639
    %v2704 = vmul.f32 %v2640, %v2640
    %v2705 = vmul.f32 %v2641, %v2641
    %v2706 = vmul.f32 %v2642, %v2642
    %v2707 = vmul.f32 %v2643, %v2643
    %v2708 = vmul.f32 %v2644, %v2644
    %v2709 = vmul.f32 %v2645, %v2645
    %v2710 = vmul.f32 %v2646, %v2646
    %v2711 = vmul.f32 %v2647, %v2647
    %v2712 = vadd.f32 %v2648, %v2649
    %v2713 = vadd.f32 %v2712, %v2650
    %v2714 = vadd.f32 %v2713, %v2651
    %v2715 = vadd.f32 %v2714, %v2652
    %v2716 = vadd.f32 %v2715, %v2653
    %v2717 = vadd.f32 %v2716, %v2654
    %v2718 = vadd.f32 %v2717, %v2655
    %v2719 = vadd.f32 %v2718, %v2656
    %v2720 = vadd.f32 %v2719, %v2657
    %v2721 = vadd.f32 %v2720, %v2658
    %v2722 = vadd.f32 %v2721, %v2659
    %v2723 = vadd.f32 %v2722, %v2660
    %v2724 = vadd.f32 %v2723, %v2661
    %v2725 = vadd.f32 %v2724, %v2662
    %v2726 = vadd.f32 %v2725, %v2663
    %v2727 = vadd.f32 %v2726, %v2664
    %v2728 = vadd.f32 %v2727, %v2665
    %v2729 = vadd.f32 %v2728, %v2666
    %v2730 = vadd.f32 %v2729, %v2667
    %v2731 = vadd.f32 %v2730, %v2668
    %v2732 = vadd.f32 %v2731, %v2669
    %v2733 = vadd.f32 %v2732, %v2670
    %v2734 = vadd.f32 %v2733, %v2671
    %v2735 = vadd.f32 %v2734, %v2672
    %v2736 = vadd.f32 %v2735, %v2673
    %v2737 = vadd.f32 %v2736, %v2674
    %v2738 = vadd.f32 %v2737, %v2675
    %v2739 = vadd.f32 %v2738, %v2676
    %v2740 = vadd.f32 %v2739, %v2677
    %v2741 = vadd.f32 %v2740, %v2678
    %v2742 = vadd.f32 %v2741, %v2679
    %v2743 = vadd.f32 %v2742, %v2680
    %v2744 = vadd.f32 %v2743, %v2681
    %v2745 = vadd.f32 %v2744, %v2682
    %v2746 = vadd.f32 %v2745, %v2683
    %v2747 = vadd.f32 %v2746, %v2684
    %v2748 = vadd.f32 %v2747, %v2685
    %v2749 = vadd.f32 %v2748, %v2686
    %v2750 = vadd.f32 %v2749, %v2687
    %v2751 = vadd.f32 %v2750, %v2688
    %v2752 = vadd.f32 %v2751, %v2689
    %v2753 = vadd.f32 %v2752, %v2690
    %v2754 = vadd.f32 %v2753, %v2691
    %v2755 = vadd.f32 %v2754, %v2692
    %v2756 = vadd.f32 %v2755, %v2693
    %v2757 = vadd.f32 %v2756, %v2694
    %v2758 = vadd.f32 %v2757, %v2695
    %v2759 = vadd.f32 %v2758, %v2696
    %v2760 = vadd.f32 %v2759, %v2697
    %v2761 = vadd.f32 %v2760, %v2698
    %v2762 = vadd.f32 %v2761, %v2699
    %v2763 = vadd.f32 %v2762, %v2700
    %v2764 = vadd.f32 %v2763, %v2701
    %v2765 = vadd.f32 %v2764, %v2702
    %v2766 = vadd.f32 %v2765, %v2703
    %v2767 = vadd.f32 %v2766, %v2704
    %v2768 = vadd.f32 %v2767, %v2705
    %v2769 = vadd.f32 %v2768, %v2706
    %v2770 = vadd.f32 %v2769, %v2707
    %v2771 = vadd.f32 %v2770, %v2708
    %v2772 = vadd.f32 %v2771, %v2709
    %v2773 = vadd.f32 %v2772, %v2710
    %v2774 = vadd.f32 %v2773, %v2711
    %2775 = vadd.xlane.f32.xlu0 %v2774
    %v2776 = vpop.xlane.xlu0 %2775
    %v2777 = vrot.slane %v2776, 4
    %v2778 = vadd.f32 %v2776, %v2777
    %v2779 = vrot.slane %v2778, 2
    %v2780 = vadd.f32 %v2778, %v2779
    %v2781 = vrot.slane %v2780, 1
    %v2782 = vadd.f32 %v2780, %v2781
    %s2783 = vtos %v2782
    %v2784 = vrcp.pop 65536.0
    %s2785 = vtos %v2784
    %s2786 = smul.f32 %s2783, %s2785
    %s2787 = scalar_lea.smem [#allocation2], 0
    %2788 = sst [smem:[%s2787]] %s2786
    // Predicated region
    $region42: #{individual_mlp_encoder.5} parent=1 // pred_check
      _
    $region43: #{individual_mlp_encoder.5} parent=1 // pred_check_branch
      %2790 = sbr.rel (0) target = $region45
    $region44: #{individual_mlp_encoder.5} parent=1 // pred_region
      %s2792 = ssub.s32 16, 16
      %2793 = vsyncadd [#allocation3], %s2792
      %2796 = dma.smem_to_hbm [#allocation2], 16, %s10, [#allocation3]
    $region45: #{individual_mlp_encoder.5} parent=1 // pred_fallthru
      _
    // Predicated region
    $region46: #{individual_mlp_encoder.5} parent=1 // pred_check
      _
    $region47: #{individual_mlp_encoder.5} parent=1 // pred_check_branch
      %2798 = sbr.rel (0) target = $region49
    $region48: #{individual_mlp_encoder.5} parent=1 // pred_region
      %2799 = dma.done [#allocation3], 16
    $region49: #{individual_mlp_encoder.5} parent=1 // pred_fallthru
      _
    %2800 = sfence
    %2801 = vsyncpa [#allocation3], 1

</llo_original>
